<compile_context>
chip_gen: v7x
topology: tpu7x:2x2x1
jax: 0.10.0
libtpu: 0.0.40
codegen_flags: <defaults>
</compile_context>

<pallas_src>
import functools

import jax
import jax.numpy as jnp
from jax.experimental import pallas as pl
from jax.experimental.pallas import tpu as pltpu


# -----------------------------------------------------------------------------
# Kernel: one block of G batch elements per grid step.
# -----------------------------------------------------------------------------
def _garnet_kernel(x_rows_ref,    # (G*T, Din)   row-per-track view of X
                   x_wide_ref,    # (G, T*Din)   lane-dense per-batch view of X
                   win_ref,       # (Din, F+A)
                   bin_ref,       # (1, F+A)
                   wxb_ref,       # (T*Din, T*F) block-diagonal x-path weight
                   wpmax_ref,     # (A*F, F)     pooled(max)-path weight
                   wpmean_ref,    # (A*F, F)     pooled(mean)-path weight
                   bout_ref,      # (1, F)
                   o_ref,         # (G, T*F)
                   *, block_batch, n_tracks, feature_dim, n_aggregators):
    G, T, F, A = block_batch, n_tracks, feature_dim, n_aggregators

    # transform_in on all G*T tracks at once.
    x_rows = x_rows_ref[...]                                   # (G*T, Din)
    xp = jnp.dot(x_rows, win_ref[...],
                 preferred_element_type=jnp.float32) + bin_ref[...]   # (G*T, F+A)

    # Leading-dim reshapes only (T == sublane tile, layout preserving).
    feat3 = xp[:, :F].reshape(G, T, F)                         # (G, T, F)
    pot3 = jnp.exp(-jnp.abs(xp[:, F:])).reshape(G, T, A)       # (G, T, A)

    # Per-aggregator pooling over the track (sublane) axis.  A is tiny, so a
    # static unroll; results are laid out flat as a*F + f, matching the
    # row-reordered Wout pieces built by the wrapper.
    max_parts = []
    sum_parts = []
    for a in range(A):
        w = feat3 * pot3[:, :, a:a + 1]                        # (G, T, F)
        max_parts.append(jnp.max(w, axis=1))                   # (G, F)
        sum_parts.append(jnp.sum(w, axis=1))                   # (G, F)
    max_flat = jnp.concatenate(max_parts, axis=-1)             # (G, A*F)
    mean_flat = jnp.concatenate(sum_parts, axis=-1) * (1.0 / T)

    # Pooled half of transform_out: computed once per batch element (it is
    # identical for every track), bias folded in here.
    pooled = (jnp.dot(max_flat, wpmax_ref[...], preferred_element_type=jnp.float32)
              + jnp.dot(mean_flat, wpmean_ref[...], preferred_element_type=jnp.float32)
              + bout_ref[...])                                 # (G, F)

    # X half of transform_out, produced directly in the (G, T*F) flat layout
    # via the block-diagonal weight -> single MXU matmul, no concat/broadcast.
    xc = jnp.dot(x_wide_ref[...], wxb_ref[...],
                 preferred_element_type=jnp.float32)           # (G, T*F)

    # Broadcast pooled over tracks in flat layout (lane tile), add, activate.
    pooled_tiled = jnp.concatenate([pooled] * T, axis=-1)      # (G, T*F)
    o_ref[...] = jnp.tanh(xc + pooled_tiled).astype(o_ref.dtype)


def _pick_block_batch(B, T, target_rows=512):
    """Largest divisor G of B with G*T <= target_rows, preferring >=2 grid
    steps (keeps both v7x TensorCores busy via the parallel grid axis)."""
    divisors = [g for g in range(1, B + 1) if B % g == 0]
    fitting = [g for g in divisors if g * T <= target_rows] or [1]
    multi = [g for g in fitting if B // g >= 2]
    return max(multi) if multi else max(fitting)


# -----------------------------------------------------------------------------
# Wrapper: static weight re-layout + pallas_call.
# -----------------------------------------------------------------------------
def garnet_layer(x, w_in_t, b_in, w_out_t, b_out,
                 *, feature_dim, n_aggregators, block_batch=None):
    """x: (B, T, Din) f32; weights pre-transposed:
       w_in_t: (Din, F+A), b_in: (1, F+A),
       w_out_t: (Din + 2*F*A, F)  [rows: first Din -> X, then per-aggregator
                                   [max(F), mean(F)] blocks], b_out: (1, F)."""
    B, T, Din = x.shape
    F, A = feature_dim, n_aggregators
    FA = F + A
    assert w_in_t.shape == (Din, FA)
    assert w_out_t.shape == (Din + 2 * F * A, F)

    G = _pick_block_batch(B, T) if block_batch is None else block_batch
    assert B % G == 0, "block_batch must divide the batch"
    n_blocks = B // G

    # Split transform_out into the X path and the pooled path, reordering the
    # pooled rows from torch's per-aggregator [max, mean] interleave into
    # contiguous [all-max | all-mean] (so the kernel never interleaves
    # activations).  Static, done once outside the kernel.
    w_x = w_out_t[:Din, :]                                     # (Din, F)
    w_pool = w_out_t[Din:, :].reshape(A, 2, F, F)              # (A,{max,mean},F,F)
    w_pool_max = w_pool[:, 0].reshape(A * F, F)                # rows = a*F + f
    w_pool_mean = w_pool[:, 1].reshape(A * F, F)
    # Block-diagonal X-path weight -> output produced in (G, T*F) flat layout.
    w_x_blk = jnp.kron(jnp.eye(T, dtype=w_x.dtype), w_x)       # (T*Din, T*F)

    # Two (free, wrapper-side) views of X so the kernel needs no minor-dim
    # relayouts: row-per-track for transform_in, lane-dense for the X path.
    x_rows = x.reshape(B * T, Din)
    x_wide = x.reshape(B, T * Din)

    kernel = functools.partial(_garnet_kernel, block_batch=G, n_tracks=T,
                               feature_dim=F, n_aggregators=A)

    out_flat = pl.pallas_call(
        kernel,
        out_shape=jax.ShapeDtypeStruct((B, T * F), jnp.float32),
        grid_spec=pltpu.PrefetchScalarGridSpec(
            num_scalar_prefetch=0,
            grid=(n_blocks,),
            in_specs=[
                pl.BlockSpec((G * T, Din), lambda i: (i, 0)),      # x_rows
                pl.BlockSpec((G, T * Din), lambda i: (i, 0)),      # x_wide
                pl.BlockSpec((Din, FA), lambda i: (0, 0)),         # w_in
                pl.BlockSpec((1, FA), lambda i: (0, 0)),           # b_in
                pl.BlockSpec((T * Din, T * F), lambda i: (0, 0)),  # w_x_blk
                pl.BlockSpec((A * F, F), lambda i: (0, 0)),        # w_pool_max
                pl.BlockSpec((A * F, F), lambda i: (0, 0)),        # w_pool_mean
                pl.BlockSpec((1, F), lambda i: (0, 0)),            # b_out
            ],
            out_specs=pl.BlockSpec((G, T * F), lambda i: (i, 0)),  # lane-dense
        ),
        compiler_params=pltpu.CompilerParams(
            dimension_semantics=("parallel",)),
    )(x_rows, x_wide, w_in_t, b_in, w_x_blk, w_pool_max, w_pool_mean, b_out)

    return out_flat.reshape(B, T, F)


# -----------------------------------------------------------------------------
# Pure-JAX reference (mirrors the PyTorch forward exactly) for validation.
# -----------------------------------------------------------------------------
def garnet_reference(x, w_in_t, b_in, w_out_t, b_out, *, feature_dim, n_aggregators):
    xp = x @ w_in_t + b_in                                     # (B, T, F+A)
    feat = xp[..., :feature_dim]
    dist = xp[..., feature_dim:]
    pot = jnp.exp(-jnp.abs(dist))
    edges = jnp.einsum('btf,bta->baft', feat, pot)             # (B, A, F, T)
    max_pooled = jnp.max(edges, axis=-1)                       # (B, A, F)
    mean_pooled = jnp.mean(edges, axis=-1)                     # (B, A, F)
    pooled = jnp.concatenate([max_pooled, mean_pooled], axis=-1)   # (B, A, 2F)
    B, T = x.shape[0], x.shape[1]
    pooled = pooled.reshape(B, 1, -1)
    pooled = jnp.broadcast_to(pooled, (B, T, pooled.shape[-1]))
    h = jnp.concatenate([x, pooled], axis=-1)
    return jnp.tanh(h @ w_out_t + b_out)


if __name__ == "__main__":
    # Shapes consistent with the module's forward (batch sized so that the
    # batched tiling actually engages: 2 grid steps of 32 events x 8 tracks).
    B, T = 64, 8              # n_minibatches, n_tracks
    input_dim = 8             # n_track_features
    feature_dim = 16
    n_aggregators = 4
    # hidden_activation = "Tanh"

    key = jax.random.PRNGKey(0)
    k_x, k_w1, k_b1, k_w2, k_b2 = jax.random.split(key, 5)

    x = jax.random.normal(k_x, (B, T, input_dim), dtype=jnp.float32)

    # transform_in: Linear(input_dim, feature_dim + n_aggregators)
    FA = feature_dim + n_aggregators
    w_in_t = 0.1 * jax.random.normal(k_w1, (input_dim, FA), dtype=jnp.float32)
    b_in = 0.1 * jax.random.normal(k_b1, (1, FA), dtype=jnp.float32)

    # transform_out: Linear(2*F*A + input_dim, feature_dim) + Tanh
    Hin = 2 * feature_dim * n_aggregators + input_dim
    w_out_t = 0.1 * jax.random.normal(k_w2, (Hin, feature_dim), dtype=jnp.float32)
    b_out = 0.1 * jax.random.normal(k_b2, (1, feature_dim), dtype=jnp.float32)

    out = garnet_layer(x, w_in_t, b_in, w_out_t, b_out,
                       feature_dim=feature_dim, n_aggregators=n_aggregators)
    out = jax.block_until_ready(out)

    ref = garnet_reference(x, w_in_t, b_in, w_out_t, b_out,
                           feature_dim=feature_dim, n_aggregators=n_aggregators)
    assert out.shape == (B, T, feature_dim)
    assert jnp.allclose(out, ref, atol=1e-4, rtol=1e-4), "mismatch vs reference"

    print("KERNEL_OK")
</pallas_src>

<mosaic_0001>
module attributes {stable_mosaic.version = 11 : i64} {
  func.func @_garnet_kernel(%arg0: i32, %arg1: memref<256x8xf32, #tpu.memory_space<vmem>>, %arg2: memref<32x64xf32, #tpu.memory_space<vmem>>, %arg3: memref<8x20xf32, #tpu.memory_space<vmem>>, %arg4: memref<1x20xf32, #tpu.memory_space<vmem>>, %arg5: memref<64x128xf32, #tpu.memory_space<vmem>>, %arg6: memref<64x16xf32, #tpu.memory_space<vmem>>, %arg7: memref<64x16xf32, #tpu.memory_space<vmem>>, %arg8: memref<1x16xf32, #tpu.memory_space<vmem>>, %arg9: memref<32x128xf32, #tpu.memory_space<vmem>>) attributes {dimension_semantics = [#tpu.dimension_semantics<parallel>], iteration_bounds = array<i64: 2>, scalar_prefetch = 0 : i64, scratch_operands = 0 : i64, tpu.core_type = #tpu.core_type<tc>, window_params = [{transform_indices = @transform_0, window_bounds = array<i64: 256, 8>}, {transform_indices = @transform_1, window_bounds = array<i64: 32, 64>}, {pipeline_mode = #tpu.pipeline_mode<synchronous>, transform_indices = @transform_2, window_bounds = array<i64: 8, 20>}, {pipeline_mode = #tpu.pipeline_mode<synchronous>, transform_indices = @transform_3, window_bounds = array<i64: 1, 20>}, {pipeline_mode = #tpu.pipeline_mode<synchronous>, transform_indices = @transform_4, window_bounds = array<i64: 64, 128>}, {pipeline_mode = #tpu.pipeline_mode<synchronous>, transform_indices = @transform_5, window_bounds = array<i64: 64, 16>}, {pipeline_mode = #tpu.pipeline_mode<synchronous>, transform_indices = @transform_6, window_bounds = array<i64: 64, 16>}, {pipeline_mode = #tpu.pipeline_mode<synchronous>, transform_indices = @transform_7, window_bounds = array<i64: 1, 16>}, {transform_indices = @transform_8, window_bounds = array<i64: 32, 128>}]} {
    %c0 = arith.constant 0 : index
    %c0_0 = arith.constant 0 : index
    %0 = vector.load %arg1[%c0, %c0_0] : memref<256x8xf32, #tpu.memory_space<vmem>>, vector<256x8xf32>
    %c0_1 = arith.constant 0 : index
    %c0_2 = arith.constant 0 : index
    %1 = vector.load %arg3[%c0_1, %c0_2] : memref<8x20xf32, #tpu.memory_space<vmem>>, vector<8x20xf32>
    %cst = arith.constant dense<0.000000e+00> : vector<256x20xf32>
    %2 = tpu.matmul %0, %1, %cst {dimension_numbers = #tpu.dot_dimension_numbers<[1], [0], [0], [1], [0, 0, 1, 1], [], []>} : vector<256x8xf32>, vector<8x20xf32>, vector<256x20xf32> -> vector<256x20xf32>
    %c0_3 = arith.constant 0 : index
    %c0_4 = arith.constant 0 : index
    %3 = vector.load %arg4[%c0_3, %c0_4] : memref<1x20xf32, #tpu.memory_space<vmem>>, vector<1x20xf32>
    %4 = vector.broadcast %3 : vector<1x20xf32> to vector<256x20xf32>
    %5 = arith.addf %2, %4 : vector<256x20xf32>
    %6 = vector.extract_strided_slice %5 {offsets = [0, 0], sizes = [256, 16], strides = [1, 1]} : vector<256x20xf32> to vector<256x16xf32>
    %7 = vector.shape_cast %6 : vector<256x16xf32> to vector<32x8x16xf32>
    %8 = vector.extract_strided_slice %5 {offsets = [0, 16], sizes = [256, 4], strides = [1, 1]} : vector<256x20xf32> to vector<256x4xf32>
    %9 = math.absf %8 : vector<256x4xf32>
    %cst_5 = arith.constant 0.000000e+00 : f32
    %10 = vector.broadcast %cst_5 : f32 to vector<256x4xf32>
    %11 = arith.subf %10, %9 : vector<256x4xf32>
    %12 = math.exp %11 : vector<256x4xf32>
    %13 = vector.shape_cast %12 : vector<256x4xf32> to vector<32x8x4xf32>
    %14 = vector.extract_strided_slice %13 {offsets = [0, 0, 0], sizes = [32, 8, 1], strides = [1, 1, 1]} : vector<32x8x4xf32> to vector<32x8x1xf32>
    %15 = vector.broadcast %14 : vector<32x8x1xf32> to vector<32x8x16xf32>
    %16 = arith.mulf %7, %15 : vector<32x8x16xf32>
    %cst_6 = arith.constant dense<0xFF800000> : vector<32x16xf32>
    %17 = vector.multi_reduction <maximumf>, %16, %cst_6 [1] : vector<32x8x16xf32> to vector<32x16xf32>
    %cst_7 = arith.constant dense<0.000000e+00> : vector<32x16xf32>
    %18 = vector.multi_reduction <add>, %16, %cst_7 [1] : vector<32x8x16xf32> to vector<32x16xf32>
    %19 = vector.extract_strided_slice %13 {offsets = [0, 0, 1], sizes = [32, 8, 1], strides = [1, 1, 1]} : vector<32x8x4xf32> to vector<32x8x1xf32>
    %20 = vector.broadcast %19 : vector<32x8x1xf32> to vector<32x8x16xf32>
    %21 = arith.mulf %7, %20 : vector<32x8x16xf32>
    %cst_8 = arith.constant dense<0xFF800000> : vector<32x16xf32>
    %22 = vector.multi_reduction <maximumf>, %21, %cst_8 [1] : vector<32x8x16xf32> to vector<32x16xf32>
    %cst_9 = arith.constant dense<0.000000e+00> : vector<32x16xf32>
    %23 = vector.multi_reduction <add>, %21, %cst_9 [1] : vector<32x8x16xf32> to vector<32x16xf32>
    %24 = vector.extract_strided_slice %13 {offsets = [0, 0, 2], sizes = [32, 8, 1], strides = [1, 1, 1]} : vector<32x8x4xf32> to vector<32x8x1xf32>
    %25 = vector.broadcast %24 : vector<32x8x1xf32> to vector<32x8x16xf32>
    %26 = arith.mulf %7, %25 : vector<32x8x16xf32>
    %cst_10 = arith.constant dense<0xFF800000> : vector<32x16xf32>
    %27 = vector.multi_reduction <maximumf>, %26, %cst_10 [1] : vector<32x8x16xf32> to vector<32x16xf32>
    %cst_11 = arith.constant dense<0.000000e+00> : vector<32x16xf32>
    %28 = vector.multi_reduction <add>, %26, %cst_11 [1] : vector<32x8x16xf32> to vector<32x16xf32>
    %29 = vector.extract_strided_slice %13 {offsets = [0, 0, 3], sizes = [32, 8, 1], strides = [1, 1, 1]} : vector<32x8x4xf32> to vector<32x8x1xf32>
    %30 = vector.broadcast %29 : vector<32x8x1xf32> to vector<32x8x16xf32>
    %31 = arith.mulf %7, %30 : vector<32x8x16xf32>
    %cst_12 = arith.constant dense<0xFF800000> : vector<32x16xf32>
    %32 = vector.multi_reduction <maximumf>, %31, %cst_12 [1] : vector<32x8x16xf32> to vector<32x16xf32>
    %cst_13 = arith.constant dense<0.000000e+00> : vector<32x16xf32>
    %33 = vector.multi_reduction <add>, %31, %cst_13 [1] : vector<32x8x16xf32> to vector<32x16xf32>
    %34 = tpu.concatenate %17, %22, %27, %32 in 1 : vector<32x16xf32>, vector<32x16xf32>, vector<32x16xf32>, vector<32x16xf32> -> vector<32x64xf32>
    %35 = tpu.concatenate %18, %23, %28, %33 in 1 : vector<32x16xf32>, vector<32x16xf32>, vector<32x16xf32>, vector<32x16xf32> -> vector<32x64xf32>
    %cst_14 = arith.constant 1.250000e-01 : f32
    %36 = vector.broadcast %cst_14 : f32 to vector<32x64xf32>
    %37 = arith.mulf %35, %36 : vector<32x64xf32>
    %c0_15 = arith.constant 0 : index
    %c0_16 = arith.constant 0 : index
    %38 = vector.load %arg6[%c0_15, %c0_16] : memref<64x16xf32, #tpu.memory_space<vmem>>, vector<64x16xf32>
    %cst_17 = arith.constant dense<0.000000e+00> : vector<32x16xf32>
    %39 = tpu.matmul %34, %38, %cst_17 {dimension_numbers = #tpu.dot_dimension_numbers<[1], [0], [0], [1], [0, 0, 1, 1], [], []>} : vector<32x64xf32>, vector<64x16xf32>, vector<32x16xf32> -> vector<32x16xf32>
    %c0_18 = arith.constant 0 : index
    %c0_19 = arith.constant 0 : index
    %40 = vector.load %arg7[%c0_18, %c0_19] : memref<64x16xf32, #tpu.memory_space<vmem>>, vector<64x16xf32>
    %cst_20 = arith.constant dense<0.000000e+00> : vector<32x16xf32>
    %41 = tpu.matmul %37, %40, %cst_20 {dimension_numbers = #tpu.dot_dimension_numbers<[1], [0], [0], [1], [0, 0, 1, 1], [], []>} : vector<32x64xf32>, vector<64x16xf32>, vector<32x16xf32> -> vector<32x16xf32>
    %42 = arith.addf %39, %41 : vector<32x16xf32>
    %c0_21 = arith.constant 0 : index
    %c0_22 = arith.constant 0 : index
    %43 = vector.load %arg8[%c0_21, %c0_22] : memref<1x16xf32, #tpu.memory_space<vmem>>, vector<1x16xf32>
    %44 = vector.broadcast %43 : vector<1x16xf32> to vector<32x16xf32>
    %45 = arith.addf %42, %44 : vector<32x16xf32>
    %c0_23 = arith.constant 0 : index
    %c0_24 = arith.constant 0 : index
    %46 = vector.load %arg2[%c0_23, %c0_24] : memref<32x64xf32, #tpu.memory_space<vmem>>, vector<32x64xf32>
    %c0_25 = arith.constant 0 : index
    %c0_26 = arith.constant 0 : index
    %47 = vector.load %arg5[%c0_25, %c0_26] : memref<64x128xf32, #tpu.memory_space<vmem>>, vector<64x128xf32>
    %cst_27 = arith.constant dense<0.000000e+00> : vector<32x128xf32>
    %48 = tpu.matmul %46, %47, %cst_27 {dimension_numbers = #tpu.dot_dimension_numbers<[1], [0], [0], [1], [0, 0, 1, 1], [], []>} : vector<32x64xf32>, vector<64x128xf32>, vector<32x128xf32> -> vector<32x128xf32>
    %49 = tpu.concatenate %45, %45, %45, %45, %45, %45, %45, %45 in 1 : vector<32x16xf32>, vector<32x16xf32>, vector<32x16xf32>, vector<32x16xf32>, vector<32x16xf32>, vector<32x16xf32>, vector<32x16xf32>, vector<32x16xf32> -> vector<32x128xf32>
    %50 = arith.addf %48, %49 : vector<32x128xf32>
    %51 = math.tanh %50 : vector<32x128xf32>
    %c0_28 = arith.constant 0 : index
    %c0_29 = arith.constant 0 : index
    %52 = vector.load %arg9[%c0_28, %c0_29] : memref<32x128xf32, #tpu.memory_space<vmem>>, vector<32x128xf32>
    tpu.vector_store %arg9[%c0_28, %c0_29], %51 {strides = array<i32>} : memref<32x128xf32, #tpu.memory_space<vmem>>, vector<32x128xf32>,
    return
  }
  func.func @transform_0(%arg0: i32) -> (i32, i32) {
    %c0_i32 = arith.constant 0 : i32
    %c0_i32_0 = arith.constant 0 : i32
    return %arg0, %c0_i32 : i32, i32
  }
  func.func @transform_1(%arg0: i32) -> (i32, i32) {
    %c0_i32 = arith.constant 0 : i32
    %c0_i32_0 = arith.constant 0 : i32
    return %arg0, %c0_i32 : i32, i32
  }
  func.func @transform_2(%arg0: i32) -> (i32, i32) {
    %c0_i32 = arith.constant 0 : i32
    %c0_i32_0 = arith.constant 0 : i32
    %c0_i32_1 = arith.constant 0 : i32
    return %c0_i32, %c0_i32_0 : i32, i32
  }
  func.func @transform_3(%arg0: i32) -> (i32, i32) {
    %c0_i32 = arith.constant 0 : i32
    %c0_i32_0 = arith.constant 0 : i32
    %c0_i32_1 = arith.constant 0 : i32
    return %c0_i32, %c0_i32_0 : i32, i32
  }
  func.func @transform_4(%arg0: i32) -> (i32, i32) {
    %c0_i32 = arith.constant 0 : i32
    %c0_i32_0 = arith.constant 0 : i32
    %c0_i32_1 = arith.constant 0 : i32
    return %c0_i32, %c0_i32_0 : i32, i32
  }
  func.func @transform_5(%arg0: i32) -> (i32, i32) {
    %c0_i32 = arith.constant 0 : i32
    %c0_i32_0 = arith.constant 0 : i32
    %c0_i32_1 = arith.constant 0 : i32
    return %c0_i32, %c0_i32_0 : i32, i32
  }
  func.func @transform_6(%arg0: i32) -> (i32, i32) {
    %c0_i32 = arith.constant 0 : i32
    %c0_i32_0 = arith.constant 0 : i32
    %c0_i32_1 = arith.constant 0 : i32
    return %c0_i32, %c0_i32_0 : i32, i32
  }
  func.func @transform_7(%arg0: i32) -> (i32, i32) {
    %c0_i32 = arith.constant 0 : i32
    %c0_i32_0 = arith.constant 0 : i32
    %c0_i32_1 = arith.constant 0 : i32
    return %c0_i32, %c0_i32_0 : i32, i32
  }
  func.func @transform_8(%arg0: i32) -> (i32, i32) {
    %c0_i32 = arith.constant 0 : i32
    %c0_i32_0 = arith.constant 0 : i32
    return %arg0, %c0_i32 : i32, i32
  }
}

</mosaic_0001>

<llo_original>
// kernel: tpu_custom_call.1
$region0: #{tpu_custom_call.1}
  #allocation0 [shape = 'u32[]', space=smem, size = 0x4, offset = 0x4, fixed_abs, tag = 'smem constant byte address 0x4 - core index']
  #allocation1 [shape = 'u32[144,128]{1,0:T(1,128)}', space=vmem, size = 0x12000, scoped, tag = 'internal scratch']
  %s0 = inlined_call_operand.vmem [shape: f32[512,8], index: 0, kind: input, shape index: {}]
  %s1 = inlined_call_operand.vmem [shape: f32[64,64], index: 1, kind: input, shape index: {}]
  %s2 = inlined_call_operand.vmem [shape: f32[8,20], index: 2, kind: input, shape index: {}]
  %s3 = inlined_call_operand.vmem [shape: f32[1,20], index: 3, kind: input, shape index: {}]
  %s4 = inlined_call_operand.vmem [shape: f32[64,128], index: 4, kind: input, shape index: {}]
  %s5 = inlined_call_operand.vmem [shape: f32[64,16], index: 5, kind: input, shape index: {}]
  %s6 = inlined_call_operand.vmem [shape: f32[64,16], index: 6, kind: input, shape index: {}]
  %s7 = inlined_call_operand.vmem [shape: f32[1,16], index: 7, kind: input, shape index: {}]
  %s8 = inlined_call_operand.hbm [shape: f32[64,128], index: 8, kind: output, shape index: {}]
  %s9 = sld [smem:[#allocation0]]
  $region65: #{tpu_custom_call.1} parent=0
    _
  %s11 = ssub.s32 1, %s9
  %s12 = scalar_select 0, %s11, %s9
  $region1: #{tpu_custom_call.1} parent=0
    #allocation2 [shape = 'u8[32768]{0}', space=vmem, size = 0x8000, scoped, tag = 'output window, operand 0']
    #allocation3 [shape = 's32[2]{0}', space=sflag, size = 0x8, scoped, tag = 'scoped memory for tpu_custom_call.1']
    %13 = vsyncpa [#allocation3], 0
    %s14 = scalar_lea.sflag [#allocation3], 1
    %15 = vsyncpa %s14, 0
    loop: start=0, step=1, limit=4
    $region2: #{tpu_custom_call.1} parent=1 // loop_pre_header
      _
    $region3: #{tpu_custom_call.1} parent=1 // loop_header
      %s17 = sphi 0, %s21
      %p18 = scmp.ge.s32.totalorder %s17, 4
      %s27 = sphi 0, %s29
      %s30 = sphi 0, %s27
      %s31 = sphi 0, %s30
      %s47 = sphi 0, %s31
      %s53 = sphi 0, %s55
      %s56 = sphi 0, %s53
      %s57 = sphi 0, %s56
      %s73 = sphi 0, %s57
      %s77 = sphi 0, %s77
      %s79 = sphi 0, %s77
      %s80 = sphi 0, %s79
      %s94 = sphi 0, %s80
      %s98 = sphi 0, %s98
      %s100 = sphi 0, %s98
      %s101 = sphi 0, %s100
      %s115 = sphi 0, %s101
      %s119 = sphi 0, %s119
      %s121 = sphi 0, %s119
      %s122 = sphi 0, %s121
      %s136 = sphi 0, %s122
      %s140 = sphi 0, %s140
      %s142 = sphi 0, %s140
      %s143 = sphi 0, %s142
      %s157 = sphi 0, %s143
      %s161 = sphi 0, %s161
      %s163 = sphi 0, %s161
      %s164 = sphi 0, %s163
      %s178 = sphi 0, %s164
      %s182 = sphi 0, %s182
      %s184 = sphi 0, %s182
      %s185 = sphi 0, %s184
      %s199 = sphi 0, %s185
      %s205 = sphi 0, %s207
      %s208 = sphi 0, %s205
      %s209 = sphi 0, %s208
      %s225 = sphi 0, %s209
    $region4: #{tpu_custom_call.1} parent=1 // loop_header_branch
      %20 = sbr.rel (%p18) target = $region8
    $region5: #{tpu_custom_call.1} parent=1 // loop_body
      %s22 = ssub.s32 %s17, 1
      %s23 = ssub.s32 %s17, 2
      %s24 = sadd.s32 %s17, 1
      %s25 = ssub.s32 %s17, %s24
      %p26 = scmp.eq.s32.totalorder %s25, 0
      %s28 = sadd.s32 %s27, 1
      %s29 = scalar_select %p26, %s27, %s28
      %p32 = pneg %p26
      %p33 = scmp.eq.s32.totalorder %s17, 1
      %p34 = por %p32, %p33
      %p35 = scmp.ne.s32.totalorder %s27, %s30
      %p36 = scmp.eq.s32.totalorder %s17, 0
      %p37 = por %p35, %p36
      %p38 = scmp.ne.s32.totalorder %s27, %s30
      %p39 = scmp.eq.s32.totalorder %s22, 1
      %p40 = por %p38, %p39
      %p41 = scmp.ne.s32.totalorder %s30, %s31
      %p42 = scmp.eq.s32.totalorder %s22, 0
      %p43 = por %p41, %p42
      %p44 = scmp.ne.s32.totalorder %s30, %s31
      %p45 = scmp.eq.s32.totalorder %s23, 1
      %p46 = por %p44, %p45
      %p48 = scmp.ne.s32.totalorder %s31, %s47
      %p49 = scmp.eq.s32.totalorder %s23, 0
      %p50 = por %p48, %p49
      %s51 = ssub.s32 %s17, %s24
      %p52 = scmp.eq.s32.totalorder %s51, 0
      %s54 = sadd.s32 %s53, 1
      %s55 = scalar_select %p52, %s53, %s54
      %p58 = pneg %p52
      %p59 = scmp.eq.s32.totalorder %s17, 1
      %p60 = por %p58, %p59
      %p61 = scmp.ne.s32.totalorder %s53, %s56
      %p62 = scmp.eq.s32.totalorder %s17, 0
      %p63 = por %p61, %p62
      %p64 = scmp.ne.s32.totalorder %s53, %s56
      %p65 = scmp.eq.s32.totalorder %s22, 1
      %p66 = por %p64, %p65
      %p67 = scmp.ne.s32.totalorder %s56, %s57
      %p68 = scmp.eq.s32.totalorder %s22, 0
      %p69 = por %p67, %p68
      %p70 = scmp.ne.s32.totalorder %s56, %s57
      %p71 = scmp.eq.s32.totalorder %s23, 1
      %p72 = por %p70, %p71
      %p74 = scmp.ne.s32.totalorder %s57, %s73
      %p75 = scmp.eq.s32.totalorder %s23, 0
      %p76 = por %p74, %p75
      %s78 = sadd.s32 %s77, 1
      %p81 = scmp.eq.s32.totalorder %s17, 1
      %p82 = scmp.ne.s32.totalorder %s77, %s79
      %p83 = scmp.eq.s32.totalorder %s17, 0
      %p84 = por %p82, %p83
      %p85 = scmp.ne.s32.totalorder %s77, %s79
      %p86 = scmp.eq.s32.totalorder %s22, 1
      %p87 = por %p85, %p86
      %p88 = scmp.ne.s32.totalorder %s79, %s80
      %p89 = scmp.eq.s32.totalorder %s22, 0
      %p90 = por %p88, %p89
      %p91 = scmp.ne.s32.totalorder %s79, %s80
      %p92 = scmp.eq.s32.totalorder %s23, 1
      %p93 = por %p91, %p92
      %p95 = scmp.ne.s32.totalorder %s80, %s94
      %p96 = scmp.eq.s32.totalorder %s23, 0
      %p97 = por %p95, %p96
      %s99 = sadd.s32 %s98, 1
      %p102 = scmp.eq.s32.totalorder %s17, 1
      %p103 = scmp.ne.s32.totalorder %s98, %s100
      %p104 = scmp.eq.s32.totalorder %s17, 0
      %p105 = por %p103, %p104
      %p106 = scmp.ne.s32.totalorder %s98, %s100
      %p107 = scmp.eq.s32.totalorder %s22, 1
      %p108 = por %p106, %p107
      %p109 = scmp.ne.s32.totalorder %s100, %s101
      %p110 = scmp.eq.s32.totalorder %s22, 0
      %p111 = por %p109, %p110
      %p112 = scmp.ne.s32.totalorder %s100, %s101
      %p113 = scmp.eq.s32.totalorder %s23, 1
      %p114 = por %p112, %p113
      %p116 = scmp.ne.s32.totalorder %s101, %s115
      %p117 = scmp.eq.s32.totalorder %s23, 0
      %p118 = por %p116, %p117
      %s120 = sadd.s32 %s119, 1
      %p123 = scmp.eq.s32.totalorder %s17, 1
      %p124 = scmp.ne.s32.totalorder %s119, %s121
      %p125 = scmp.eq.s32.totalorder %s17, 0
      %p126 = por %p124, %p125
      %p127 = scmp.ne.s32.totalorder %s119, %s121
      %p128 = scmp.eq.s32.totalorder %s22, 1
      %p129 = por %p127, %p128
      %p130 = scmp.ne.s32.totalorder %s121, %s122
      %p131 = scmp.eq.s32.totalorder %s22, 0
      %p132 = por %p130, %p131
      %p133 = scmp.ne.s32.totalorder %s121, %s122
      %p134 = scmp.eq.s32.totalorder %s23, 1
      %p135 = por %p133, %p134
      %p137 = scmp.ne.s32.totalorder %s122, %s136
      %p138 = scmp.eq.s32.totalorder %s23, 0
      %p139 = por %p137, %p138
      %s141 = sadd.s32 %s140, 1
      %p144 = scmp.eq.s32.totalorder %s17, 1
      %p145 = scmp.ne.s32.totalorder %s140, %s142
      %p146 = scmp.eq.s32.totalorder %s17, 0
      %p147 = por %p145, %p146
      %p148 = scmp.ne.s32.totalorder %s140, %s142
      %p149 = scmp.eq.s32.totalorder %s22, 1
      %p150 = por %p148, %p149
      %p151 = scmp.ne.s32.totalorder %s142, %s143
      %p152 = scmp.eq.s32.totalorder %s22, 0
      %p153 = por %p151, %p152
      %p154 = scmp.ne.s32.totalorder %s142, %s143
      %p155 = scmp.eq.s32.totalorder %s23, 1
      %p156 = por %p154, %p155
      %p158 = scmp.ne.s32.totalorder %s143, %s157
      %p159 = scmp.eq.s32.totalorder %s23, 0
      %p160 = por %p158, %p159
      %s162 = sadd.s32 %s161, 1
      %p165 = scmp.eq.s32.totalorder %s17, 1
      %p166 = scmp.ne.s32.totalorder %s161, %s163
      %p167 = scmp.eq.s32.totalorder %s17, 0
      %p168 = por %p166, %p167
      %p169 = scmp.ne.s32.totalorder %s161, %s163
      %p170 = scmp.eq.s32.totalorder %s22, 1
      %p171 = por %p169, %p170
      %p172 = scmp.ne.s32.totalorder %s163, %s164
      %p173 = scmp.eq.s32.totalorder %s22, 0
      %p174 = por %p172, %p173
      %p175 = scmp.ne.s32.totalorder %s163, %s164
      %p176 = scmp.eq.s32.totalorder %s23, 1
      %p177 = por %p175, %p176
      %p179 = scmp.ne.s32.totalorder %s164, %s178
      %p180 = scmp.eq.s32.totalorder %s23, 0
      %p181 = por %p179, %p180
      %s183 = sadd.s32 %s182, 1
      %p186 = scmp.eq.s32.totalorder %s17, 1
      %p187 = scmp.ne.s32.totalorder %s182, %s184
      %p188 = scmp.eq.s32.totalorder %s17, 0
      %p189 = por %p187, %p188
      %p190 = scmp.ne.s32.totalorder %s182, %s184
      %p191 = scmp.eq.s32.totalorder %s22, 1
      %p192 = por %p190, %p191
      %p193 = scmp.ne.s32.totalorder %s184, %s185
      %p194 = scmp.eq.s32.totalorder %s22, 0
      %p195 = por %p193, %p194
      %p196 = scmp.ne.s32.totalorder %s184, %s185
      %p197 = scmp.eq.s32.totalorder %s23, 1
      %p198 = por %p196, %p197
      %p200 = scmp.ne.s32.totalorder %s185, %s199
      %p201 = scmp.eq.s32.totalorder %s23, 0
      %p202 = por %p200, %p201
      %s203 = ssub.s32 %s17, %s24
      %p204 = scmp.eq.s32.totalorder %s203, 0
      %s206 = sadd.s32 %s205, 1
      %s207 = scalar_select %p204, %s205, %s206
      %p210 = pneg %p204
      %p211 = scmp.eq.s32.totalorder %s17, 1
      %p212 = por %p210, %p211
      %p213 = scmp.ne.s32.totalorder %s205, %s208
      %p214 = scmp.eq.s32.totalorder %s17, 0
      %p215 = por %p213, %p214
      %p216 = scmp.ne.s32.totalorder %s205, %s208
      %p217 = scmp.eq.s32.totalorder %s22, 1
      %p218 = por %p216, %p217
      %p219 = scmp.ne.s32.totalorder %s208, %s209
      %p220 = scmp.eq.s32.totalorder %s22, 0
      %p221 = por %p219, %p220
      %p222 = scmp.ne.s32.totalorder %s208, %s209
      %p223 = scmp.eq.s32.totalorder %s23, 1
      %p224 = por %p222, %p223
      %p226 = scmp.ne.s32.totalorder %s209, %s225
      %p227 = scmp.eq.s32.totalorder %s23, 0
      %p228 = por %p226, %p227
      %p229 = scmp.le.s32.totalorder 1, %s17
      %p230 = scmp.lt.s32.totalorder %s17, 3
      %p231 = pnand %p229, %p230
      %p232 = pneg %p231
      // Predicated region
      $region9: #{tpu_custom_call.1} parent=5 // pred_check
        _
      $region10: #{tpu_custom_call.1} parent=5 // pred_check_branch
        %234 = sbr.rel (%p231) target = $region12
      $region11: #{tpu_custom_call.1} parent=5 // pred_region
        %s235 = ssub.s32 %s17, 1
        // Predicated region
        $region13: #{tpu_custom_call.1} parent=11 // pred_check
          %p236 = pneg %p90
        $region14: #{tpu_custom_call.1} parent=11 // pred_check_branch
          %238 = sbr.rel (%p236) target = $region16
        $region15: #{tpu_custom_call.1} parent=11 // pred_region
          _
        $region16: #{tpu_custom_call.1} parent=11 // pred_fallthru
          _
        // Predicated region
        $region17: #{tpu_custom_call.1} parent=11 // pred_check
          %p239 = pneg %p111
        $region18: #{tpu_custom_call.1} parent=11 // pred_check_branch
          %241 = sbr.rel (%p239) target = $region20
        $region19: #{tpu_custom_call.1} parent=11 // pred_region
          _
        $region20: #{tpu_custom_call.1} parent=11 // pred_fallthru
          _
        // Predicated region
        $region21: #{tpu_custom_call.1} parent=11 // pred_check
          %p242 = pneg %p132
        $region22: #{tpu_custom_call.1} parent=11 // pred_check_branch
          %244 = sbr.rel (%p242) target = $region24
        $region23: #{tpu_custom_call.1} parent=11 // pred_region
          _
        $region24: #{tpu_custom_call.1} parent=11 // pred_fallthru
          _
        // Predicated region
        $region25: #{tpu_custom_call.1} parent=11 // pred_check
          %p245 = pneg %p153
        $region26: #{tpu_custom_call.1} parent=11 // pred_check_branch
          %247 = sbr.rel (%p245) target = $region28
        $region27: #{tpu_custom_call.1} parent=11 // pred_region
          _
        $region28: #{tpu_custom_call.1} parent=11 // pred_fallthru
          _
        // Predicated region
        $region29: #{tpu_custom_call.1} parent=11 // pred_check
          %p248 = pneg %p174
        $region30: #{tpu_custom_call.1} parent=11 // pred_check_branch
          %250 = sbr.rel (%p248) target = $region32
        $region31: #{tpu_custom_call.1} parent=11 // pred_region
          _
        $region32: #{tpu_custom_call.1} parent=11 // pred_fallthru
          _
        // Predicated region
        $region33: #{tpu_custom_call.1} parent=11 // pred_check
          %p251 = pneg %p195
        $region34: #{tpu_custom_call.1} parent=11 // pred_check_branch
          %253 = sbr.rel (%p251) target = $region36
        $region35: #{tpu_custom_call.1} parent=11 // pred_region
          _
        $region36: #{tpu_custom_call.1} parent=11 // pred_fallthru
          _
      $region12: #{tpu_custom_call.1} parent=5 // pred_fallthru
        _
      %p254 = scmp.lt.s32.totalorder %s17, 2
      // Predicated region
      $region37: #{tpu_custom_call.1} parent=5 // pred_check
        %p255 = pneg %p254
      $region38: #{tpu_custom_call.1} parent=5 // pred_check_branch
        %257 = sbr.rel (%p255) target = $region40
      $region39: #{tpu_custom_call.1} parent=5 // pred_region
        // Predicated region
        $region41: #{tpu_custom_call.1} parent=39 // pred_check
          %p258 = pneg %p37
        $region42: #{tpu_custom_call.1} parent=39 // pred_check_branch
          %260 = sbr.rel (%p258) target = $region44
        $region43: #{tpu_custom_call.1} parent=39 // pred_region
          %s261 = smul.u32 32, %s17
          %p262 = scmp.lt.s32.totalorder %s261, 63
          %s263 = scalar_select %p262, %s261, 63
          %s264 = smul.addr %s263, 8
          %s265 = scalar_lea.vmem %s0, %s264
          %s266 = smul.u32 32, %s17
        $region44: #{tpu_custom_call.1} parent=39 // pred_fallthru
          _
        // Predicated region
        $region45: #{tpu_custom_call.1} parent=39 // pred_check
          %p267 = pneg %p63
        $region46: #{tpu_custom_call.1} parent=39 // pred_check_branch
          %269 = sbr.rel (%p267) target = $region48
        $region47: #{tpu_custom_call.1} parent=39 // pred_region
          %s270 = smul.u32 4, %s17
          %p271 = scmp.lt.s32.totalorder %s270, 7
          %s272 = scalar_select %p271, %s270, 7
          %s273 = smul.addr %s272, 8
          %s274 = scalar_lea.vmem %s1, %s273
          %s275 = smul.u32 4, %s17
        $region48: #{tpu_custom_call.1} parent=39 // pred_fallthru
          _
      $region40: #{tpu_custom_call.1} parent=5 // pred_fallthru
        _
      %p276 = scmp.le.s32.totalorder 1, %s17
      %p277 = scmp.lt.s32.totalorder %s17, 3
      %p278 = pnand %p276, %p277
      %p279 = pneg %p278
      // Predicated region
      $region49: #{tpu_custom_call.1} parent=5 // pred_check
        _
      $region50: #{tpu_custom_call.1} parent=5 // pred_check_branch
        %281 = sbr.rel (%p278) target = $region52
      $region51: #{tpu_custom_call.1} parent=5 // pred_region
        %s282 = ssub.s32 %s17, 1
        %s283 = smul.u32 32, %s22
        %p284 = scmp.lt.s32.totalorder %s283, 63
        %s285 = scalar_select %p284, %s283, 63
        %s286 = smul.addr %s285, 8
        %s287 = scalar_lea.vmem %s0, %s286
        %p288 = pneg %p43
        %p289 = pneg %p40
        %s290 = smul.u32 4, %s22
        %p291 = scmp.lt.s32.totalorder %s290, 7
        %s292 = scalar_select %p291, %s290, 7
        %s293 = smul.addr %s292, 8
        %s294 = scalar_lea.vmem %s1, %s293
        %p295 = pneg %p69
        %p296 = pneg %p66
        %p297 = pneg %p90
        %p298 = pneg %p87
        %p299 = pneg %p111
        %p300 = pneg %p108
        %p301 = pneg %p132
        %p302 = pneg %p129
        %p303 = pneg %p153
        %p304 = pneg %p150
        %p305 = pneg %p174
        %p306 = pneg %p171
        %p307 = pneg %p195
        %p308 = pneg %p192
        %p309 = pneg %p221
        %p310 = pneg %p218
        %s311 = sand.u32 %s208, 1
        %s312 = scalar_lea.sflag [#allocation3], %s311
        %s313 = sand.u32 %s208, 1
        %s314 = smul.addr %s313, 32
        %s315 = scalar_lea.vmem [#allocation2], %s314
        %s316 = smul.u32 32, %s22
        %p317 = scmp.lt.s32.totalorder %s316, 63
        %s318 = scalar_select %p317, %s316, 63
        %s319 = smul.addr %s318, 8
        %s320 = scalar_lea.vmem %s0, %s319
        %s321 = smul.u32 32, %s22
        %s322 = smul.u32 4, %s22
        %p323 = scmp.lt.s32.totalorder %s322, 7
        %s324 = scalar_select %p323, %s322, 7
        %s325 = smul.addr %s324, 8
        %s326 = scalar_lea.vmem %s1, %s325
        %s327 = smul.u32 4, %s22
        %s328 = smul.u32 4, %s22
        %v329 = vld [vmem:[%s320] sm:$0xff]
        %v330 = vld [vmem:[%s320 + $0x8] sm:$0xff]
        %v331 = vld [vmem:[%s320 + $0x10] sm:$0xff]
        %v332 = vld [vmem:[%s320 + $0x18] sm:$0xff]
        %v333 = vld [vmem:[%s320 + $0x20] sm:$0xff]
        %v334 = vld [vmem:[%s320 + $0x28] sm:$0xff]
        %v335 = vld [vmem:[%s320 + $0x30] sm:$0xff]
        %v336 = vld [vmem:[%s320 + $0x38] sm:$0xff]
        %v337 = vld [vmem:[%s320 + $0x40] sm:$0xff]
        %v338 = vld [vmem:[%s320 + $0x48] sm:$0xff]
        %v339 = vld [vmem:[%s320 + $0x50] sm:$0xff]
        %v340 = vld [vmem:[%s320 + $0x58] sm:$0xff]
        %v341 = vld [vmem:[%s320 + $0x60] sm:$0xff]
        %v342 = vld [vmem:[%s320 + $0x68] sm:$0xff]
        %v343 = vld [vmem:[%s320 + $0x70] sm:$0xff]
        %v344 = vld [vmem:[%s320 + $0x78] sm:$0xff]
        %v345 = vld [vmem:[%s320 + $0x80] sm:$0xff]
        %v346 = vld [vmem:[%s320 + $0x88] sm:$0xff]
        %v347 = vld [vmem:[%s320 + $0x90] sm:$0xff]
        %v348 = vld [vmem:[%s320 + $0x98] sm:$0xff]
        %v349 = vld [vmem:[%s320 + $0xa0] sm:$0xff]
        %v350 = vld [vmem:[%s320 + $0xa8] sm:$0xff]
        %v351 = vld [vmem:[%s320 + $0xb0] sm:$0xff]
        %v352 = vld [vmem:[%s320 + $0xb8] sm:$0xff]
        %v353 = vld [vmem:[%s320 + $0xc0] sm:$0xff]
        %v354 = vld [vmem:[%s320 + $0xc8] sm:$0xff]
        %v355 = vld [vmem:[%s320 + $0xd0] sm:$0xff]
        %v356 = vld [vmem:[%s320 + $0xd8] sm:$0xff]
        %v357 = vld [vmem:[%s320 + $0xe0] sm:$0xff]
        %v358 = vld [vmem:[%s320 + $0xe8] sm:$0xff]
        %v359 = vld [vmem:[%s320 + $0xf0] sm:$0xff]
        %v360 = vld [vmem:[%s320 + $0xf8] sm:$0xff]
        %v361 = vld [vmem:[%s2] sm:$0xff]
        %v362 = vld [vmem:[%s3] sm:$0x1]
        %v364 = vlaneseq
        %v365 = vshrl.u32 %v364, 7
        %v366 = vsub.s32 0, %v365
        %v367 = vrot.slane %v362, %v366
        %vm369 = vcmask 64512
        %v371 = vsel %vm369, %v329, 0
        %v374 = vsel %vm369, %v330, 0
        %v377 = vsel %vm369, %v331, 0
        %v380 = vsel %vm369, %v332, 0
        %v383 = vsel %vm369, %v333, 0
        %v386 = vsel %vm369, %v334, 0
        %v389 = vsel %vm369, %v335, 0
        %v392 = vsel %vm369, %v336, 0
        %v395 = vsel %vm369, %v337, 0
        %v398 = vsel %vm369, %v338, 0
        %v401 = vsel %vm369, %v339, 0
        %v404 = vsel %vm369, %v340, 0
        %v407 = vsel %vm369, %v341, 0
        %v410 = vsel %vm369, %v342, 0
        %v413 = vsel %vm369, %v343, 0
        %v416 = vsel %vm369, %v344, 0
        %v419 = vsel %vm369, %v345, 0
        %v422 = vsel %vm369, %v346, 0
        %v425 = vsel %vm369, %v347, 0
        %v428 = vsel %vm369, %v348, 0
        %v431 = vsel %vm369, %v349, 0
        %v434 = vsel %vm369, %v350, 0
        %v437 = vsel %vm369, %v351, 0
        %v440 = vsel %vm369, %v352, 0
        %v443 = vsel %vm369, %v353, 0
        %v446 = vsel %vm369, %v354, 0
        %v449 = vsel %vm369, %v355, 0
        %v452 = vsel %vm369, %v356, 0
        %v455 = vsel %vm369, %v357, 0
        %v458 = vsel %vm369, %v358, 0
        %v461 = vsel %vm369, %v359, 0
        %v464 = vsel %vm369, %v360, 0
        %466 = vmatprep.subr.mxu0 0.0
        %467 = vmatpush1.msra.mxu0 %v361
        %468 = vmatprep.subr.mxu0 0.0
        %469 = vmatpush1.msra.mxu0 0.0
        %470 = vmatprep.subr.mxu0 0.0
        %471 = vmatpush1.msra.mxu0 0.0
        %472 = vmatprep.subr.mxu0 0.0
        %473 = vmatpush1.msra.mxu0 0.0
        %474 = vmatprep.subr.mxu0 0.0
        %475 = vmatpush1.msra.mxu0 0.0
        %476 = vmatprep.subr.mxu0 0.0
        %477 = vmatpush1.msra.mxu0 0.0
        %478 = vmatprep.subr.mxu0 0.0
        %479 = vmatpush1.msra.mxu0 0.0
        %480 = vmatprep.subr.mxu0 0.0
        %481 = vmatpush1.msra.mxu0 0.0
        %482 = vmatprep.subr.mxu0 0.0
        %483 = vmatpush1.msra.mxu0 0.0
        %484 = vmatprep.subr.mxu0 0.0
        %485 = vmatpush1.msra.mxu0 0.0
        %486 = vmatprep.subr.mxu0 0.0
        %487 = vmatpush1.msra.mxu0 0.0
        %488 = vmatprep.subr.mxu0 0.0
        %489 = vmatpush1.msra.mxu0 0.0
        %490 = vmatprep.subr.mxu0 0.0
        %491 = vmatpush1.msra.mxu0 0.0
        %492 = vmatprep.subr.mxu0 0.0
        %493 = vmatpush1.msra.mxu0 0.0
        %494 = vmatprep.subr.mxu0 0.0
        %495 = vmatpush1.msra.mxu0 0.0
        %496 = vmatprep.subr.mxu0 0.0
        %497 = vmatpush1.msra.mxu0 0.0
        %498 = vmatprep.subr.mxu0 0.0
        %499 = vmatpush1.msra.mxu0 0.0
        %500 = vmatprep.subr.mxu0 0.0
        %501 = vmatpush1.msra.mxu0 0.0
        %502 = vmatprep.subr.mxu0 0.0
        %503 = vmatpush1.msra.mxu0 0.0
        %504 = vmatprep.subr.mxu0 0.0
        %505 = vmatpush1.msra.mxu0 0.0
        %506 = vmatprep.subr.mxu0 0.0
        %507 = vmatpush1.msra.mxu0 0.0
        %508 = vmatprep.subr.mxu0 0.0
        %509 = vmatpush1.msra.mxu0 0.0
        %510 = vmatprep.subr.mxu0 0.0
        %511 = vmatpush1.msra.mxu0 0.0
        %512 = vmatprep.subr.mxu0 0.0
        %513 = vmatpush1.msra.mxu0 0.0
        %514 = vmatprep.subr.mxu0 0.0
        %515 = vmatpush1.msra.mxu0 0.0
        %516 = vmatprep.subr.mxu0 0.0
        %517 = vmatpush1.msra.mxu0 0.0
        %518 = vmatprep.subr.mxu0 0.0
        %519 = vmatpush1.msra.mxu0 0.0
        %520 = vmatprep.subr.mxu0 0.0
        %521 = vmatpush1.msra.mxu0 0.0
        %522 = vmatprep.subr.mxu0 0.0
        %523 = vmatpush1.msra.mxu0 0.0
        %524 = vmatprep.subr.mxu0 0.0
        %525 = vmatpush1.msra.mxu0 0.0
        %526 = vmatprep.subr.mxu0 0.0
        %527 = vmatpush1.msra.mxu0 0.0
        %528 = vmatprep.subr.mxu0 0.0
        %529 = vmatpush1.msra.mxu0 0.0
        %530 = vmatprep.mubr.f32.mxu0 0.0
        %531 = vmatmul.mubr.f32.gmra.mrb[0].mxu0 %v371
        %v532 = vpop.f32.mrb[0].mxu0
        %v533 = vadd.f32 %v367, %v532
        %v534 = vpop.f32.mrb[0].mxu0
        %535 = vmatprep.mubr.f32.mxu0 0.0
        %536 = vmatmul.mubr.f32.gmra.mrb[0].mxu0 %v374
        %v537 = vpop.f32.mrb[0].mxu0
        %v538 = vadd.f32 %v367, %v537
        %v539 = vpop.f32.mrb[0].mxu0
        %540 = vmatprep.mubr.f32.mxu0 0.0
        %541 = vmatmul.mubr.f32.gmra.mrb[0].mxu0 %v377
        %v542 = vpop.f32.mrb[0].mxu0
        %v543 = vadd.f32 %v367, %v542
        %v544 = vpop.f32.mrb[0].mxu0
        %545 = vmatprep.mubr.f32.mxu0 0.0
        %546 = vmatmul.mubr.f32.gmra.mrb[0].mxu0 %v380
        %v547 = vpop.f32.mrb[0].mxu0
        %v548 = vadd.f32 %v367, %v547
        %v549 = vpop.f32.mrb[0].mxu0
        %550 = vmatprep.mubr.f32.mxu0 0.0
        %551 = vmatmul.mubr.f32.gmra.mrb[0].mxu0 %v383
        %v552 = vpop.f32.mrb[0].mxu0
        %v553 = vadd.f32 %v367, %v552
        %v554 = vpop.f32.mrb[0].mxu0
        %555 = vmatprep.mubr.f32.mxu0 0.0
        %556 = vmatmul.mubr.f32.gmra.mrb[0].mxu0 %v386
        %v557 = vpop.f32.mrb[0].mxu0
        %v558 = vadd.f32 %v367, %v557
        %v559 = vpop.f32.mrb[0].mxu0
        %560 = vmatprep.mubr.f32.mxu0 0.0
        %561 = vmatmul.mubr.f32.gmra.mrb[0].mxu0 %v389
        %v562 = vpop.f32.mrb[0].mxu0
        %v563 = vadd.f32 %v367, %v562
        %v564 = vpop.f32.mrb[0].mxu0
        %565 = vmatprep.mubr.f32.mxu0 0.0
        %566 = vmatmul.mubr.f32.gmra.mrb[0].mxu0 %v392
        %v567 = vpop.f32.mrb[0].mxu0
        %v568 = vadd.f32 %v367, %v567
        %v569 = vpop.f32.mrb[0].mxu0
        %570 = vmatprep.mubr.f32.mxu0 0.0
        %571 = vmatmul.mubr.f32.gmra.mrb[0].mxu0 %v395
        %v572 = vpop.f32.mrb[0].mxu0
        %v573 = vadd.f32 %v367, %v572
        %v574 = vpop.f32.mrb[0].mxu0
        %575 = vmatprep.mubr.f32.mxu0 0.0
        %576 = vmatmul.mubr.f32.gmra.mrb[0].mxu0 %v398
        %v577 = vpop.f32.mrb[0].mxu0
        %v578 = vadd.f32 %v367, %v577
        %v579 = vpop.f32.mrb[0].mxu0
        %580 = vmatprep.mubr.f32.mxu0 0.0
        %581 = vmatmul.mubr.f32.gmra.mrb[0].mxu0 %v401
        %v582 = vpop.f32.mrb[0].mxu0
        %v583 = vadd.f32 %v367, %v582
        %v584 = vpop.f32.mrb[0].mxu0
        %585 = vmatprep.mubr.f32.mxu0 0.0
        %586 = vmatmul.mubr.f32.gmra.mrb[0].mxu0 %v404
        %v587 = vpop.f32.mrb[0].mxu0
        %v588 = vadd.f32 %v367, %v587
        %v589 = vpop.f32.mrb[0].mxu0
        %590 = vmatprep.mubr.f32.mxu0 0.0
        %591 = vmatmul.mubr.f32.gmra.mrb[0].mxu0 %v407
        %v592 = vpop.f32.mrb[0].mxu0
        %v593 = vadd.f32 %v367, %v592
        %v594 = vpop.f32.mrb[0].mxu0
        %595 = vmatprep.mubr.f32.mxu0 0.0
        %596 = vmatmul.mubr.f32.gmra.mrb[0].mxu0 %v410
        %v597 = vpop.f32.mrb[0].mxu0
        %v598 = vadd.f32 %v367, %v597
        %v599 = vpop.f32.mrb[0].mxu0
        %600 = vmatprep.mubr.f32.mxu0 0.0
        %601 = vmatmul.mubr.f32.gmra.mrb[0].mxu0 %v413
        %v602 = vpop.f32.mrb[0].mxu0
        %v603 = vadd.f32 %v367, %v602
        %v604 = vpop.f32.mrb[0].mxu0
        %605 = vmatprep.mubr.f32.mxu0 0.0
        %606 = vmatmul.mubr.f32.gmra.mrb[0].mxu0 %v416
        %v607 = vpop.f32.mrb[0].mxu0
        %v608 = vadd.f32 %v367, %v607
        %v609 = vpop.f32.mrb[0].mxu0
        %610 = vmatprep.mubr.f32.mxu0 0.0
        %611 = vmatmul.mubr.f32.gmra.mrb[0].mxu0 %v419
        %v612 = vpop.f32.mrb[0].mxu0
        %v613 = vadd.f32 %v367, %v612
        %v614 = vpop.f32.mrb[0].mxu0
        %615 = vmatprep.mubr.f32.mxu0 0.0
        %616 = vmatmul.mubr.f32.gmra.mrb[0].mxu0 %v422
        %v617 = vpop.f32.mrb[0].mxu0
        %v618 = vadd.f32 %v367, %v617
        %v619 = vpop.f32.mrb[0].mxu0
        %620 = vmatprep.mubr.f32.mxu0 0.0
        %621 = vmatmul.mubr.f32.gmra.mrb[0].mxu0 %v425
        %v622 = vpop.f32.mrb[0].mxu0
        %v623 = vadd.f32 %v367, %v622
        %v624 = vpop.f32.mrb[0].mxu0
        %625 = vmatprep.mubr.f32.mxu0 0.0
        %626 = vmatmul.mubr.f32.gmra.mrb[0].mxu0 %v428
        %v627 = vpop.f32.mrb[0].mxu0
        %v628 = vadd.f32 %v367, %v627
        %v629 = vpop.f32.mrb[0].mxu0
        %630 = vmatprep.mubr.f32.mxu0 0.0
        %631 = vmatmul.mubr.f32.gmra.mrb[0].mxu0 %v431
        %v632 = vpop.f32.mrb[0].mxu0
        %v633 = vadd.f32 %v367, %v632
        %v634 = vpop.f32.mrb[0].mxu0
        %635 = vmatprep.mubr.f32.mxu0 0.0
        %636 = vmatmul.mubr.f32.gmra.mrb[0].mxu0 %v434
        %v637 = vpop.f32.mrb[0].mxu0
        %v638 = vadd.f32 %v367, %v637
        %v639 = vpop.f32.mrb[0].mxu0
        %640 = vmatprep.mubr.f32.mxu0 0.0
        %641 = vmatmul.mubr.f32.gmra.mrb[0].mxu0 %v437
        %v642 = vpop.f32.mrb[0].mxu0
        %v643 = vadd.f32 %v367, %v642
        %v644 = vpop.f32.mrb[0].mxu0
        %645 = vmatprep.mubr.f32.mxu0 0.0
        %646 = vmatmul.mubr.f32.gmra.mrb[0].mxu0 %v440
        %v647 = vpop.f32.mrb[0].mxu0
        %v648 = vadd.f32 %v367, %v647
        %v649 = vpop.f32.mrb[0].mxu0
        %650 = vmatprep.mubr.f32.mxu0 0.0
        %651 = vmatmul.mubr.f32.gmra.mrb[0].mxu0 %v443
        %v652 = vpop.f32.mrb[0].mxu0
        %v653 = vadd.f32 %v367, %v652
        %v654 = vpop.f32.mrb[0].mxu0
        %655 = vmatprep.mubr.f32.mxu0 0.0
        %656 = vmatmul.mubr.f32.gmra.mrb[0].mxu0 %v446
        %v657 = vpop.f32.mrb[0].mxu0
        %v658 = vadd.f32 %v367, %v657
        %v659 = vpop.f32.mrb[0].mxu0
        %660 = vmatprep.mubr.f32.mxu0 0.0
        %661 = vmatmul.mubr.f32.gmra.mrb[0].mxu0 %v449
        %v662 = vpop.f32.mrb[0].mxu0
        %v663 = vadd.f32 %v367, %v662
        %v664 = vpop.f32.mrb[0].mxu0
        %665 = vmatprep.mubr.f32.mxu0 0.0
        %666 = vmatmul.mubr.f32.gmra.mrb[0].mxu0 %v452
        %v667 = vpop.f32.mrb[0].mxu0
        %v668 = vadd.f32 %v367, %v667
        %v669 = vpop.f32.mrb[0].mxu0
        %670 = vmatprep.mubr.f32.mxu0 0.0
        %671 = vmatmul.mubr.f32.gmra.mrb[0].mxu0 %v455
        %v672 = vpop.f32.mrb[0].mxu0
        %v673 = vadd.f32 %v367, %v672
        %v674 = vpop.f32.mrb[0].mxu0
        %675 = vmatprep.mubr.f32.mxu0 0.0
        %676 = vmatmul.mubr.f32.gmra.mrb[0].mxu0 %v458
        %v677 = vpop.f32.mrb[0].mxu0
        %v678 = vadd.f32 %v367, %v677
        %v679 = vpop.f32.mrb[0].mxu0
        %680 = vmatprep.mubr.f32.mxu0 0.0
        %681 = vmatmul.mubr.f32.gmra.mrb[0].mxu0 %v461
        %v682 = vpop.f32.mrb[0].mxu0
        %v683 = vadd.f32 %v367, %v682
        %v684 = vpop.f32.mrb[0].mxu0
        %685 = vmatprep.mubr.f32.mxu0 0.0
        %686 = vmatmul.mubr.f32.gmra.mrb[0].mxu0 %v464
        %v687 = vpop.f32.mrb[0].mxu0
        %v688 = vadd.f32 %v367, %v687
        %v689 = vpop.f32.mrb[0].mxu0
        %690 = vdwg.mxu0
        %v691 = vand.u32 2147483647, %v533
        %v692 = vand.u32 2147483647, %v538
        %v693 = vand.u32 2147483647, %v543
        %v694 = vand.u32 2147483647, %v548
        %v695 = vand.u32 2147483647, %v553
        %v696 = vand.u32 2147483647, %v558
        %v697 = vand.u32 2147483647, %v563
        %v698 = vand.u32 2147483647, %v568
        %v699 = vand.u32 2147483647, %v573
        %v700 = vand.u32 2147483647, %v578
        %v701 = vand.u32 2147483647, %v583
        %v702 = vand.u32 2147483647, %v588
        %v703 = vand.u32 2147483647, %v593
        %v704 = vand.u32 2147483647, %v598
        %v705 = vand.u32 2147483647, %v603
        %v706 = vand.u32 2147483647, %v608
        %v707 = vand.u32 2147483647, %v613
        %v708 = vand.u32 2147483647, %v618
        %v709 = vand.u32 2147483647, %v623
        %v710 = vand.u32 2147483647, %v628
        %v711 = vand.u32 2147483647, %v633
        %v712 = vand.u32 2147483647, %v638
        %v713 = vand.u32 2147483647, %v643
        %v714 = vand.u32 2147483647, %v648
        %v715 = vand.u32 2147483647, %v653
        %v716 = vand.u32 2147483647, %v658
        %v717 = vand.u32 2147483647, %v663
        %v718 = vand.u32 2147483647, %v668
        %v719 = vand.u32 2147483647, %v673
        %v720 = vand.u32 2147483647, %v678
        %v721 = vand.u32 2147483647, %v683
        %v722 = vand.u32 2147483647, %v688
        %v723 = vsub.f32 0.0, %v691
        %v724 = vsub.f32 0.0, %v692
        %v725 = vsub.f32 0.0, %v693
        %v726 = vsub.f32 0.0, %v694
        %v727 = vsub.f32 0.0, %v695
        %v728 = vsub.f32 0.0, %v696
        %v729 = vsub.f32 0.0, %v697
        %v730 = vsub.f32 0.0, %v698
        %v731 = vsub.f32 0.0, %v699
        %v732 = vsub.f32 0.0, %v700
        %v733 = vsub.f32 0.0, %v701
        %v734 = vsub.f32 0.0, %v702
        %v735 = vsub.f32 0.0, %v703
        %v736 = vsub.f32 0.0, %v704
        %v737 = vsub.f32 0.0, %v705
        %v738 = vsub.f32 0.0, %v706
        %v739 = vsub.f32 0.0, %v707
        %v740 = vsub.f32 0.0, %v708
        %v741 = vsub.f32 0.0, %v709
        %v742 = vsub.f32 0.0, %v710
        %v743 = vsub.f32 0.0, %v711
        %v744 = vsub.f32 0.0, %v712
        %v745 = vsub.f32 0.0, %v713
        %v746 = vsub.f32 0.0, %v714
        %v747 = vsub.f32 0.0, %v715
        %v748 = vsub.f32 0.0, %v716
        %v749 = vsub.f32 0.0, %v717
        %v750 = vsub.f32 0.0, %v718
        %v751 = vsub.f32 0.0, %v719
        %v752 = vsub.f32 0.0, %v720
        %v753 = vsub.f32 0.0, %v721
        %v754 = vsub.f32 0.0, %v722
        %v755 = vmul.f32 %v723, 1.442695
        %v756 = vpow.pop %v755
        %v757 = vmul.f32 %v724, 1.442695
        %v758 = vpow.pop %v757
        %v759 = vmul.f32 %v725, 1.442695
        %v760 = vpow.pop %v759
        %v761 = vmul.f32 %v726, 1.442695
        %v762 = vpow.pop %v761
        %v763 = vmul.f32 %v727, 1.442695
        %v764 = vpow.pop %v763
        %v765 = vmul.f32 %v728, 1.442695
        %v766 = vpow.pop %v765
        %v767 = vmul.f32 %v729, 1.442695
        %v768 = vpow.pop %v767
        %v769 = vmul.f32 %v730, 1.442695
        %v770 = vpow.pop %v769
        %v771 = vmul.f32 %v731, 1.442695
        %v772 = vpow.pop %v771
        %v773 = vmul.f32 %v732, 1.442695
        %v774 = vpow.pop %v773
        %v775 = vmul.f32 %v733, 1.442695
        %v776 = vpow.pop %v775
        %v777 = vmul.f32 %v734, 1.442695
        %v778 = vpow.pop %v777
        %v779 = vmul.f32 %v735, 1.442695
        %v780 = vpow.pop %v779
        %v781 = vmul.f32 %v736, 1.442695
        %v782 = vpow.pop %v781
        %v783 = vmul.f32 %v737, 1.442695
        %v784 = vpow.pop %v783
        %v785 = vmul.f32 %v738, 1.442695
        %v786 = vpow.pop %v785
        %v787 = vmul.f32 %v739, 1.442695
        %v788 = vpow.pop %v787
        %v789 = vmul.f32 %v740, 1.442695
        %v790 = vpow.pop %v789
        %v791 = vmul.f32 %v741, 1.442695
        %v792 = vpow.pop %v791
        %v793 = vmul.f32 %v742, 1.442695
        %v794 = vpow.pop %v793
        %v795 = vmul.f32 %v743, 1.442695
        %v796 = vpow.pop %v795
        %v797 = vmul.f32 %v744, 1.442695
        %v798 = vpow.pop %v797
        %v799 = vmul.f32 %v745, 1.442695
        %v800 = vpow.pop %v799
        %v801 = vmul.f32 %v746, 1.442695
        %v802 = vpow.pop %v801
        %v803 = vmul.f32 %v747, 1.442695
        %v804 = vpow.pop %v803
        %v805 = vmul.f32 %v748, 1.442695
        %v806 = vpow.pop %v805
        %v807 = vmul.f32 %v749, 1.442695
        %v808 = vpow.pop %v807
        %v809 = vmul.f32 %v750, 1.442695
        %v810 = vpow.pop %v809
        %v811 = vmul.f32 %v751, 1.442695
        %v812 = vpow.pop %v811
        %v813 = vmul.f32 %v752, 1.442695
        %v814 = vpow.pop %v813
        %v815 = vmul.f32 %v753, 1.442695
        %v816 = vpow.pop %v815
        %v817 = vmul.f32 %v754, 1.442695
        %v818 = vpow.pop %v817
        %820 = vset.pattern.permute.xlu0 16
        %821 = vperm.xlu0 %820, %v756
        %v822 = vpop.permute.xlu0 %821
        %825 = vset.pattern.permute.xlu0 16
        %826 = vperm.xlu0 %825, %v758
        %v827 = vpop.permute.xlu0 %826
        %830 = vset.pattern.permute.xlu0 16
        %831 = vperm.xlu0 %830, %v760
        %v832 = vpop.permute.xlu0 %831
        %835 = vset.pattern.permute.xlu0 16
        %836 = vperm.xlu0 %835, %v762
        %v837 = vpop.permute.xlu0 %836
        %840 = vset.pattern.permute.xlu0 16
        %841 = vperm.xlu0 %840, %v764
        %v842 = vpop.permute.xlu0 %841
        %845 = vset.pattern.permute.xlu0 16
        %846 = vperm.xlu0 %845, %v766
        %v847 = vpop.permute.xlu0 %846
        %850 = vset.pattern.permute.xlu0 16
        %851 = vperm.xlu0 %850, %v768
        %v852 = vpop.permute.xlu0 %851
        %855 = vset.pattern.permute.xlu0 16
        %856 = vperm.xlu0 %855, %v770
        %v857 = vpop.permute.xlu0 %856
        %860 = vset.pattern.permute.xlu0 16
        %861 = vperm.xlu0 %860, %v772
        %v862 = vpop.permute.xlu0 %861
        %865 = vset.pattern.permute.xlu0 16
        %866 = vperm.xlu0 %865, %v774
        %v867 = vpop.permute.xlu0 %866
        %870 = vset.pattern.permute.xlu0 16
        %871 = vperm.xlu0 %870, %v776
        %v872 = vpop.permute.xlu0 %871
        %875 = vset.pattern.permute.xlu0 16
        %876 = vperm.xlu0 %875, %v778
        %v877 = vpop.permute.xlu0 %876
        %880 = vset.pattern.permute.xlu0 16
        %881 = vperm.xlu0 %880, %v780
        %v882 = vpop.permute.xlu0 %881
        %885 = vset.pattern.permute.xlu0 16
        %886 = vperm.xlu0 %885, %v782
        %v887 = vpop.permute.xlu0 %886
        %890 = vset.pattern.permute.xlu0 16
        %891 = vperm.xlu0 %890, %v784
        %v892 = vpop.permute.xlu0 %891
        %895 = vset.pattern.permute.xlu0 16
        %896 = vperm.xlu0 %895, %v786
        %v897 = vpop.permute.xlu0 %896
        %900 = vset.pattern.permute.xlu0 16
        %901 = vperm.xlu0 %900, %v788
        %v902 = vpop.permute.xlu0 %901
        %905 = vset.pattern.permute.xlu0 16
        %906 = vperm.xlu0 %905, %v790
        %v907 = vpop.permute.xlu0 %906
        %910 = vset.pattern.permute.xlu0 16
        %911 = vperm.xlu0 %910, %v792
        %v912 = vpop.permute.xlu0 %911
        %915 = vset.pattern.permute.xlu0 16
        %916 = vperm.xlu0 %915, %v794
        %v917 = vpop.permute.xlu0 %916
        %920 = vset.pattern.permute.xlu0 16
        %921 = vperm.xlu0 %920, %v796
        %v922 = vpop.permute.xlu0 %921
        %925 = vset.pattern.permute.xlu0 16
        %926 = vperm.xlu0 %925, %v798
        %v927 = vpop.permute.xlu0 %926
        %930 = vset.pattern.permute.xlu0 16
        %931 = vperm.xlu0 %930, %v800
        %v932 = vpop.permute.xlu0 %931
        %935 = vset.pattern.permute.xlu0 16
        %936 = vperm.xlu0 %935, %v802
        %v937 = vpop.permute.xlu0 %936
        %940 = vset.pattern.permute.xlu0 16
        %941 = vperm.xlu0 %940, %v804
        %v942 = vpop.permute.xlu0 %941
        %945 = vset.pattern.permute.xlu0 16
        %946 = vperm.xlu0 %945, %v806
        %v947 = vpop.permute.xlu0 %946
        %950 = vset.pattern.permute.xlu0 16
        %951 = vperm.xlu0 %950, %v808
        %v952 = vpop.permute.xlu0 %951
        %955 = vset.pattern.permute.xlu0 16
        %956 = vperm.xlu0 %955, %v810
        %v957 = vpop.permute.xlu0 %956
        %960 = vset.pattern.permute.xlu0 16
        %961 = vperm.xlu0 %960, %v812
        %v962 = vpop.permute.xlu0 %961
        %965 = vset.pattern.permute.xlu0 16
        %966 = vperm.xlu0 %965, %v814
        %v967 = vpop.permute.xlu0 %966
        %970 = vset.pattern.permute.xlu0 16
        %971 = vperm.xlu0 %970, %v816
        %v972 = vpop.permute.xlu0 %971
        %975 = vset.pattern.permute.xlu0 16
        %976 = vperm.xlu0 %975, %v818
        %v977 = vpop.permute.xlu0 %976
        %v979 = vmul.f32 %v533, %v822
        %v980 = vmul.f32 %v538, %v827
        %v981 = vmul.f32 %v543, %v832
        %v982 = vmul.f32 %v548, %v837
        %v983 = vmul.f32 %v553, %v842
        %v984 = vmul.f32 %v558, %v847
        %v985 = vmul.f32 %v563, %v852
        %v986 = vmul.f32 %v568, %v857
        %v987 = vmul.f32 %v573, %v862
        %v988 = vmul.f32 %v578, %v867
        %v989 = vmul.f32 %v583, %v872
        %v990 = vmul.f32 %v588, %v877
        %v991 = vmul.f32 %v593, %v882
        %v992 = vmul.f32 %v598, %v887
        %v993 = vmul.f32 %v603, %v892
        %v994 = vmul.f32 %v608, %v897
        %v995 = vmul.f32 %v613, %v902
        %v996 = vmul.f32 %v618, %v907
        %v997 = vmul.f32 %v623, %v912
        %v998 = vmul.f32 %v628, %v917
        %v999 = vmul.f32 %v633, %v922
        %v1000 = vmul.f32 %v638, %v927
        %v1001 = vmul.f32 %v643, %v932
        %v1002 = vmul.f32 %v648, %v937
        %v1003 = vmul.f32 %v653, %v942
        %v1004 = vmul.f32 %v658, %v947
        %v1005 = vmul.f32 %v663, %v952
        %v1006 = vmul.f32 %v668, %v957
        %v1007 = vmul.f32 %v673, %v962
        %v1008 = vmul.f32 %v678, %v967
        %v1009 = vmul.f32 %v683, %v972
        %v1010 = vmul.f32 %v688, %v977
        %vm1011 = vcmask 130048
        %v1012 = vsel %vm1011, %v979, -inf
        %v1013 = vrot.slane %v1012, 4
        %v1014 = vmax.f32 %v1012, %v1013
        %v1015 = vrot.slane %v1014, 2
        %v1016 = vmax.f32 %v1014, %v1015
        %v1017 = vrot.slane %v1016, 1
        %v1018 = vmax.f32 %v1016, %v1017
        %v1019 = vsel %vm1011, %v980, -inf
        %v1020 = vrot.slane %v1019, 4
        %v1021 = vmax.f32 %v1019, %v1020
        %v1022 = vrot.slane %v1021, 2
        %v1023 = vmax.f32 %v1021, %v1022
        %v1024 = vrot.slane %v1023, 1
        %v1025 = vmax.f32 %v1023, %v1024
        %v1026 = vsel %vm1011, %v981, -inf
        %v1027 = vrot.slane %v1026, 4
        %v1028 = vmax.f32 %v1026, %v1027
        %v1029 = vrot.slane %v1028, 2
        %v1030 = vmax.f32 %v1028, %v1029
        %v1031 = vrot.slane %v1030, 1
        %v1032 = vmax.f32 %v1030, %v1031
        %v1033 = vsel %vm1011, %v982, -inf
        %v1034 = vrot.slane %v1033, 4
        %v1035 = vmax.f32 %v1033, %v1034
        %v1036 = vrot.slane %v1035, 2
        %v1037 = vmax.f32 %v1035, %v1036
        %v1038 = vrot.slane %v1037, 1
        %v1039 = vmax.f32 %v1037, %v1038
        %v1040 = vsel %vm1011, %v983, -inf
        %v1041 = vrot.slane %v1040, 4
        %v1042 = vmax.f32 %v1040, %v1041
        %v1043 = vrot.slane %v1042, 2
        %v1044 = vmax.f32 %v1042, %v1043
        %v1045 = vrot.slane %v1044, 1
        %v1046 = vmax.f32 %v1044, %v1045
        %v1047 = vsel %vm1011, %v984, -inf
        %v1048 = vrot.slane %v1047, 4
        %v1049 = vmax.f32 %v1047, %v1048
        %v1050 = vrot.slane %v1049, 2
        %v1051 = vmax.f32 %v1049, %v1050
        %v1052 = vrot.slane %v1051, 1
        %v1053 = vmax.f32 %v1051, %v1052
        %v1054 = vsel %vm1011, %v985, -inf
        %v1055 = vrot.slane %v1054, 4
        %v1056 = vmax.f32 %v1054, %v1055
        %v1057 = vrot.slane %v1056, 2
        %v1058 = vmax.f32 %v1056, %v1057
        %v1059 = vrot.slane %v1058, 1
        %v1060 = vmax.f32 %v1058, %v1059
        %v1061 = vsel %vm1011, %v986, -inf
        %v1062 = vrot.slane %v1061, 4
        %v1063 = vmax.f32 %v1061, %v1062
        %v1064 = vrot.slane %v1063, 2
        %v1065 = vmax.f32 %v1063, %v1064
        %v1066 = vrot.slane %v1065, 1
        %v1067 = vmax.f32 %v1065, %v1066
        %v1068 = vsel %vm1011, %v987, -inf
        %v1069 = vrot.slane %v1068, 4
        %v1070 = vmax.f32 %v1068, %v1069
        %v1071 = vrot.slane %v1070, 2
        %v1072 = vmax.f32 %v1070, %v1071
        %v1073 = vrot.slane %v1072, 1
        %v1074 = vmax.f32 %v1072, %v1073
        %v1075 = vsel %vm1011, %v988, -inf
        %v1076 = vrot.slane %v1075, 4
        %v1077 = vmax.f32 %v1075, %v1076
        %v1078 = vrot.slane %v1077, 2
        %v1079 = vmax.f32 %v1077, %v1078
        %v1080 = vrot.slane %v1079, 1
        %v1081 = vmax.f32 %v1079, %v1080
        %v1082 = vsel %vm1011, %v989, -inf
        %v1083 = vrot.slane %v1082, 4
        %v1084 = vmax.f32 %v1082, %v1083
        %v1085 = vrot.slane %v1084, 2
        %v1086 = vmax.f32 %v1084, %v1085
        %v1087 = vrot.slane %v1086, 1
        %v1088 = vmax.f32 %v1086, %v1087
        %v1089 = vsel %vm1011, %v990, -inf
        %v1090 = vrot.slane %v1089, 4
        %v1091 = vmax.f32 %v1089, %v1090
        %v1092 = vrot.slane %v1091, 2
        %v1093 = vmax.f32 %v1091, %v1092
        %v1094 = vrot.slane %v1093, 1
        %v1095 = vmax.f32 %v1093, %v1094
        %v1096 = vsel %vm1011, %v991, -inf
        %v1097 = vrot.slane %v1096, 4
        %v1098 = vmax.f32 %v1096, %v1097
        %v1099 = vrot.slane %v1098, 2
        %v1100 = vmax.f32 %v1098, %v1099
        %v1101 = vrot.slane %v1100, 1
        %v1102 = vmax.f32 %v1100, %v1101
        %v1103 = vsel %vm1011, %v992, -inf
        %v1104 = vrot.slane %v1103, 4
        %v1105 = vmax.f32 %v1103, %v1104
        %v1106 = vrot.slane %v1105, 2
        %v1107 = vmax.f32 %v1105, %v1106
        %v1108 = vrot.slane %v1107, 1
        %v1109 = vmax.f32 %v1107, %v1108
        %v1110 = vsel %vm1011, %v993, -inf
        %v1111 = vrot.slane %v1110, 4
        %v1112 = vmax.f32 %v1110, %v1111
        %v1113 = vrot.slane %v1112, 2
        %v1114 = vmax.f32 %v1112, %v1113
        %v1115 = vrot.slane %v1114, 1
        %v1116 = vmax.f32 %v1114, %v1115
        %v1117 = vsel %vm1011, %v994, -inf
        %v1118 = vrot.slane %v1117, 4
        %v1119 = vmax.f32 %v1117, %v1118
        %v1120 = vrot.slane %v1119, 2
        %v1121 = vmax.f32 %v1119, %v1120
        %v1122 = vrot.slane %v1121, 1
        %v1123 = vmax.f32 %v1121, %v1122
        %v1124 = vsel %vm1011, %v995, -inf
        %v1125 = vrot.slane %v1124, 4
        %v1126 = vmax.f32 %v1124, %v1125
        %v1127 = vrot.slane %v1126, 2
        %v1128 = vmax.f32 %v1126, %v1127
        %v1129 = vrot.slane %v1128, 1
        %v1130 = vmax.f32 %v1128, %v1129
        %v1131 = vsel %vm1011, %v996, -inf
        %v1132 = vrot.slane %v1131, 4
        %v1133 = vmax.f32 %v1131, %v1132
        %v1134 = vrot.slane %v1133, 2
        %v1135 = vmax.f32 %v1133, %v1134
        %v1136 = vrot.slane %v1135, 1
        %v1137 = vmax.f32 %v1135, %v1136
        %v1138 = vsel %vm1011, %v997, -inf
        %v1139 = vrot.slane %v1138, 4
        %v1140 = vmax.f32 %v1138, %v1139
        %v1141 = vrot.slane %v1140, 2
        %v1142 = vmax.f32 %v1140, %v1141
        %v1143 = vrot.slane %v1142, 1
        %v1144 = vmax.f32 %v1142, %v1143
        %v1145 = vsel %vm1011, %v998, -inf
        %v1146 = vrot.slane %v1145, 4
        %v1147 = vmax.f32 %v1145, %v1146
        %v1148 = vrot.slane %v1147, 2
        %v1149 = vmax.f32 %v1147, %v1148
        %v1150 = vrot.slane %v1149, 1
        %v1151 = vmax.f32 %v1149, %v1150
        %v1152 = vsel %vm1011, %v999, -inf
        %v1153 = vrot.slane %v1152, 4
        %v1154 = vmax.f32 %v1152, %v1153
        %v1155 = vrot.slane %v1154, 2
        %v1156 = vmax.f32 %v1154, %v1155
        %v1157 = vrot.slane %v1156, 1
        %v1158 = vmax.f32 %v1156, %v1157
        %v1159 = vsel %vm1011, %v1000, -inf
        %v1160 = vrot.slane %v1159, 4
        %v1161 = vmax.f32 %v1159, %v1160
        %v1162 = vrot.slane %v1161, 2
        %v1163 = vmax.f32 %v1161, %v1162
        %v1164 = vrot.slane %v1163, 1
        %v1165 = vmax.f32 %v1163, %v1164
        %v1166 = vsel %vm1011, %v1001, -inf
        %v1167 = vrot.slane %v1166, 4
        %v1168 = vmax.f32 %v1166, %v1167
        %v1169 = vrot.slane %v1168, 2
        %v1170 = vmax.f32 %v1168, %v1169
        %v1171 = vrot.slane %v1170, 1
        %v1172 = vmax.f32 %v1170, %v1171
        %v1173 = vsel %vm1011, %v1002, -inf
        %v1174 = vrot.slane %v1173, 4
        %v1175 = vmax.f32 %v1173, %v1174
        %v1176 = vrot.slane %v1175, 2
        %v1177 = vmax.f32 %v1175, %v1176
        %v1178 = vrot.slane %v1177, 1
        %v1179 = vmax.f32 %v1177, %v1178
        %v1180 = vsel %vm1011, %v1003, -inf
        %v1181 = vrot.slane %v1180, 4
        %v1182 = vmax.f32 %v1180, %v1181
        %v1183 = vrot.slane %v1182, 2
        %v1184 = vmax.f32 %v1182, %v1183
        %v1185 = vrot.slane %v1184, 1
        %v1186 = vmax.f32 %v1184, %v1185
        %v1187 = vsel %vm1011, %v1004, -inf
        %v1188 = vrot.slane %v1187, 4
        %v1189 = vmax.f32 %v1187, %v1188
        %v1190 = vrot.slane %v1189, 2
        %v1191 = vmax.f32 %v1189, %v1190
        %v1192 = vrot.slane %v1191, 1
        %v1193 = vmax.f32 %v1191, %v1192
        %v1194 = vsel %vm1011, %v1005, -inf
        %v1195 = vrot.slane %v1194, 4
        %v1196 = vmax.f32 %v1194, %v1195
        %v1197 = vrot.slane %v1196, 2
        %v1198 = vmax.f32 %v1196, %v1197
        %v1199 = vrot.slane %v1198, 1
        %v1200 = vmax.f32 %v1198, %v1199
        %v1201 = vsel %vm1011, %v1006, -inf
        %v1202 = vrot.slane %v1201, 4
        %v1203 = vmax.f32 %v1201, %v1202
        %v1204 = vrot.slane %v1203, 2
        %v1205 = vmax.f32 %v1203, %v1204
        %v1206 = vrot.slane %v1205, 1
        %v1207 = vmax.f32 %v1205, %v1206
        %v1208 = vsel %vm1011, %v1007, -inf
        %v1209 = vrot.slane %v1208, 4
        %v1210 = vmax.f32 %v1208, %v1209
        %v1211 = vrot.slane %v1210, 2
        %v1212 = vmax.f32 %v1210, %v1211
        %v1213 = vrot.slane %v1212, 1
        %v1214 = vmax.f32 %v1212, %v1213
        %v1215 = vsel %vm1011, %v1008, -inf
        %v1216 = vrot.slane %v1215, 4
        %v1217 = vmax.f32 %v1215, %v1216
        %v1218 = vrot.slane %v1217, 2
        %v1219 = vmax.f32 %v1217, %v1218
        %v1220 = vrot.slane %v1219, 1
        %v1221 = vmax.f32 %v1219, %v1220
        %v1222 = vsel %vm1011, %v1009, -inf
        %v1223 = vrot.slane %v1222, 4
        %v1224 = vmax.f32 %v1222, %v1223
        %v1225 = vrot.slane %v1224, 2
        %v1226 = vmax.f32 %v1224, %v1225
        %v1227 = vrot.slane %v1226, 1
        %v1228 = vmax.f32 %v1226, %v1227
        %v1229 = vsel %vm1011, %v1010, -inf
        %v1230 = vrot.slane %v1229, 4
        %v1231 = vmax.f32 %v1229, %v1230
        %v1232 = vrot.slane %v1231, 2
        %v1233 = vmax.f32 %v1231, %v1232
        %v1234 = vrot.slane %v1233, 1
        %v1235 = vmax.f32 %v1233, %v1234
        %v1236 = vsel %vm1011, %v979, 0.0
        %v1237 = vrot.slane %v1236, 4
        %v1238 = vadd.f32 %v1236, %v1237
        %v1239 = vrot.slane %v1238, 2
        %v1240 = vadd.f32 %v1238, %v1239
        %v1241 = vrot.slane %v1240, 1
        %v1242 = vadd.f32 %v1240, %v1241
        %v1243 = vsel %vm1011, %v980, 0.0
        %v1244 = vrot.slane %v1243, 4
        %v1245 = vadd.f32 %v1243, %v1244
        %v1246 = vrot.slane %v1245, 2
        %v1247 = vadd.f32 %v1245, %v1246
        %v1248 = vrot.slane %v1247, 1
        %v1249 = vadd.f32 %v1247, %v1248
        %v1250 = vsel %vm1011, %v981, 0.0
        %v1251 = vrot.slane %v1250, 4
        %v1252 = vadd.f32 %v1250, %v1251
        %v1253 = vrot.slane %v1252, 2
        %v1254 = vadd.f32 %v1252, %v1253
        %v1255 = vrot.slane %v1254, 1
        %v1256 = vadd.f32 %v1254, %v1255
        %v1257 = vsel %vm1011, %v982, 0.0
        %v1258 = vrot.slane %v1257, 4
        %v1259 = vadd.f32 %v1257, %v1258
        %v1260 = vrot.slane %v1259, 2
        %v1261 = vadd.f32 %v1259, %v1260
        %v1262 = vrot.slane %v1261, 1
        %v1263 = vadd.f32 %v1261, %v1262
        %v1264 = vsel %vm1011, %v983, 0.0
        %v1265 = vrot.slane %v1264, 4
        %v1266 = vadd.f32 %v1264, %v1265
        %v1267 = vrot.slane %v1266, 2
        %v1268 = vadd.f32 %v1266, %v1267
        %v1269 = vrot.slane %v1268, 1
        %v1270 = vadd.f32 %v1268, %v1269
        %v1271 = vsel %vm1011, %v984, 0.0
        %v1272 = vrot.slane %v1271, 4
        %v1273 = vadd.f32 %v1271, %v1272
        %v1274 = vrot.slane %v1273, 2
        %v1275 = vadd.f32 %v1273, %v1274
        %v1276 = vrot.slane %v1275, 1
        %v1277 = vadd.f32 %v1275, %v1276
        %v1278 = vsel %vm1011, %v985, 0.0
        %v1279 = vrot.slane %v1278, 4
        %v1280 = vadd.f32 %v1278, %v1279
        %v1281 = vrot.slane %v1280, 2
        %v1282 = vadd.f32 %v1280, %v1281
        %v1283 = vrot.slane %v1282, 1
        %v1284 = vadd.f32 %v1282, %v1283
        %v1285 = vsel %vm1011, %v986, 0.0
        %v1286 = vrot.slane %v1285, 4
        %v1287 = vadd.f32 %v1285, %v1286
        %v1288 = vrot.slane %v1287, 2
        %v1289 = vadd.f32 %v1287, %v1288
        %v1290 = vrot.slane %v1289, 1
        %v1291 = vadd.f32 %v1289, %v1290
        %v1292 = vsel %vm1011, %v987, 0.0
        %v1293 = vrot.slane %v1292, 4
        %v1294 = vadd.f32 %v1292, %v1293
        %v1295 = vrot.slane %v1294, 2
        %v1296 = vadd.f32 %v1294, %v1295
        %v1297 = vrot.slane %v1296, 1
        %v1298 = vadd.f32 %v1296, %v1297
        %v1299 = vsel %vm1011, %v988, 0.0
        %v1300 = vrot.slane %v1299, 4
        %v1301 = vadd.f32 %v1299, %v1300
        %v1302 = vrot.slane %v1301, 2
        %v1303 = vadd.f32 %v1301, %v1302
        %v1304 = vrot.slane %v1303, 1
        %v1305 = vadd.f32 %v1303, %v1304
        %v1306 = vsel %vm1011, %v989, 0.0
        %v1307 = vrot.slane %v1306, 4
        %v1308 = vadd.f32 %v1306, %v1307
        %v1309 = vrot.slane %v1308, 2
        %v1310 = vadd.f32 %v1308, %v1309
        %v1311 = vrot.slane %v1310, 1
        %v1312 = vadd.f32 %v1310, %v1311
        %v1313 = vsel %vm1011, %v990, 0.0
        %v1314 = vrot.slane %v1313, 4
        %v1315 = vadd.f32 %v1313, %v1314
        %v1316 = vrot.slane %v1315, 2
        %v1317 = vadd.f32 %v1315, %v1316
        %v1318 = vrot.slane %v1317, 1
        %v1319 = vadd.f32 %v1317, %v1318
        %v1320 = vsel %vm1011, %v991, 0.0
        %v1321 = vrot.slane %v1320, 4
        %v1322 = vadd.f32 %v1320, %v1321
        %v1323 = vrot.slane %v1322, 2
        %v1324 = vadd.f32 %v1322, %v1323
        %v1325 = vrot.slane %v1324, 1
        %v1326 = vadd.f32 %v1324, %v1325
        %v1327 = vsel %vm1011, %v992, 0.0
        %v1328 = vrot.slane %v1327, 4
        %v1329 = vadd.f32 %v1327, %v1328
        %v1330 = vrot.slane %v1329, 2
        %v1331 = vadd.f32 %v1329, %v1330
        %v1332 = vrot.slane %v1331, 1
        %v1333 = vadd.f32 %v1331, %v1332
        %v1334 = vsel %vm1011, %v993, 0.0
        %v1335 = vrot.slane %v1334, 4
        %v1336 = vadd.f32 %v1334, %v1335
        %v1337 = vrot.slane %v1336, 2
        %v1338 = vadd.f32 %v1336, %v1337
        %v1339 = vrot.slane %v1338, 1
        %v1340 = vadd.f32 %v1338, %v1339
        %v1341 = vsel %vm1011, %v994, 0.0
        %v1342 = vrot.slane %v1341, 4
        %v1343 = vadd.f32 %v1341, %v1342
        %v1344 = vrot.slane %v1343, 2
        %v1345 = vadd.f32 %v1343, %v1344
        %v1346 = vrot.slane %v1345, 1
        %v1347 = vadd.f32 %v1345, %v1346
        %v1348 = vsel %vm1011, %v995, 0.0
        %v1349 = vrot.slane %v1348, 4
        %v1350 = vadd.f32 %v1348, %v1349
        %v1351 = vrot.slane %v1350, 2
        %v1352 = vadd.f32 %v1350, %v1351
        %v1353 = vrot.slane %v1352, 1
        %v1354 = vadd.f32 %v1352, %v1353
        %v1355 = vsel %vm1011, %v996, 0.0
        %v1356 = vrot.slane %v1355, 4
        %v1357 = vadd.f32 %v1355, %v1356
        %v1358 = vrot.slane %v1357, 2
        %v1359 = vadd.f32 %v1357, %v1358
        %v1360 = vrot.slane %v1359, 1
        %v1361 = vadd.f32 %v1359, %v1360
        %v1362 = vsel %vm1011, %v997, 0.0
        %v1363 = vrot.slane %v1362, 4
        %v1364 = vadd.f32 %v1362, %v1363
        %v1365 = vrot.slane %v1364, 2
        %v1366 = vadd.f32 %v1364, %v1365
        %v1367 = vrot.slane %v1366, 1
        %v1368 = vadd.f32 %v1366, %v1367
        %v1369 = vsel %vm1011, %v998, 0.0
        %v1370 = vrot.slane %v1369, 4
        %v1371 = vadd.f32 %v1369, %v1370
        %v1372 = vrot.slane %v1371, 2
        %v1373 = vadd.f32 %v1371, %v1372
        %v1374 = vrot.slane %v1373, 1
        %v1375 = vadd.f32 %v1373, %v1374
        %v1376 = vsel %vm1011, %v999, 0.0
        %v1377 = vrot.slane %v1376, 4
        %v1378 = vadd.f32 %v1376, %v1377
        %v1379 = vrot.slane %v1378, 2
        %v1380 = vadd.f32 %v1378, %v1379
        %v1381 = vrot.slane %v1380, 1
        %v1382 = vadd.f32 %v1380, %v1381
        %v1383 = vsel %vm1011, %v1000, 0.0
        %v1384 = vrot.slane %v1383, 4
        %v1385 = vadd.f32 %v1383, %v1384
        %v1386 = vrot.slane %v1385, 2
        %v1387 = vadd.f32 %v1385, %v1386
        %v1388 = vrot.slane %v1387, 1
        %v1389 = vadd.f32 %v1387, %v1388
        %v1390 = vsel %vm1011, %v1001, 0.0
        %v1391 = vrot.slane %v1390, 4
        %v1392 = vadd.f32 %v1390, %v1391
        %v1393 = vrot.slane %v1392, 2
        %v1394 = vadd.f32 %v1392, %v1393
        %v1395 = vrot.slane %v1394, 1
        %v1396 = vadd.f32 %v1394, %v1395
        %v1397 = vsel %vm1011, %v1002, 0.0
        %v1398 = vrot.slane %v1397, 4
        %v1399 = vadd.f32 %v1397, %v1398
        %v1400 = vrot.slane %v1399, 2
        %v1401 = vadd.f32 %v1399, %v1400
        %v1402 = vrot.slane %v1401, 1
        %v1403 = vadd.f32 %v1401, %v1402
        %v1404 = vsel %vm1011, %v1003, 0.0
        %v1405 = vrot.slane %v1404, 4
        %v1406 = vadd.f32 %v1404, %v1405
        %v1407 = vrot.slane %v1406, 2
        %v1408 = vadd.f32 %v1406, %v1407
        %v1409 = vrot.slane %v1408, 1
        %v1410 = vadd.f32 %v1408, %v1409
        %v1411 = vsel %vm1011, %v1004, 0.0
        %v1412 = vrot.slane %v1411, 4
        %v1413 = vadd.f32 %v1411, %v1412
        %v1414 = vrot.slane %v1413, 2
        %v1415 = vadd.f32 %v1413, %v1414
        %v1416 = vrot.slane %v1415, 1
        %v1417 = vadd.f32 %v1415, %v1416
        %v1418 = vsel %vm1011, %v1005, 0.0
        %v1419 = vrot.slane %v1418, 4
        %v1420 = vadd.f32 %v1418, %v1419
        %v1421 = vrot.slane %v1420, 2
        %v1422 = vadd.f32 %v1420, %v1421
        %v1423 = vrot.slane %v1422, 1
        %v1424 = vadd.f32 %v1422, %v1423
        %v1425 = vsel %vm1011, %v1006, 0.0
        %v1426 = vrot.slane %v1425, 4
        %v1427 = vadd.f32 %v1425, %v1426
        %v1428 = vrot.slane %v1427, 2
        %v1429 = vadd.f32 %v1427, %v1428
        %v1430 = vrot.slane %v1429, 1
        %v1431 = vadd.f32 %v1429, %v1430
        %v1432 = vsel %vm1011, %v1007, 0.0
        %v1433 = vrot.slane %v1432, 4
        %v1434 = vadd.f32 %v1432, %v1433
        %v1435 = vrot.slane %v1434, 2
        %v1436 = vadd.f32 %v1434, %v1435
        %v1437 = vrot.slane %v1436, 1
        %v1438 = vadd.f32 %v1436, %v1437
        %v1439 = vsel %vm1011, %v1008, 0.0
        %v1440 = vrot.slane %v1439, 4
        %v1441 = vadd.f32 %v1439, %v1440
        %v1442 = vrot.slane %v1441, 2
        %v1443 = vadd.f32 %v1441, %v1442
        %v1444 = vrot.slane %v1443, 1
        %v1445 = vadd.f32 %v1443, %v1444
        %v1446 = vsel %vm1011, %v1009, 0.0
        %v1447 = vrot.slane %v1446, 4
        %v1448 = vadd.f32 %v1446, %v1447
        %v1449 = vrot.slane %v1448, 2
        %v1450 = vadd.f32 %v1448, %v1449
        %v1451 = vrot.slane %v1450, 1
        %v1452 = vadd.f32 %v1450, %v1451
        %v1453 = vsel %vm1011, %v1010, 0.0
        %v1454 = vrot.slane %v1453, 4
        %v1455 = vadd.f32 %v1453, %v1454
        %v1456 = vrot.slane %v1455, 2
        %v1457 = vadd.f32 %v1455, %v1456
        %v1458 = vrot.slane %v1457, 1
        %v1459 = vadd.f32 %v1457, %v1458
        %1460 = vset.pattern.permute.xlu0 17
        %1461 = vperm.xlu0 %1460, %v756
        %v1462 = vpop.permute.xlu0 %1461
        %1464 = vset.pattern.permute.xlu0 17
        %1465 = vperm.xlu0 %1464, %v758
        %v1466 = vpop.permute.xlu0 %1465
        %1468 = vset.pattern.permute.xlu0 17
        %1469 = vperm.xlu0 %1468, %v760
        %v1470 = vpop.permute.xlu0 %1469
        %1472 = vset.pattern.permute.xlu0 17
        %1473 = vperm.xlu0 %1472, %v762
        %v1474 = vpop.permute.xlu0 %1473
        %1476 = vset.pattern.permute.xlu0 17
        %1477 = vperm.xlu0 %1476, %v764
        %v1478 = vpop.permute.xlu0 %1477
        %1480 = vset.pattern.permute.xlu0 17
        %1481 = vperm.xlu0 %1480, %v766
        %v1482 = vpop.permute.xlu0 %1481
        %1484 = vset.pattern.permute.xlu0 17
        %1485 = vperm.xlu0 %1484, %v768
        %v1486 = vpop.permute.xlu0 %1485
        %1488 = vset.pattern.permute.xlu0 17
        %1489 = vperm.xlu0 %1488, %v770
        %v1490 = vpop.permute.xlu0 %1489
        %1492 = vset.pattern.permute.xlu0 17
        %1493 = vperm.xlu0 %1492, %v772
        %v1494 = vpop.permute.xlu0 %1493
        %1496 = vset.pattern.permute.xlu0 17
        %1497 = vperm.xlu0 %1496, %v774
        %v1498 = vpop.permute.xlu0 %1497
        %1500 = vset.pattern.permute.xlu0 17
        %1501 = vperm.xlu0 %1500, %v776
        %v1502 = vpop.permute.xlu0 %1501
        %1504 = vset.pattern.permute.xlu0 17
        %1505 = vperm.xlu0 %1504, %v778
        %v1506 = vpop.permute.xlu0 %1505
        %1508 = vset.pattern.permute.xlu0 17
        %1509 = vperm.xlu0 %1508, %v780
        %v1510 = vpop.permute.xlu0 %1509
        %1512 = vset.pattern.permute.xlu0 17
        %1513 = vperm.xlu0 %1512, %v782
        %v1514 = vpop.permute.xlu0 %1513
        %1516 = vset.pattern.permute.xlu0 17
        %1517 = vperm.xlu0 %1516, %v784
        %v1518 = vpop.permute.xlu0 %1517
        %1520 = vset.pattern.permute.xlu0 17
        %1521 = vperm.xlu0 %1520, %v786
        %v1522 = vpop.permute.xlu0 %1521
        %1524 = vset.pattern.permute.xlu0 17
        %1525 = vperm.xlu0 %1524, %v788
        %v1526 = vpop.permute.xlu0 %1525
        %1528 = vset.pattern.permute.xlu0 17
        %1529 = vperm.xlu0 %1528, %v790
        %v1530 = vpop.permute.xlu0 %1529
        %1532 = vset.pattern.permute.xlu0 17
        %1533 = vperm.xlu0 %1532, %v792
        %v1534 = vpop.permute.xlu0 %1533
        %1536 = vset.pattern.permute.xlu0 17
        %1537 = vperm.xlu0 %1536, %v794
        %v1538 = vpop.permute.xlu0 %1537
        %1540 = vset.pattern.permute.xlu0 17
        %1541 = vperm.xlu0 %1540, %v796
        %v1542 = vpop.permute.xlu0 %1541
        %1544 = vset.pattern.permute.xlu0 17
        %1545 = vperm.xlu0 %1544, %v798
        %v1546 = vpop.permute.xlu0 %1545
        %1548 = vset.pattern.permute.xlu0 17
        %1549 = vperm.xlu0 %1548, %v800
        %v1550 = vpop.permute.xlu0 %1549
        %1552 = vset.pattern.permute.xlu0 17
        %1553 = vperm.xlu0 %1552, %v802
        %v1554 = vpop.permute.xlu0 %1553
        %1556 = vset.pattern.permute.xlu0 17
        %1557 = vperm.xlu0 %1556, %v804
        %v1558 = vpop.permute.xlu0 %1557
        %1560 = vset.pattern.permute.xlu0 17
        %1561 = vperm.xlu0 %1560, %v806
        %v1562 = vpop.permute.xlu0 %1561
        %1564 = vset.pattern.permute.xlu0 17
        %1565 = vperm.xlu0 %1564, %v808
        %v1566 = vpop.permute.xlu0 %1565
        %1568 = vset.pattern.permute.xlu0 17
        %1569 = vperm.xlu0 %1568, %v810
        %v1570 = vpop.permute.xlu0 %1569
        %1572 = vset.pattern.permute.xlu0 17
        %1573 = vperm.xlu0 %1572, %v812
        %v1574 = vpop.permute.xlu0 %1573
        %1576 = vset.pattern.permute.xlu0 17
        %1577 = vperm.xlu0 %1576, %v814
        %v1578 = vpop.permute.xlu0 %1577
        %1580 = vset.pattern.permute.xlu0 17
        %1581 = vperm.xlu0 %1580, %v816
        %v1582 = vpop.permute.xlu0 %1581
        %1584 = vset.pattern.permute.xlu0 17
        %1585 = vperm.xlu0 %1584, %v818
        %v1586 = vpop.permute.xlu0 %1585
        %v1588 = vmul.f32 %v533, %v1462
        %v1589 = vmul.f32 %v538, %v1466
        %v1590 = vmul.f32 %v543, %v1470
        %v1591 = vmul.f32 %v548, %v1474
        %v1592 = vmul.f32 %v553, %v1478
        %v1593 = vmul.f32 %v558, %v1482
        %v1594 = vmul.f32 %v563, %v1486
        %v1595 = vmul.f32 %v568, %v1490
        %v1596 = vmul.f32 %v573, %v1494
        %v1597 = vmul.f32 %v578, %v1498
        %v1598 = vmul.f32 %v583, %v1502
        %v1599 = vmul.f32 %v588, %v1506
        %v1600 = vmul.f32 %v593, %v1510
        %v1601 = vmul.f32 %v598, %v1514
        %v1602 = vmul.f32 %v603, %v1518
        %v1603 = vmul.f32 %v608, %v1522
        %v1604 = vmul.f32 %v613, %v1526
        %v1605 = vmul.f32 %v618, %v1530
        %v1606 = vmul.f32 %v623, %v1534
        %v1607 = vmul.f32 %v628, %v1538
        %v1608 = vmul.f32 %v633, %v1542
        %v1609 = vmul.f32 %v638, %v1546
        %v1610 = vmul.f32 %v643, %v1550
        %v1611 = vmul.f32 %v648, %v1554
        %v1612 = vmul.f32 %v653, %v1558
        %v1613 = vmul.f32 %v658, %v1562
        %v1614 = vmul.f32 %v663, %v1566
        %v1615 = vmul.f32 %v668, %v1570
        %v1616 = vmul.f32 %v673, %v1574
        %v1617 = vmul.f32 %v678, %v1578
        %v1618 = vmul.f32 %v683, %v1582
        %v1619 = vmul.f32 %v688, %v1586
        %v1620 = vsel %vm1011, %v1588, -inf
        %v1621 = vrot.slane %v1620, 4
        %v1622 = vmax.f32 %v1620, %v1621
        %v1623 = vrot.slane %v1622, 2
        %v1624 = vmax.f32 %v1622, %v1623
        %v1625 = vrot.slane %v1624, 1
        %v1626 = vmax.f32 %v1624, %v1625
        %v1627 = vsel %vm1011, %v1589, -inf
        %v1628 = vrot.slane %v1627, 4
        %v1629 = vmax.f32 %v1627, %v1628
        %v1630 = vrot.slane %v1629, 2
        %v1631 = vmax.f32 %v1629, %v1630
        %v1632 = vrot.slane %v1631, 1
        %v1633 = vmax.f32 %v1631, %v1632
        %v1634 = vsel %vm1011, %v1590, -inf
        %v1635 = vrot.slane %v1634, 4
        %v1636 = vmax.f32 %v1634, %v1635
        %v1637 = vrot.slane %v1636, 2
        %v1638 = vmax.f32 %v1636, %v1637
        %v1639 = vrot.slane %v1638, 1
        %v1640 = vmax.f32 %v1638, %v1639
        %v1641 = vsel %vm1011, %v1591, -inf
        %v1642 = vrot.slane %v1641, 4
        %v1643 = vmax.f32 %v1641, %v1642
        %v1644 = vrot.slane %v1643, 2
        %v1645 = vmax.f32 %v1643, %v1644
        %v1646 = vrot.slane %v1645, 1
        %v1647 = vmax.f32 %v1645, %v1646
        %v1648 = vsel %vm1011, %v1592, -inf
        %v1649 = vrot.slane %v1648, 4
        %v1650 = vmax.f32 %v1648, %v1649
        %v1651 = vrot.slane %v1650, 2
        %v1652 = vmax.f32 %v1650, %v1651
        %v1653 = vrot.slane %v1652, 1
        %v1654 = vmax.f32 %v1652, %v1653
        %v1655 = vsel %vm1011, %v1593, -inf
        %v1656 = vrot.slane %v1655, 4
        %v1657 = vmax.f32 %v1655, %v1656
        %v1658 = vrot.slane %v1657, 2
        %v1659 = vmax.f32 %v1657, %v1658
        %v1660 = vrot.slane %v1659, 1
        %v1661 = vmax.f32 %v1659, %v1660
        %v1662 = vsel %vm1011, %v1594, -inf
        %v1663 = vrot.slane %v1662, 4
        %v1664 = vmax.f32 %v1662, %v1663
        %v1665 = vrot.slane %v1664, 2
        %v1666 = vmax.f32 %v1664, %v1665
        %v1667 = vrot.slane %v1666, 1
        %v1668 = vmax.f32 %v1666, %v1667
        %v1669 = vsel %vm1011, %v1595, -inf
        %v1670 = vrot.slane %v1669, 4
        %v1671 = vmax.f32 %v1669, %v1670
        %v1672 = vrot.slane %v1671, 2
        %v1673 = vmax.f32 %v1671, %v1672
        %v1674 = vrot.slane %v1673, 1
        %v1675 = vmax.f32 %v1673, %v1674
        %v1676 = vsel %vm1011, %v1596, -inf
        %v1677 = vrot.slane %v1676, 4
        %v1678 = vmax.f32 %v1676, %v1677
        %v1679 = vrot.slane %v1678, 2
        %v1680 = vmax.f32 %v1678, %v1679
        %v1681 = vrot.slane %v1680, 1
        %v1682 = vmax.f32 %v1680, %v1681
        %v1683 = vsel %vm1011, %v1597, -inf
        %v1684 = vrot.slane %v1683, 4
        %v1685 = vmax.f32 %v1683, %v1684
        %v1686 = vrot.slane %v1685, 2
        %v1687 = vmax.f32 %v1685, %v1686
        %v1688 = vrot.slane %v1687, 1
        %v1689 = vmax.f32 %v1687, %v1688
        %v1690 = vsel %vm1011, %v1598, -inf
        %v1691 = vrot.slane %v1690, 4
        %v1692 = vmax.f32 %v1690, %v1691
        %v1693 = vrot.slane %v1692, 2
        %v1694 = vmax.f32 %v1692, %v1693
        %v1695 = vrot.slane %v1694, 1
        %v1696 = vmax.f32 %v1694, %v1695
        %v1697 = vsel %vm1011, %v1599, -inf
        %v1698 = vrot.slane %v1697, 4
        %v1699 = vmax.f32 %v1697, %v1698
        %v1700 = vrot.slane %v1699, 2
        %v1701 = vmax.f32 %v1699, %v1700
        %v1702 = vrot.slane %v1701, 1
        %v1703 = vmax.f32 %v1701, %v1702
        %v1704 = vsel %vm1011, %v1600, -inf
        %v1705 = vrot.slane %v1704, 4
        %v1706 = vmax.f32 %v1704, %v1705
        %v1707 = vrot.slane %v1706, 2
        %v1708 = vmax.f32 %v1706, %v1707
        %v1709 = vrot.slane %v1708, 1
        %v1710 = vmax.f32 %v1708, %v1709
        %v1711 = vsel %vm1011, %v1601, -inf
        %v1712 = vrot.slane %v1711, 4
        %v1713 = vmax.f32 %v1711, %v1712
        %v1714 = vrot.slane %v1713, 2
        %v1715 = vmax.f32 %v1713, %v1714
        %v1716 = vrot.slane %v1715, 1
        %v1717 = vmax.f32 %v1715, %v1716
        %v1718 = vsel %vm1011, %v1602, -inf
        %v1719 = vrot.slane %v1718, 4
        %v1720 = vmax.f32 %v1718, %v1719
        %v1721 = vrot.slane %v1720, 2
        %v1722 = vmax.f32 %v1720, %v1721
        %v1723 = vrot.slane %v1722, 1
        %v1724 = vmax.f32 %v1722, %v1723
        %v1725 = vsel %vm1011, %v1603, -inf
        %v1726 = vrot.slane %v1725, 4
        %v1727 = vmax.f32 %v1725, %v1726
        %v1728 = vrot.slane %v1727, 2
        %v1729 = vmax.f32 %v1727, %v1728
        %v1730 = vrot.slane %v1729, 1
        %v1731 = vmax.f32 %v1729, %v1730
        %v1732 = vsel %vm1011, %v1604, -inf
        %v1733 = vrot.slane %v1732, 4
        %v1734 = vmax.f32 %v1732, %v1733
        %v1735 = vrot.slane %v1734, 2
        %v1736 = vmax.f32 %v1734, %v1735
        %v1737 = vrot.slane %v1736, 1
        %v1738 = vmax.f32 %v1736, %v1737
        %v1739 = vsel %vm1011, %v1605, -inf
        %v1740 = vrot.slane %v1739, 4
        %v1741 = vmax.f32 %v1739, %v1740
        %v1742 = vrot.slane %v1741, 2
        %v1743 = vmax.f32 %v1741, %v1742
        %v1744 = vrot.slane %v1743, 1
        %v1745 = vmax.f32 %v1743, %v1744
        %v1746 = vsel %vm1011, %v1606, -inf
        %v1747 = vrot.slane %v1746, 4
        %v1748 = vmax.f32 %v1746, %v1747
        %v1749 = vrot.slane %v1748, 2
        %v1750 = vmax.f32 %v1748, %v1749
        %v1751 = vrot.slane %v1750, 1
        %v1752 = vmax.f32 %v1750, %v1751
        %v1753 = vsel %vm1011, %v1607, -inf
        %v1754 = vrot.slane %v1753, 4
        %v1755 = vmax.f32 %v1753, %v1754
        %v1756 = vrot.slane %v1755, 2
        %v1757 = vmax.f32 %v1755, %v1756
        %v1758 = vrot.slane %v1757, 1
        %v1759 = vmax.f32 %v1757, %v1758
        %v1760 = vsel %vm1011, %v1608, -inf
        %v1761 = vrot.slane %v1760, 4
        %v1762 = vmax.f32 %v1760, %v1761
        %v1763 = vrot.slane %v1762, 2
        %v1764 = vmax.f32 %v1762, %v1763
        %v1765 = vrot.slane %v1764, 1
        %v1766 = vmax.f32 %v1764, %v1765
        %v1767 = vsel %vm1011, %v1609, -inf
        %v1768 = vrot.slane %v1767, 4
        %v1769 = vmax.f32 %v1767, %v1768
        %v1770 = vrot.slane %v1769, 2
        %v1771 = vmax.f32 %v1769, %v1770
        %v1772 = vrot.slane %v1771, 1
        %v1773 = vmax.f32 %v1771, %v1772
        %v1774 = vsel %vm1011, %v1610, -inf
        %v1775 = vrot.slane %v1774, 4
        %v1776 = vmax.f32 %v1774, %v1775
        %v1777 = vrot.slane %v1776, 2
        %v1778 = vmax.f32 %v1776, %v1777
        %v1779 = vrot.slane %v1778, 1
        %v1780 = vmax.f32 %v1778, %v1779
        %v1781 = vsel %vm1011, %v1611, -inf
        %v1782 = vrot.slane %v1781, 4
        %v1783 = vmax.f32 %v1781, %v1782
        %v1784 = vrot.slane %v1783, 2
        %v1785 = vmax.f32 %v1783, %v1784
        %v1786 = vrot.slane %v1785, 1
        %v1787 = vmax.f32 %v1785, %v1786
        %v1788 = vsel %vm1011, %v1612, -inf
        %v1789 = vrot.slane %v1788, 4
        %v1790 = vmax.f32 %v1788, %v1789
        %v1791 = vrot.slane %v1790, 2
        %v1792 = vmax.f32 %v1790, %v1791
        %v1793 = vrot.slane %v1792, 1
        %v1794 = vmax.f32 %v1792, %v1793
        %v1795 = vsel %vm1011, %v1613, -inf
        %v1796 = vrot.slane %v1795, 4
        %v1797 = vmax.f32 %v1795, %v1796
        %v1798 = vrot.slane %v1797, 2
        %v1799 = vmax.f32 %v1797, %v1798
        %v1800 = vrot.slane %v1799, 1
        %v1801 = vmax.f32 %v1799, %v1800
        %v1802 = vsel %vm1011, %v1614, -inf
        %v1803 = vrot.slane %v1802, 4
        %v1804 = vmax.f32 %v1802, %v1803
        %v1805 = vrot.slane %v1804, 2
        %v1806 = vmax.f32 %v1804, %v1805
        %v1807 = vrot.slane %v1806, 1
        %v1808 = vmax.f32 %v1806, %v1807
        %v1809 = vsel %vm1011, %v1615, -inf
        %v1810 = vrot.slane %v1809, 4
        %v1811 = vmax.f32 %v1809, %v1810
        %v1812 = vrot.slane %v1811, 2
        %v1813 = vmax.f32 %v1811, %v1812
        %v1814 = vrot.slane %v1813, 1
        %v1815 = vmax.f32 %v1813, %v1814
        %v1816 = vsel %vm1011, %v1616, -inf
        %v1817 = vrot.slane %v1816, 4
        %v1818 = vmax.f32 %v1816, %v1817
        %v1819 = vrot.slane %v1818, 2
        %v1820 = vmax.f32 %v1818, %v1819
        %v1821 = vrot.slane %v1820, 1
        %v1822 = vmax.f32 %v1820, %v1821
        %v1823 = vsel %vm1011, %v1617, -inf
        %v1824 = vrot.slane %v1823, 4
        %v1825 = vmax.f32 %v1823, %v1824
        %v1826 = vrot.slane %v1825, 2
        %v1827 = vmax.f32 %v1825, %v1826
        %v1828 = vrot.slane %v1827, 1
        %v1829 = vmax.f32 %v1827, %v1828
        %v1830 = vsel %vm1011, %v1618, -inf
        %v1831 = vrot.slane %v1830, 4
        %v1832 = vmax.f32 %v1830, %v1831
        %v1833 = vrot.slane %v1832, 2
        %v1834 = vmax.f32 %v1832, %v1833
        %v1835 = vrot.slane %v1834, 1
        %v1836 = vmax.f32 %v1834, %v1835
        %v1837 = vsel %vm1011, %v1619, -inf
        %v1838 = vrot.slane %v1837, 4
        %v1839 = vmax.f32 %v1837, %v1838
        %v1840 = vrot.slane %v1839, 2
        %v1841 = vmax.f32 %v1839, %v1840
        %v1842 = vrot.slane %v1841, 1
        %v1843 = vmax.f32 %v1841, %v1842
        %v1844 = vsel %vm1011, %v1588, 0.0
        %v1845 = vrot.slane %v1844, 4
        %v1846 = vadd.f32 %v1844, %v1845
        %v1847 = vrot.slane %v1846, 2
        %v1848 = vadd.f32 %v1846, %v1847
        %v1849 = vrot.slane %v1848, 1
        %v1850 = vadd.f32 %v1848, %v1849
        %v1851 = vsel %vm1011, %v1589, 0.0
        %v1852 = vrot.slane %v1851, 4
        %v1853 = vadd.f32 %v1851, %v1852
        %v1854 = vrot.slane %v1853, 2
        %v1855 = vadd.f32 %v1853, %v1854
        %v1856 = vrot.slane %v1855, 1
        %v1857 = vadd.f32 %v1855, %v1856
        %v1858 = vsel %vm1011, %v1590, 0.0
        %v1859 = vrot.slane %v1858, 4
        %v1860 = vadd.f32 %v1858, %v1859
        %v1861 = vrot.slane %v1860, 2
        %v1862 = vadd.f32 %v1860, %v1861
        %v1863 = vrot.slane %v1862, 1
        %v1864 = vadd.f32 %v1862, %v1863
        %v1865 = vsel %vm1011, %v1591, 0.0
        %v1866 = vrot.slane %v1865, 4
        %v1867 = vadd.f32 %v1865, %v1866
        %v1868 = vrot.slane %v1867, 2
        %v1869 = vadd.f32 %v1867, %v1868
        %v1870 = vrot.slane %v1869, 1
        %v1871 = vadd.f32 %v1869, %v1870
        %v1872 = vsel %vm1011, %v1592, 0.0
        %v1873 = vrot.slane %v1872, 4
        %v1874 = vadd.f32 %v1872, %v1873
        %v1875 = vrot.slane %v1874, 2
        %v1876 = vadd.f32 %v1874, %v1875
        %v1877 = vrot.slane %v1876, 1
        %v1878 = vadd.f32 %v1876, %v1877
        %v1879 = vsel %vm1011, %v1593, 0.0
        %v1880 = vrot.slane %v1879, 4
        %v1881 = vadd.f32 %v1879, %v1880
        %v1882 = vrot.slane %v1881, 2
        %v1883 = vadd.f32 %v1881, %v1882
        %v1884 = vrot.slane %v1883, 1
        %v1885 = vadd.f32 %v1883, %v1884
        %v1886 = vsel %vm1011, %v1594, 0.0
        %v1887 = vrot.slane %v1886, 4
        %v1888 = vadd.f32 %v1886, %v1887
        %v1889 = vrot.slane %v1888, 2
        %v1890 = vadd.f32 %v1888, %v1889
        %v1891 = vrot.slane %v1890, 1
        %v1892 = vadd.f32 %v1890, %v1891
        %v1893 = vsel %vm1011, %v1595, 0.0
        %v1894 = vrot.slane %v1893, 4
        %v1895 = vadd.f32 %v1893, %v1894
        %v1896 = vrot.slane %v1895, 2
        %v1897 = vadd.f32 %v1895, %v1896
        %v1898 = vrot.slane %v1897, 1
        %v1899 = vadd.f32 %v1897, %v1898
        %v1900 = vsel %vm1011, %v1596, 0.0
        %v1901 = vrot.slane %v1900, 4
        %v1902 = vadd.f32 %v1900, %v1901
        %v1903 = vrot.slane %v1902, 2
        %v1904 = vadd.f32 %v1902, %v1903
        %v1905 = vrot.slane %v1904, 1
        %v1906 = vadd.f32 %v1904, %v1905
        %v1907 = vsel %vm1011, %v1597, 0.0
        %v1908 = vrot.slane %v1907, 4
        %v1909 = vadd.f32 %v1907, %v1908
        %v1910 = vrot.slane %v1909, 2
        %v1911 = vadd.f32 %v1909, %v1910
        %v1912 = vrot.slane %v1911, 1
        %v1913 = vadd.f32 %v1911, %v1912
        %v1914 = vsel %vm1011, %v1598, 0.0
        %v1915 = vrot.slane %v1914, 4
        %v1916 = vadd.f32 %v1914, %v1915
        %v1917 = vrot.slane %v1916, 2
        %v1918 = vadd.f32 %v1916, %v1917
        %v1919 = vrot.slane %v1918, 1
        %v1920 = vadd.f32 %v1918, %v1919
        %v1921 = vsel %vm1011, %v1599, 0.0
        %v1922 = vrot.slane %v1921, 4
        %v1923 = vadd.f32 %v1921, %v1922
        %v1924 = vrot.slane %v1923, 2
        %v1925 = vadd.f32 %v1923, %v1924
        %v1926 = vrot.slane %v1925, 1
        %v1927 = vadd.f32 %v1925, %v1926
        %v1928 = vsel %vm1011, %v1600, 0.0
        %v1929 = vrot.slane %v1928, 4
        %v1930 = vadd.f32 %v1928, %v1929
        %v1931 = vrot.slane %v1930, 2
        %v1932 = vadd.f32 %v1930, %v1931
        %v1933 = vrot.slane %v1932, 1
        %v1934 = vadd.f32 %v1932, %v1933
        %v1935 = vsel %vm1011, %v1601, 0.0
        %v1936 = vrot.slane %v1935, 4
        %v1937 = vadd.f32 %v1935, %v1936
        %v1938 = vrot.slane %v1937, 2
        %v1939 = vadd.f32 %v1937, %v1938
        %v1940 = vrot.slane %v1939, 1
        %v1941 = vadd.f32 %v1939, %v1940
        %v1942 = vsel %vm1011, %v1602, 0.0
        %v1943 = vrot.slane %v1942, 4
        %v1944 = vadd.f32 %v1942, %v1943
        %v1945 = vrot.slane %v1944, 2
        %v1946 = vadd.f32 %v1944, %v1945
        %v1947 = vrot.slane %v1946, 1
        %v1948 = vadd.f32 %v1946, %v1947
        %v1949 = vsel %vm1011, %v1603, 0.0
        %v1950 = vrot.slane %v1949, 4
        %v1951 = vadd.f32 %v1949, %v1950
        %v1952 = vrot.slane %v1951, 2
        %v1953 = vadd.f32 %v1951, %v1952
        %v1954 = vrot.slane %v1953, 1
        %v1955 = vadd.f32 %v1953, %v1954
        %v1956 = vsel %vm1011, %v1604, 0.0
        %v1957 = vrot.slane %v1956, 4
        %v1958 = vadd.f32 %v1956, %v1957
        %v1959 = vrot.slane %v1958, 2
        %v1960 = vadd.f32 %v1958, %v1959
        %v1961 = vrot.slane %v1960, 1
        %v1962 = vadd.f32 %v1960, %v1961
        %v1963 = vsel %vm1011, %v1605, 0.0
        %v1964 = vrot.slane %v1963, 4
        %v1965 = vadd.f32 %v1963, %v1964
        %v1966 = vrot.slane %v1965, 2
        %v1967 = vadd.f32 %v1965, %v1966
        %v1968 = vrot.slane %v1967, 1
        %v1969 = vadd.f32 %v1967, %v1968
        %v1970 = vsel %vm1011, %v1606, 0.0
        %v1971 = vrot.slane %v1970, 4
        %v1972 = vadd.f32 %v1970, %v1971
        %v1973 = vrot.slane %v1972, 2
        %v1974 = vadd.f32 %v1972, %v1973
        %v1975 = vrot.slane %v1974, 1
        %v1976 = vadd.f32 %v1974, %v1975
        %v1977 = vsel %vm1011, %v1607, 0.0
        %v1978 = vrot.slane %v1977, 4
        %v1979 = vadd.f32 %v1977, %v1978
        %v1980 = vrot.slane %v1979, 2
        %v1981 = vadd.f32 %v1979, %v1980
        %v1982 = vrot.slane %v1981, 1
        %v1983 = vadd.f32 %v1981, %v1982
        %v1984 = vsel %vm1011, %v1608, 0.0
        %v1985 = vrot.slane %v1984, 4
        %v1986 = vadd.f32 %v1984, %v1985
        %v1987 = vrot.slane %v1986, 2
        %v1988 = vadd.f32 %v1986, %v1987
        %v1989 = vrot.slane %v1988, 1
        %v1990 = vadd.f32 %v1988, %v1989
        %v1991 = vsel %vm1011, %v1609, 0.0
        %v1992 = vrot.slane %v1991, 4
        %v1993 = vadd.f32 %v1991, %v1992
        %v1994 = vrot.slane %v1993, 2
        %v1995 = vadd.f32 %v1993, %v1994
        %v1996 = vrot.slane %v1995, 1
        %v1997 = vadd.f32 %v1995, %v1996
        %v1998 = vsel %vm1011, %v1610, 0.0
        %v1999 = vrot.slane %v1998, 4
        %v2000 = vadd.f32 %v1998, %v1999
        %v2001 = vrot.slane %v2000, 2
        %v2002 = vadd.f32 %v2000, %v2001
        %v2003 = vrot.slane %v2002, 1
        %v2004 = vadd.f32 %v2002, %v2003
        %v2005 = vsel %vm1011, %v1611, 0.0
        %v2006 = vrot.slane %v2005, 4
        %v2007 = vadd.f32 %v2005, %v2006
        %v2008 = vrot.slane %v2007, 2
        %v2009 = vadd.f32 %v2007, %v2008
        %v2010 = vrot.slane %v2009, 1
        %v2011 = vadd.f32 %v2009, %v2010
        %v2012 = vsel %vm1011, %v1612, 0.0
        %v2013 = vrot.slane %v2012, 4
        %v2014 = vadd.f32 %v2012, %v2013
        %v2015 = vrot.slane %v2014, 2
        %v2016 = vadd.f32 %v2014, %v2015
        %v2017 = vrot.slane %v2016, 1
        %v2018 = vadd.f32 %v2016, %v2017
        %v2019 = vsel %vm1011, %v1613, 0.0
        %v2020 = vrot.slane %v2019, 4
        %v2021 = vadd.f32 %v2019, %v2020
        %v2022 = vrot.slane %v2021, 2
        %v2023 = vadd.f32 %v2021, %v2022
        %v2024 = vrot.slane %v2023, 1
        %v2025 = vadd.f32 %v2023, %v2024
        %v2026 = vsel %vm1011, %v1614, 0.0
        %v2027 = vrot.slane %v2026, 4
        %v2028 = vadd.f32 %v2026, %v2027
        %v2029 = vrot.slane %v2028, 2
        %v2030 = vadd.f32 %v2028, %v2029
        %v2031 = vrot.slane %v2030, 1
        %v2032 = vadd.f32 %v2030, %v2031
        %v2033 = vsel %vm1011, %v1615, 0.0
        %v2034 = vrot.slane %v2033, 4
        %v2035 = vadd.f32 %v2033, %v2034
        %v2036 = vrot.slane %v2035, 2
        %v2037 = vadd.f32 %v2035, %v2036
        %v2038 = vrot.slane %v2037, 1
        %v2039 = vadd.f32 %v2037, %v2038
        %v2040 = vsel %vm1011, %v1616, 0.0
        %v2041 = vrot.slane %v2040, 4
        %v2042 = vadd.f32 %v2040, %v2041
        %v2043 = vrot.slane %v2042, 2
        %v2044 = vadd.f32 %v2042, %v2043
        %v2045 = vrot.slane %v2044, 1
        %v2046 = vadd.f32 %v2044, %v2045
        %v2047 = vsel %vm1011, %v1617, 0.0
        %v2048 = vrot.slane %v2047, 4
        %v2049 = vadd.f32 %v2047, %v2048
        %v2050 = vrot.slane %v2049, 2
        %v2051 = vadd.f32 %v2049, %v2050
        %v2052 = vrot.slane %v2051, 1
        %v2053 = vadd.f32 %v2051, %v2052
        %v2054 = vsel %vm1011, %v1618, 0.0
        %v2055 = vrot.slane %v2054, 4
        %v2056 = vadd.f32 %v2054, %v2055
        %v2057 = vrot.slane %v2056, 2
        %v2058 = vadd.f32 %v2056, %v2057
        %v2059 = vrot.slane %v2058, 1
        %v2060 = vadd.f32 %v2058, %v2059
        %v2061 = vsel %vm1011, %v1619, 0.0
        %v2062 = vrot.slane %v2061, 4
        %v2063 = vadd.f32 %v2061, %v2062
        %v2064 = vrot.slane %v2063, 2
        %v2065 = vadd.f32 %v2063, %v2064
        %v2066 = vrot.slane %v2065, 1
        %v2067 = vadd.f32 %v2065, %v2066
        %2068 = vset.pattern.permute.xlu0 18
        %2069 = vperm.xlu0 %2068, %v756
        %v2070 = vpop.permute.xlu0 %2069
        %2072 = vset.pattern.permute.xlu0 18
        %2073 = vperm.xlu0 %2072, %v758
        %v2074 = vpop.permute.xlu0 %2073
        %2076 = vset.pattern.permute.xlu0 18
        %2077 = vperm.xlu0 %2076, %v760
        %v2078 = vpop.permute.xlu0 %2077
        %2080 = vset.pattern.permute.xlu0 18
        %2081 = vperm.xlu0 %2080, %v762
        %v2082 = vpop.permute.xlu0 %2081
        %2084 = vset.pattern.permute.xlu0 18
        %2085 = vperm.xlu0 %2084, %v764
        %v2086 = vpop.permute.xlu0 %2085
        %2088 = vset.pattern.permute.xlu0 18
        %2089 = vperm.xlu0 %2088, %v766
        %v2090 = vpop.permute.xlu0 %2089
        %2092 = vset.pattern.permute.xlu0 18
        %2093 = vperm.xlu0 %2092, %v768
        %v2094 = vpop.permute.xlu0 %2093
        %2096 = vset.pattern.permute.xlu0 18
        %2097 = vperm.xlu0 %2096, %v770
        %v2098 = vpop.permute.xlu0 %2097
        %2100 = vset.pattern.permute.xlu0 18
        %2101 = vperm.xlu0 %2100, %v772
        %v2102 = vpop.permute.xlu0 %2101
        %2104 = vset.pattern.permute.xlu0 18
        %2105 = vperm.xlu0 %2104, %v774
        %v2106 = vpop.permute.xlu0 %2105
        %2108 = vset.pattern.permute.xlu0 18
        %2109 = vperm.xlu0 %2108, %v776
        %v2110 = vpop.permute.xlu0 %2109
        %2112 = vset.pattern.permute.xlu0 18
        %2113 = vperm.xlu0 %2112, %v778
        %v2114 = vpop.permute.xlu0 %2113
        %2116 = vset.pattern.permute.xlu0 18
        %2117 = vperm.xlu0 %2116, %v780
        %v2118 = vpop.permute.xlu0 %2117
        %2120 = vset.pattern.permute.xlu0 18
        %2121 = vperm.xlu0 %2120, %v782
        %v2122 = vpop.permute.xlu0 %2121
        %2124 = vset.pattern.permute.xlu0 18
        %2125 = vperm.xlu0 %2124, %v784
        %v2126 = vpop.permute.xlu0 %2125
        %2128 = vset.pattern.permute.xlu0 18
        %2129 = vperm.xlu0 %2128, %v786
        %v2130 = vpop.permute.xlu0 %2129
        %2132 = vset.pattern.permute.xlu0 18
        %2133 = vperm.xlu0 %2132, %v788
        %v2134 = vpop.permute.xlu0 %2133
        %2136 = vset.pattern.permute.xlu0 18
        %2137 = vperm.xlu0 %2136, %v790
        %v2138 = vpop.permute.xlu0 %2137
        %2140 = vset.pattern.permute.xlu0 18
        %2141 = vperm.xlu0 %2140, %v792
        %v2142 = vpop.permute.xlu0 %2141
        %2144 = vset.pattern.permute.xlu0 18
        %2145 = vperm.xlu0 %2144, %v794
        %v2146 = vpop.permute.xlu0 %2145
        %2148 = vset.pattern.permute.xlu0 18
        %2149 = vperm.xlu0 %2148, %v796
        %v2150 = vpop.permute.xlu0 %2149
        %2152 = vset.pattern.permute.xlu0 18
        %2153 = vperm.xlu0 %2152, %v798
        %v2154 = vpop.permute.xlu0 %2153
        %2156 = vset.pattern.permute.xlu0 18
        %2157 = vperm.xlu0 %2156, %v800
        %v2158 = vpop.permute.xlu0 %2157
        %2160 = vset.pattern.permute.xlu0 18
        %2161 = vperm.xlu0 %2160, %v802
        %v2162 = vpop.permute.xlu0 %2161
        %2164 = vset.pattern.permute.xlu0 18
        %2165 = vperm.xlu0 %2164, %v804
        %v2166 = vpop.permute.xlu0 %2165
        %2168 = vset.pattern.permute.xlu0 18
        %2169 = vperm.xlu0 %2168, %v806
        %v2170 = vpop.permute.xlu0 %2169
        %2172 = vset.pattern.permute.xlu0 18
        %2173 = vperm.xlu0 %2172, %v808
        %v2174 = vpop.permute.xlu0 %2173
        %2176 = vset.pattern.permute.xlu0 18
        %2177 = vperm.xlu0 %2176, %v810
        %v2178 = vpop.permute.xlu0 %2177
        %2180 = vset.pattern.permute.xlu0 18
        %2181 = vperm.xlu0 %2180, %v812
        %v2182 = vpop.permute.xlu0 %2181
        %2184 = vset.pattern.permute.xlu0 18
        %2185 = vperm.xlu0 %2184, %v814
        %v2186 = vpop.permute.xlu0 %2185
        %2188 = vset.pattern.permute.xlu0 18
        %2189 = vperm.xlu0 %2188, %v816
        %v2190 = vpop.permute.xlu0 %2189
        %2192 = vset.pattern.permute.xlu0 18
        %2193 = vperm.xlu0 %2192, %v818
        %v2194 = vpop.permute.xlu0 %2193
        %v2196 = vmul.f32 %v533, %v2070
        %v2197 = vmul.f32 %v538, %v2074
        %v2198 = vmul.f32 %v543, %v2078
        %v2199 = vmul.f32 %v548, %v2082
        %v2200 = vmul.f32 %v553, %v2086
        %v2201 = vmul.f32 %v558, %v2090
        %v2202 = vmul.f32 %v563, %v2094
        %v2203 = vmul.f32 %v568, %v2098
        %v2204 = vmul.f32 %v573, %v2102
        %v2205 = vmul.f32 %v578, %v2106
        %v2206 = vmul.f32 %v583, %v2110
        %v2207 = vmul.f32 %v588, %v2114
        %v2208 = vmul.f32 %v593, %v2118
        %v2209 = vmul.f32 %v598, %v2122
        %v2210 = vmul.f32 %v603, %v2126
        %v2211 = vmul.f32 %v608, %v2130
        %v2212 = vmul.f32 %v613, %v2134
        %v2213 = vmul.f32 %v618, %v2138
        %v2214 = vmul.f32 %v623, %v2142
        %v2215 = vmul.f32 %v628, %v2146
        %v2216 = vmul.f32 %v633, %v2150
        %v2217 = vmul.f32 %v638, %v2154
        %v2218 = vmul.f32 %v643, %v2158
        %v2219 = vmul.f32 %v648, %v2162
        %v2220 = vmul.f32 %v653, %v2166
        %v2221 = vmul.f32 %v658, %v2170
        %v2222 = vmul.f32 %v663, %v2174
        %v2223 = vmul.f32 %v668, %v2178
        %v2224 = vmul.f32 %v673, %v2182
        %v2225 = vmul.f32 %v678, %v2186
        %v2226 = vmul.f32 %v683, %v2190
        %v2227 = vmul.f32 %v688, %v2194
        %v2228 = vsel %vm1011, %v2196, -inf
        %v2229 = vrot.slane %v2228, 4
        %v2230 = vmax.f32 %v2228, %v2229
        %v2231 = vrot.slane %v2230, 2
        %v2232 = vmax.f32 %v2230, %v2231
        %v2233 = vrot.slane %v2232, 1
        %v2234 = vmax.f32 %v2232, %v2233
        %v2235 = vsel %vm1011, %v2197, -inf
        %v2236 = vrot.slane %v2235, 4
        %v2237 = vmax.f32 %v2235, %v2236
        %v2238 = vrot.slane %v2237, 2
        %v2239 = vmax.f32 %v2237, %v2238
        %v2240 = vrot.slane %v2239, 1
        %v2241 = vmax.f32 %v2239, %v2240
        %v2242 = vsel %vm1011, %v2198, -inf
        %v2243 = vrot.slane %v2242, 4
        %v2244 = vmax.f32 %v2242, %v2243
        %v2245 = vrot.slane %v2244, 2
        %v2246 = vmax.f32 %v2244, %v2245
        %v2247 = vrot.slane %v2246, 1
        %v2248 = vmax.f32 %v2246, %v2247
        %v2249 = vsel %vm1011, %v2199, -inf
        %v2250 = vrot.slane %v2249, 4
        %v2251 = vmax.f32 %v2249, %v2250
        %v2252 = vrot.slane %v2251, 2
        %v2253 = vmax.f32 %v2251, %v2252
        %v2254 = vrot.slane %v2253, 1
        %v2255 = vmax.f32 %v2253, %v2254
        %v2256 = vsel %vm1011, %v2200, -inf
        %v2257 = vrot.slane %v2256, 4
        %v2258 = vmax.f32 %v2256, %v2257
        %v2259 = vrot.slane %v2258, 2
        %v2260 = vmax.f32 %v2258, %v2259
        %v2261 = vrot.slane %v2260, 1
        %v2262 = vmax.f32 %v2260, %v2261
        %v2263 = vsel %vm1011, %v2201, -inf
        %v2264 = vrot.slane %v2263, 4
        %v2265 = vmax.f32 %v2263, %v2264
        %v2266 = vrot.slane %v2265, 2
        %v2267 = vmax.f32 %v2265, %v2266
        %v2268 = vrot.slane %v2267, 1
        %v2269 = vmax.f32 %v2267, %v2268
        %v2270 = vsel %vm1011, %v2202, -inf
        %v2271 = vrot.slane %v2270, 4
        %v2272 = vmax.f32 %v2270, %v2271
        %v2273 = vrot.slane %v2272, 2
        %v2274 = vmax.f32 %v2272, %v2273
        %v2275 = vrot.slane %v2274, 1
        %v2276 = vmax.f32 %v2274, %v2275
        %v2277 = vsel %vm1011, %v2203, -inf
        %v2278 = vrot.slane %v2277, 4
        %v2279 = vmax.f32 %v2277, %v2278
        %v2280 = vrot.slane %v2279, 2
        %v2281 = vmax.f32 %v2279, %v2280
        %v2282 = vrot.slane %v2281, 1
        %v2283 = vmax.f32 %v2281, %v2282
        %v2284 = vsel %vm1011, %v2204, -inf
        %v2285 = vrot.slane %v2284, 4
        %v2286 = vmax.f32 %v2284, %v2285
        %v2287 = vrot.slane %v2286, 2
        %v2288 = vmax.f32 %v2286, %v2287
        %v2289 = vrot.slane %v2288, 1
        %v2290 = vmax.f32 %v2288, %v2289
        %v2291 = vsel %vm1011, %v2205, -inf
        %v2292 = vrot.slane %v2291, 4
        %v2293 = vmax.f32 %v2291, %v2292
        %v2294 = vrot.slane %v2293, 2
        %v2295 = vmax.f32 %v2293, %v2294
        %v2296 = vrot.slane %v2295, 1
        %v2297 = vmax.f32 %v2295, %v2296
        %v2298 = vsel %vm1011, %v2206, -inf
        %v2299 = vrot.slane %v2298, 4
        %v2300 = vmax.f32 %v2298, %v2299
        %v2301 = vrot.slane %v2300, 2
        %v2302 = vmax.f32 %v2300, %v2301
        %v2303 = vrot.slane %v2302, 1
        %v2304 = vmax.f32 %v2302, %v2303
        %v2305 = vsel %vm1011, %v2207, -inf
        %v2306 = vrot.slane %v2305, 4
        %v2307 = vmax.f32 %v2305, %v2306
        %v2308 = vrot.slane %v2307, 2
        %v2309 = vmax.f32 %v2307, %v2308
        %v2310 = vrot.slane %v2309, 1
        %v2311 = vmax.f32 %v2309, %v2310
        %v2312 = vsel %vm1011, %v2208, -inf
        %v2313 = vrot.slane %v2312, 4
        %v2314 = vmax.f32 %v2312, %v2313
        %v2315 = vrot.slane %v2314, 2
        %v2316 = vmax.f32 %v2314, %v2315
        %v2317 = vrot.slane %v2316, 1
        %v2318 = vmax.f32 %v2316, %v2317
        %v2319 = vsel %vm1011, %v2209, -inf
        %v2320 = vrot.slane %v2319, 4
        %v2321 = vmax.f32 %v2319, %v2320
        %v2322 = vrot.slane %v2321, 2
        %v2323 = vmax.f32 %v2321, %v2322
        %v2324 = vrot.slane %v2323, 1
        %v2325 = vmax.f32 %v2323, %v2324
        %v2326 = vsel %vm1011, %v2210, -inf
        %v2327 = vrot.slane %v2326, 4
        %v2328 = vmax.f32 %v2326, %v2327
        %v2329 = vrot.slane %v2328, 2
        %v2330 = vmax.f32 %v2328, %v2329
        %v2331 = vrot.slane %v2330, 1
        %v2332 = vmax.f32 %v2330, %v2331
        %v2333 = vsel %vm1011, %v2211, -inf
        %v2334 = vrot.slane %v2333, 4
        %v2335 = vmax.f32 %v2333, %v2334
        %v2336 = vrot.slane %v2335, 2
        %v2337 = vmax.f32 %v2335, %v2336
        %v2338 = vrot.slane %v2337, 1
        %v2339 = vmax.f32 %v2337, %v2338
        %v2340 = vsel %vm1011, %v2212, -inf
        %v2341 = vrot.slane %v2340, 4
        %v2342 = vmax.f32 %v2340, %v2341
        %v2343 = vrot.slane %v2342, 2
        %v2344 = vmax.f32 %v2342, %v2343
        %v2345 = vrot.slane %v2344, 1
        %v2346 = vmax.f32 %v2344, %v2345
        %v2347 = vsel %vm1011, %v2213, -inf
        %v2348 = vrot.slane %v2347, 4
        %v2349 = vmax.f32 %v2347, %v2348
        %v2350 = vrot.slane %v2349, 2
        %v2351 = vmax.f32 %v2349, %v2350
        %v2352 = vrot.slane %v2351, 1
        %v2353 = vmax.f32 %v2351, %v2352
        %v2354 = vsel %vm1011, %v2214, -inf
        %v2355 = vrot.slane %v2354, 4
        %v2356 = vmax.f32 %v2354, %v2355
        %v2357 = vrot.slane %v2356, 2
        %v2358 = vmax.f32 %v2356, %v2357
        %v2359 = vrot.slane %v2358, 1
        %v2360 = vmax.f32 %v2358, %v2359
        %v2361 = vsel %vm1011, %v2215, -inf
        %v2362 = vrot.slane %v2361, 4
        %v2363 = vmax.f32 %v2361, %v2362
        %v2364 = vrot.slane %v2363, 2
        %v2365 = vmax.f32 %v2363, %v2364
        %v2366 = vrot.slane %v2365, 1
        %v2367 = vmax.f32 %v2365, %v2366
        %v2368 = vsel %vm1011, %v2216, -inf
        %v2369 = vrot.slane %v2368, 4
        %v2370 = vmax.f32 %v2368, %v2369
        %v2371 = vrot.slane %v2370, 2
        %v2372 = vmax.f32 %v2370, %v2371
        %v2373 = vrot.slane %v2372, 1
        %v2374 = vmax.f32 %v2372, %v2373
        %v2375 = vsel %vm1011, %v2217, -inf
        %v2376 = vrot.slane %v2375, 4
        %v2377 = vmax.f32 %v2375, %v2376
        %v2378 = vrot.slane %v2377, 2
        %v2379 = vmax.f32 %v2377, %v2378
        %v2380 = vrot.slane %v2379, 1
        %v2381 = vmax.f32 %v2379, %v2380
        %v2382 = vsel %vm1011, %v2218, -inf
        %v2383 = vrot.slane %v2382, 4
        %v2384 = vmax.f32 %v2382, %v2383
        %v2385 = vrot.slane %v2384, 2
        %v2386 = vmax.f32 %v2384, %v2385
        %v2387 = vrot.slane %v2386, 1
        %v2388 = vmax.f32 %v2386, %v2387
        %v2389 = vsel %vm1011, %v2219, -inf
        %v2390 = vrot.slane %v2389, 4
        %v2391 = vmax.f32 %v2389, %v2390
        %v2392 = vrot.slane %v2391, 2
        %v2393 = vmax.f32 %v2391, %v2392
        %v2394 = vrot.slane %v2393, 1
        %v2395 = vmax.f32 %v2393, %v2394
        %v2396 = vsel %vm1011, %v2220, -inf
        %v2397 = vrot.slane %v2396, 4
        %v2398 = vmax.f32 %v2396, %v2397
        %v2399 = vrot.slane %v2398, 2
        %v2400 = vmax.f32 %v2398, %v2399
        %v2401 = vrot.slane %v2400, 1
        %v2402 = vmax.f32 %v2400, %v2401
        %v2403 = vsel %vm1011, %v2221, -inf
        %v2404 = vrot.slane %v2403, 4
        %v2405 = vmax.f32 %v2403, %v2404
        %v2406 = vrot.slane %v2405, 2
        %v2407 = vmax.f32 %v2405, %v2406
        %v2408 = vrot.slane %v2407, 1
        %v2409 = vmax.f32 %v2407, %v2408
        %v2410 = vsel %vm1011, %v2222, -inf
        %v2411 = vrot.slane %v2410, 4
        %v2412 = vmax.f32 %v2410, %v2411
        %v2413 = vrot.slane %v2412, 2
        %v2414 = vmax.f32 %v2412, %v2413
        %v2415 = vrot.slane %v2414, 1
        %v2416 = vmax.f32 %v2414, %v2415
        %v2417 = vsel %vm1011, %v2223, -inf
        %v2418 = vrot.slane %v2417, 4
        %v2419 = vmax.f32 %v2417, %v2418
        %v2420 = vrot.slane %v2419, 2
        %v2421 = vmax.f32 %v2419, %v2420
        %v2422 = vrot.slane %v2421, 1
        %v2423 = vmax.f32 %v2421, %v2422
        %v2424 = vsel %vm1011, %v2224, -inf
        %v2425 = vrot.slane %v2424, 4
        %v2426 = vmax.f32 %v2424, %v2425
        %v2427 = vrot.slane %v2426, 2
        %v2428 = vmax.f32 %v2426, %v2427
        %v2429 = vrot.slane %v2428, 1
        %v2430 = vmax.f32 %v2428, %v2429
        %v2431 = vsel %vm1011, %v2225, -inf
        %v2432 = vrot.slane %v2431, 4
        %v2433 = vmax.f32 %v2431, %v2432
        %v2434 = vrot.slane %v2433, 2
        %v2435 = vmax.f32 %v2433, %v2434
        %v2436 = vrot.slane %v2435, 1
        %v2437 = vmax.f32 %v2435, %v2436
        %v2438 = vsel %vm1011, %v2226, -inf
        %v2439 = vrot.slane %v2438, 4
        %v2440 = vmax.f32 %v2438, %v2439
        %v2441 = vrot.slane %v2440, 2
        %v2442 = vmax.f32 %v2440, %v2441
        %v2443 = vrot.slane %v2442, 1
        %v2444 = vmax.f32 %v2442, %v2443
        %v2445 = vsel %vm1011, %v2227, -inf
        %v2446 = vrot.slane %v2445, 4
        %v2447 = vmax.f32 %v2445, %v2446
        %v2448 = vrot.slane %v2447, 2
        %v2449 = vmax.f32 %v2447, %v2448
        %v2450 = vrot.slane %v2449, 1
        %v2451 = vmax.f32 %v2449, %v2450
        %v2452 = vsel %vm1011, %v2196, 0.0
        %v2453 = vrot.slane %v2452, 4
        %v2454 = vadd.f32 %v2452, %v2453
        %v2455 = vrot.slane %v2454, 2
        %v2456 = vadd.f32 %v2454, %v2455
        %v2457 = vrot.slane %v2456, 1
        %v2458 = vadd.f32 %v2456, %v2457
        %v2459 = vsel %vm1011, %v2197, 0.0
        %v2460 = vrot.slane %v2459, 4
        %v2461 = vadd.f32 %v2459, %v2460
        %v2462 = vrot.slane %v2461, 2
        %v2463 = vadd.f32 %v2461, %v2462
        %v2464 = vrot.slane %v2463, 1
        %v2465 = vadd.f32 %v2463, %v2464
        %v2466 = vsel %vm1011, %v2198, 0.0
        %v2467 = vrot.slane %v2466, 4
        %v2468 = vadd.f32 %v2466, %v2467
        %v2469 = vrot.slane %v2468, 2
        %v2470 = vadd.f32 %v2468, %v2469
        %v2471 = vrot.slane %v2470, 1
        %v2472 = vadd.f32 %v2470, %v2471
        %v2473 = vsel %vm1011, %v2199, 0.0
        %v2474 = vrot.slane %v2473, 4
        %v2475 = vadd.f32 %v2473, %v2474
        %v2476 = vrot.slane %v2475, 2
        %v2477 = vadd.f32 %v2475, %v2476
        %v2478 = vrot.slane %v2477, 1
        %v2479 = vadd.f32 %v2477, %v2478
        %v2480 = vsel %vm1011, %v2200, 0.0
        %v2481 = vrot.slane %v2480, 4
        %v2482 = vadd.f32 %v2480, %v2481
        %v2483 = vrot.slane %v2482, 2
        %v2484 = vadd.f32 %v2482, %v2483
        %v2485 = vrot.slane %v2484, 1
        %v2486 = vadd.f32 %v2484, %v2485
        %v2487 = vsel %vm1011, %v2201, 0.0
        %v2488 = vrot.slane %v2487, 4
        %v2489 = vadd.f32 %v2487, %v2488
        %v2490 = vrot.slane %v2489, 2
        %v2491 = vadd.f32 %v2489, %v2490
        %v2492 = vrot.slane %v2491, 1
        %v2493 = vadd.f32 %v2491, %v2492
        %v2494 = vsel %vm1011, %v2202, 0.0
        %v2495 = vrot.slane %v2494, 4
        %v2496 = vadd.f32 %v2494, %v2495
        %v2497 = vrot.slane %v2496, 2
        %v2498 = vadd.f32 %v2496, %v2497
        %v2499 = vrot.slane %v2498, 1
        %v2500 = vadd.f32 %v2498, %v2499
        %v2501 = vsel %vm1011, %v2203, 0.0
        %v2502 = vrot.slane %v2501, 4
        %v2503 = vadd.f32 %v2501, %v2502
        %v2504 = vrot.slane %v2503, 2
        %v2505 = vadd.f32 %v2503, %v2504
        %v2506 = vrot.slane %v2505, 1
        %v2507 = vadd.f32 %v2505, %v2506
        %v2508 = vsel %vm1011, %v2204, 0.0
        %v2509 = vrot.slane %v2508, 4
        %v2510 = vadd.f32 %v2508, %v2509
        %v2511 = vrot.slane %v2510, 2
        %v2512 = vadd.f32 %v2510, %v2511
        %v2513 = vrot.slane %v2512, 1
        %v2514 = vadd.f32 %v2512, %v2513
        %v2515 = vsel %vm1011, %v2205, 0.0
        %v2516 = vrot.slane %v2515, 4
        %v2517 = vadd.f32 %v2515, %v2516
        %v2518 = vrot.slane %v2517, 2
        %v2519 = vadd.f32 %v2517, %v2518
        %v2520 = vrot.slane %v2519, 1
        %v2521 = vadd.f32 %v2519, %v2520
        %v2522 = vsel %vm1011, %v2206, 0.0
        %v2523 = vrot.slane %v2522, 4
        %v2524 = vadd.f32 %v2522, %v2523
        %v2525 = vrot.slane %v2524, 2
        %v2526 = vadd.f32 %v2524, %v2525
        %v2527 = vrot.slane %v2526, 1
        %v2528 = vadd.f32 %v2526, %v2527
        %v2529 = vsel %vm1011, %v2207, 0.0
        %v2530 = vrot.slane %v2529, 4
        %v2531 = vadd.f32 %v2529, %v2530
        %v2532 = vrot.slane %v2531, 2
        %v2533 = vadd.f32 %v2531, %v2532
        %v2534 = vrot.slane %v2533, 1
        %v2535 = vadd.f32 %v2533, %v2534
        %v2536 = vsel %vm1011, %v2208, 0.0
        %v2537 = vrot.slane %v2536, 4
        %v2538 = vadd.f32 %v2536, %v2537
        %v2539 = vrot.slane %v2538, 2
        %v2540 = vadd.f32 %v2538, %v2539
        %v2541 = vrot.slane %v2540, 1
        %v2542 = vadd.f32 %v2540, %v2541
        %v2543 = vsel %vm1011, %v2209, 0.0
        %v2544 = vrot.slane %v2543, 4
        %v2545 = vadd.f32 %v2543, %v2544
        %v2546 = vrot.slane %v2545, 2
        %v2547 = vadd.f32 %v2545, %v2546
        %v2548 = vrot.slane %v2547, 1
        %v2549 = vadd.f32 %v2547, %v2548
        %v2550 = vsel %vm1011, %v2210, 0.0
        %v2551 = vrot.slane %v2550, 4
        %v2552 = vadd.f32 %v2550, %v2551
        %v2553 = vrot.slane %v2552, 2
        %v2554 = vadd.f32 %v2552, %v2553
        %v2555 = vrot.slane %v2554, 1
        %v2556 = vadd.f32 %v2554, %v2555
        %v2557 = vsel %vm1011, %v2211, 0.0
        %v2558 = vrot.slane %v2557, 4
        %v2559 = vadd.f32 %v2557, %v2558
        %v2560 = vrot.slane %v2559, 2
        %v2561 = vadd.f32 %v2559, %v2560
        %v2562 = vrot.slane %v2561, 1
        %v2563 = vadd.f32 %v2561, %v2562
        %v2564 = vsel %vm1011, %v2212, 0.0
        %v2565 = vrot.slane %v2564, 4
        %v2566 = vadd.f32 %v2564, %v2565
        %v2567 = vrot.slane %v2566, 2
        %v2568 = vadd.f32 %v2566, %v2567
        %v2569 = vrot.slane %v2568, 1
        %v2570 = vadd.f32 %v2568, %v2569
        %v2571 = vsel %vm1011, %v2213, 0.0
        %v2572 = vrot.slane %v2571, 4
        %v2573 = vadd.f32 %v2571, %v2572
        %v2574 = vrot.slane %v2573, 2
        %v2575 = vadd.f32 %v2573, %v2574
        %v2576 = vrot.slane %v2575, 1
        %v2577 = vadd.f32 %v2575, %v2576
        %v2578 = vsel %vm1011, %v2214, 0.0
        %v2579 = vrot.slane %v2578, 4
        %v2580 = vadd.f32 %v2578, %v2579
        %v2581 = vrot.slane %v2580, 2
        %v2582 = vadd.f32 %v2580, %v2581
        %v2583 = vrot.slane %v2582, 1
        %v2584 = vadd.f32 %v2582, %v2583
        %v2585 = vsel %vm1011, %v2215, 0.0
        %v2586 = vrot.slane %v2585, 4
        %v2587 = vadd.f32 %v2585, %v2586
        %v2588 = vrot.slane %v2587, 2
        %v2589 = vadd.f32 %v2587, %v2588
        %v2590 = vrot.slane %v2589, 1
        %v2591 = vadd.f32 %v2589, %v2590
        %v2592 = vsel %vm1011, %v2216, 0.0
        %v2593 = vrot.slane %v2592, 4
        %v2594 = vadd.f32 %v2592, %v2593
        %v2595 = vrot.slane %v2594, 2
        %v2596 = vadd.f32 %v2594, %v2595
        %v2597 = vrot.slane %v2596, 1
        %v2598 = vadd.f32 %v2596, %v2597
        %v2599 = vsel %vm1011, %v2217, 0.0
        %v2600 = vrot.slane %v2599, 4
        %v2601 = vadd.f32 %v2599, %v2600
        %v2602 = vrot.slane %v2601, 2
        %v2603 = vadd.f32 %v2601, %v2602
        %v2604 = vrot.slane %v2603, 1
        %v2605 = vadd.f32 %v2603, %v2604
        %v2606 = vsel %vm1011, %v2218, 0.0
        %v2607 = vrot.slane %v2606, 4
        %v2608 = vadd.f32 %v2606, %v2607
        %v2609 = vrot.slane %v2608, 2
        %v2610 = vadd.f32 %v2608, %v2609
        %v2611 = vrot.slane %v2610, 1
        %v2612 = vadd.f32 %v2610, %v2611
        %v2613 = vsel %vm1011, %v2219, 0.0
        %v2614 = vrot.slane %v2613, 4
        %v2615 = vadd.f32 %v2613, %v2614
        %v2616 = vrot.slane %v2615, 2
        %v2617 = vadd.f32 %v2615, %v2616
        %v2618 = vrot.slane %v2617, 1
        %v2619 = vadd.f32 %v2617, %v2618
        %v2620 = vsel %vm1011, %v2220, 0.0
        %v2621 = vrot.slane %v2620, 4
        %v2622 = vadd.f32 %v2620, %v2621
        %v2623 = vrot.slane %v2622, 2
        %v2624 = vadd.f32 %v2622, %v2623
        %v2625 = vrot.slane %v2624, 1
        %v2626 = vadd.f32 %v2624, %v2625
        %v2627 = vsel %vm1011, %v2221, 0.0
        %v2628 = vrot.slane %v2627, 4
        %v2629 = vadd.f32 %v2627, %v2628
        %v2630 = vrot.slane %v2629, 2
        %v2631 = vadd.f32 %v2629, %v2630
        %v2632 = vrot.slane %v2631, 1
        %v2633 = vadd.f32 %v2631, %v2632
        %v2634 = vsel %vm1011, %v2222, 0.0
        %v2635 = vrot.slane %v2634, 4
        %v2636 = vadd.f32 %v2634, %v2635
        %v2637 = vrot.slane %v2636, 2
        %v2638 = vadd.f32 %v2636, %v2637
        %v2639 = vrot.slane %v2638, 1
        %v2640 = vadd.f32 %v2638, %v2639
        %v2641 = vsel %vm1011, %v2223, 0.0
        %v2642 = vrot.slane %v2641, 4
        %v2643 = vadd.f32 %v2641, %v2642
        %v2644 = vrot.slane %v2643, 2
        %v2645 = vadd.f32 %v2643, %v2644
        %v2646 = vrot.slane %v2645, 1
        %v2647 = vadd.f32 %v2645, %v2646
        %v2648 = vsel %vm1011, %v2224, 0.0
        %v2649 = vrot.slane %v2648, 4
        %v2650 = vadd.f32 %v2648, %v2649
        %v2651 = vrot.slane %v2650, 2
        %v2652 = vadd.f32 %v2650, %v2651
        %v2653 = vrot.slane %v2652, 1
        %v2654 = vadd.f32 %v2652, %v2653
        %v2655 = vsel %vm1011, %v2225, 0.0
        %v2656 = vrot.slane %v2655, 4
        %v2657 = vadd.f32 %v2655, %v2656
        %v2658 = vrot.slane %v2657, 2
        %v2659 = vadd.f32 %v2657, %v2658
        %v2660 = vrot.slane %v2659, 1
        %v2661 = vadd.f32 %v2659, %v2660
        %v2662 = vsel %vm1011, %v2226, 0.0
        %v2663 = vrot.slane %v2662, 4
        %v2664 = vadd.f32 %v2662, %v2663
        %v2665 = vrot.slane %v2664, 2
        %v2666 = vadd.f32 %v2664, %v2665
        %v2667 = vrot.slane %v2666, 1
        %v2668 = vadd.f32 %v2666, %v2667
        %v2669 = vsel %vm1011, %v2227, 0.0
        %v2670 = vrot.slane %v2669, 4
        %v2671 = vadd.f32 %v2669, %v2670
        %v2672 = vrot.slane %v2671, 2
        %v2673 = vadd.f32 %v2671, %v2672
        %v2674 = vrot.slane %v2673, 1
        %v2675 = vadd.f32 %v2673, %v2674
        %2676 = vset.pattern.permute.xlu0 19
        %2677 = vperm.xlu0 %2676, %v756
        %v2678 = vpop.permute.xlu0 %2677
        %2680 = vset.pattern.permute.xlu0 19
        %2681 = vperm.xlu0 %2680, %v758
        %v2682 = vpop.permute.xlu0 %2681
        %2684 = vset.pattern.permute.xlu0 19
        %2685 = vperm.xlu0 %2684, %v760
        %v2686 = vpop.permute.xlu0 %2685
        %2688 = vset.pattern.permute.xlu0 19
        %2689 = vperm.xlu0 %2688, %v762
        %v2690 = vpop.permute.xlu0 %2689
        %2692 = vset.pattern.permute.xlu0 19
        %2693 = vperm.xlu0 %2692, %v764
        %v2694 = vpop.permute.xlu0 %2693
        %2696 = vset.pattern.permute.xlu0 19
        %2697 = vperm.xlu0 %2696, %v766
        %v2698 = vpop.permute.xlu0 %2697
        %2700 = vset.pattern.permute.xlu0 19
        %2701 = vperm.xlu0 %2700, %v768
        %v2702 = vpop.permute.xlu0 %2701
        %2704 = vset.pattern.permute.xlu0 19
        %2705 = vperm.xlu0 %2704, %v770
        %v2706 = vpop.permute.xlu0 %2705
        %2708 = vset.pattern.permute.xlu0 19
        %2709 = vperm.xlu0 %2708, %v772
        %v2710 = vpop.permute.xlu0 %2709
        %2712 = vset.pattern.permute.xlu0 19
        %2713 = vperm.xlu0 %2712, %v774
        %v2714 = vpop.permute.xlu0 %2713
        %2716 = vset.pattern.permute.xlu0 19
        %2717 = vperm.xlu0 %2716, %v776
        %v2718 = vpop.permute.xlu0 %2717
        %2720 = vset.pattern.permute.xlu0 19
        %2721 = vperm.xlu0 %2720, %v778
        %v2722 = vpop.permute.xlu0 %2721
        %2724 = vset.pattern.permute.xlu0 19
        %2725 = vperm.xlu0 %2724, %v780
        %v2726 = vpop.permute.xlu0 %2725
        %2728 = vset.pattern.permute.xlu0 19
        %2729 = vperm.xlu0 %2728, %v782
        %v2730 = vpop.permute.xlu0 %2729
        %2732 = vset.pattern.permute.xlu0 19
        %2733 = vperm.xlu0 %2732, %v784
        %v2734 = vpop.permute.xlu0 %2733
        %2736 = vset.pattern.permute.xlu0 19
        %2737 = vperm.xlu0 %2736, %v786
        %v2738 = vpop.permute.xlu0 %2737
        %2740 = vset.pattern.permute.xlu0 19
        %2741 = vperm.xlu0 %2740, %v788
        %v2742 = vpop.permute.xlu0 %2741
        %2744 = vset.pattern.permute.xlu0 19
        %2745 = vperm.xlu0 %2744, %v790
        %v2746 = vpop.permute.xlu0 %2745
        %2748 = vset.pattern.permute.xlu0 19
        %2749 = vperm.xlu0 %2748, %v792
        %v2750 = vpop.permute.xlu0 %2749
        %2752 = vset.pattern.permute.xlu0 19
        %2753 = vperm.xlu0 %2752, %v794
        %v2754 = vpop.permute.xlu0 %2753
        %2756 = vset.pattern.permute.xlu0 19
        %2757 = vperm.xlu0 %2756, %v796
        %v2758 = vpop.permute.xlu0 %2757
        %2760 = vset.pattern.permute.xlu0 19
        %2761 = vperm.xlu0 %2760, %v798
        %v2762 = vpop.permute.xlu0 %2761
        %2764 = vset.pattern.permute.xlu0 19
        %2765 = vperm.xlu0 %2764, %v800
        %v2766 = vpop.permute.xlu0 %2765
        %2768 = vset.pattern.permute.xlu0 19
        %2769 = vperm.xlu0 %2768, %v802
        %v2770 = vpop.permute.xlu0 %2769
        %2772 = vset.pattern.permute.xlu0 19
        %2773 = vperm.xlu0 %2772, %v804
        %v2774 = vpop.permute.xlu0 %2773
        %2776 = vset.pattern.permute.xlu0 19
        %2777 = vperm.xlu0 %2776, %v806
        %v2778 = vpop.permute.xlu0 %2777
        %2780 = vset.pattern.permute.xlu0 19
        %2781 = vperm.xlu0 %2780, %v808
        %v2782 = vpop.permute.xlu0 %2781
        %2784 = vset.pattern.permute.xlu0 19
        %2785 = vperm.xlu0 %2784, %v810
        %v2786 = vpop.permute.xlu0 %2785
        %2788 = vset.pattern.permute.xlu0 19
        %2789 = vperm.xlu0 %2788, %v812
        %v2790 = vpop.permute.xlu0 %2789
        %2792 = vset.pattern.permute.xlu0 19
        %2793 = vperm.xlu0 %2792, %v814
        %v2794 = vpop.permute.xlu0 %2793
        %2796 = vset.pattern.permute.xlu0 19
        %2797 = vperm.xlu0 %2796, %v816
        %v2798 = vpop.permute.xlu0 %2797
        %2800 = vset.pattern.permute.xlu0 19
        %2801 = vperm.xlu0 %2800, %v818
        %v2802 = vpop.permute.xlu0 %2801
        %v2804 = vmul.f32 %v533, %v2678
        %v2805 = vmul.f32 %v538, %v2682
        %v2806 = vmul.f32 %v543, %v2686
        %v2807 = vmul.f32 %v548, %v2690
        %v2808 = vmul.f32 %v553, %v2694
        %v2809 = vmul.f32 %v558, %v2698
        %v2810 = vmul.f32 %v563, %v2702
        %v2811 = vmul.f32 %v568, %v2706
        %v2812 = vmul.f32 %v573, %v2710
        %v2813 = vmul.f32 %v578, %v2714
        %v2814 = vmul.f32 %v583, %v2718
        %v2815 = vmul.f32 %v588, %v2722
        %v2816 = vmul.f32 %v593, %v2726
        %v2817 = vmul.f32 %v598, %v2730
        %v2818 = vmul.f32 %v603, %v2734
        %v2819 = vmul.f32 %v608, %v2738
        %v2820 = vmul.f32 %v613, %v2742
        %v2821 = vmul.f32 %v618, %v2746
        %v2822 = vmul.f32 %v623, %v2750
        %v2823 = vmul.f32 %v628, %v2754
        %v2824 = vmul.f32 %v633, %v2758
        %v2825 = vmul.f32 %v638, %v2762
        %v2826 = vmul.f32 %v643, %v2766
        %v2827 = vmul.f32 %v648, %v2770
        %v2828 = vmul.f32 %v653, %v2774
        %v2829 = vmul.f32 %v658, %v2778
        %v2830 = vmul.f32 %v663, %v2782
        %v2831 = vmul.f32 %v668, %v2786
        %v2832 = vmul.f32 %v673, %v2790
        %v2833 = vmul.f32 %v678, %v2794
        %v2834 = vmul.f32 %v683, %v2798
        %v2835 = vmul.f32 %v688, %v2802
        %v2836 = vsel %vm1011, %v2804, -inf
        %v2837 = vrot.slane %v2836, 4
        %v2838 = vmax.f32 %v2836, %v2837
        %v2839 = vrot.slane %v2838, 2
        %v2840 = vmax.f32 %v2838, %v2839
        %v2841 = vrot.slane %v2840, 1
        %v2842 = vmax.f32 %v2840, %v2841
        %v2843 = vsel %vm1011, %v2805, -inf
        %v2844 = vrot.slane %v2843, 4
        %v2845 = vmax.f32 %v2843, %v2844
        %v2846 = vrot.slane %v2845, 2
        %v2847 = vmax.f32 %v2845, %v2846
        %v2848 = vrot.slane %v2847, 1
        %v2849 = vmax.f32 %v2847, %v2848
        %v2850 = vsel %vm1011, %v2806, -inf
        %v2851 = vrot.slane %v2850, 4
        %v2852 = vmax.f32 %v2850, %v2851
        %v2853 = vrot.slane %v2852, 2
        %v2854 = vmax.f32 %v2852, %v2853
        %v2855 = vrot.slane %v2854, 1
        %v2856 = vmax.f32 %v2854, %v2855
        %v2857 = vsel %vm1011, %v2807, -inf
        %v2858 = vrot.slane %v2857, 4
        %v2859 = vmax.f32 %v2857, %v2858
        %v2860 = vrot.slane %v2859, 2
        %v2861 = vmax.f32 %v2859, %v2860
        %v2862 = vrot.slane %v2861, 1
        %v2863 = vmax.f32 %v2861, %v2862
        %v2864 = vsel %vm1011, %v2808, -inf
        %v2865 = vrot.slane %v2864, 4
        %v2866 = vmax.f32 %v2864, %v2865
        %v2867 = vrot.slane %v2866, 2
        %v2868 = vmax.f32 %v2866, %v2867
        %v2869 = vrot.slane %v2868, 1
        %v2870 = vmax.f32 %v2868, %v2869
        %v2871 = vsel %vm1011, %v2809, -inf
        %v2872 = vrot.slane %v2871, 4
        %v2873 = vmax.f32 %v2871, %v2872
        %v2874 = vrot.slane %v2873, 2
        %v2875 = vmax.f32 %v2873, %v2874
        %v2876 = vrot.slane %v2875, 1
        %v2877 = vmax.f32 %v2875, %v2876
        %v2878 = vsel %vm1011, %v2810, -inf
        %v2879 = vrot.slane %v2878, 4
        %v2880 = vmax.f32 %v2878, %v2879
        %v2881 = vrot.slane %v2880, 2
        %v2882 = vmax.f32 %v2880, %v2881
        %v2883 = vrot.slane %v2882, 1
        %v2884 = vmax.f32 %v2882, %v2883
        %v2885 = vsel %vm1011, %v2811, -inf
        %v2886 = vrot.slane %v2885, 4
        %v2887 = vmax.f32 %v2885, %v2886
        %v2888 = vrot.slane %v2887, 2
        %v2889 = vmax.f32 %v2887, %v2888
        %v2890 = vrot.slane %v2889, 1
        %v2891 = vmax.f32 %v2889, %v2890
        %v2892 = vsel %vm1011, %v2812, -inf
        %v2893 = vrot.slane %v2892, 4
        %v2894 = vmax.f32 %v2892, %v2893
        %v2895 = vrot.slane %v2894, 2
        %v2896 = vmax.f32 %v2894, %v2895
        %v2897 = vrot.slane %v2896, 1
        %v2898 = vmax.f32 %v2896, %v2897
        %v2899 = vsel %vm1011, %v2813, -inf
        %v2900 = vrot.slane %v2899, 4
        %v2901 = vmax.f32 %v2899, %v2900
        %v2902 = vrot.slane %v2901, 2
        %v2903 = vmax.f32 %v2901, %v2902
        %v2904 = vrot.slane %v2903, 1
        %v2905 = vmax.f32 %v2903, %v2904
        %v2906 = vsel %vm1011, %v2814, -inf
        %v2907 = vrot.slane %v2906, 4
        %v2908 = vmax.f32 %v2906, %v2907
        %v2909 = vrot.slane %v2908, 2
        %v2910 = vmax.f32 %v2908, %v2909
        %v2911 = vrot.slane %v2910, 1
        %v2912 = vmax.f32 %v2910, %v2911
        %v2913 = vsel %vm1011, %v2815, -inf
        %v2914 = vrot.slane %v2913, 4
        %v2915 = vmax.f32 %v2913, %v2914
        %v2916 = vrot.slane %v2915, 2
        %v2917 = vmax.f32 %v2915, %v2916
        %v2918 = vrot.slane %v2917, 1
        %v2919 = vmax.f32 %v2917, %v2918
        %v2920 = vsel %vm1011, %v2816, -inf
        %v2921 = vrot.slane %v2920, 4
        %v2922 = vmax.f32 %v2920, %v2921
        %v2923 = vrot.slane %v2922, 2
        %v2924 = vmax.f32 %v2922, %v2923
        %v2925 = vrot.slane %v2924, 1
        %v2926 = vmax.f32 %v2924, %v2925
        %v2927 = vsel %vm1011, %v2817, -inf
        %v2928 = vrot.slane %v2927, 4
        %v2929 = vmax.f32 %v2927, %v2928
        %v2930 = vrot.slane %v2929, 2
        %v2931 = vmax.f32 %v2929, %v2930
        %v2932 = vrot.slane %v2931, 1
        %v2933 = vmax.f32 %v2931, %v2932
        %v2934 = vsel %vm1011, %v2818, -inf
        %v2935 = vrot.slane %v2934, 4
        %v2936 = vmax.f32 %v2934, %v2935
        %v2937 = vrot.slane %v2936, 2
        %v2938 = vmax.f32 %v2936, %v2937
        %v2939 = vrot.slane %v2938, 1
        %v2940 = vmax.f32 %v2938, %v2939
        %v2941 = vsel %vm1011, %v2819, -inf
        %v2942 = vrot.slane %v2941, 4
        %v2943 = vmax.f32 %v2941, %v2942
        %v2944 = vrot.slane %v2943, 2
        %v2945 = vmax.f32 %v2943, %v2944
        %v2946 = vrot.slane %v2945, 1
        %v2947 = vmax.f32 %v2945, %v2946
        %v2948 = vsel %vm1011, %v2820, -inf
        %v2949 = vrot.slane %v2948, 4
        %v2950 = vmax.f32 %v2948, %v2949
        %v2951 = vrot.slane %v2950, 2
        %v2952 = vmax.f32 %v2950, %v2951
        %v2953 = vrot.slane %v2952, 1
        %v2954 = vmax.f32 %v2952, %v2953
        %v2955 = vsel %vm1011, %v2821, -inf
        %v2956 = vrot.slane %v2955, 4
        %v2957 = vmax.f32 %v2955, %v2956
        %v2958 = vrot.slane %v2957, 2
        %v2959 = vmax.f32 %v2957, %v2958
        %v2960 = vrot.slane %v2959, 1
        %v2961 = vmax.f32 %v2959, %v2960
        %v2962 = vsel %vm1011, %v2822, -inf
        %v2963 = vrot.slane %v2962, 4
        %v2964 = vmax.f32 %v2962, %v2963
        %v2965 = vrot.slane %v2964, 2
        %v2966 = vmax.f32 %v2964, %v2965
        %v2967 = vrot.slane %v2966, 1
        %v2968 = vmax.f32 %v2966, %v2967
        %v2969 = vsel %vm1011, %v2823, -inf
        %v2970 = vrot.slane %v2969, 4
        %v2971 = vmax.f32 %v2969, %v2970
        %v2972 = vrot.slane %v2971, 2
        %v2973 = vmax.f32 %v2971, %v2972
        %v2974 = vrot.slane %v2973, 1
        %v2975 = vmax.f32 %v2973, %v2974
        %v2976 = vsel %vm1011, %v2824, -inf
        %v2977 = vrot.slane %v2976, 4
        %v2978 = vmax.f32 %v2976, %v2977
        %v2979 = vrot.slane %v2978, 2
        %v2980 = vmax.f32 %v2978, %v2979
        %v2981 = vrot.slane %v2980, 1
        %v2982 = vmax.f32 %v2980, %v2981
        %v2983 = vsel %vm1011, %v2825, -inf
        %v2984 = vrot.slane %v2983, 4
        %v2985 = vmax.f32 %v2983, %v2984
        %v2986 = vrot.slane %v2985, 2
        %v2987 = vmax.f32 %v2985, %v2986
        %v2988 = vrot.slane %v2987, 1
        %v2989 = vmax.f32 %v2987, %v2988
        %v2990 = vsel %vm1011, %v2826, -inf
        %v2991 = vrot.slane %v2990, 4
        %v2992 = vmax.f32 %v2990, %v2991
        %v2993 = vrot.slane %v2992, 2
        %v2994 = vmax.f32 %v2992, %v2993
        %v2995 = vrot.slane %v2994, 1
        %v2996 = vmax.f32 %v2994, %v2995
        %v2997 = vsel %vm1011, %v2827, -inf
        %v2998 = vrot.slane %v2997, 4
        %v2999 = vmax.f32 %v2997, %v2998
        %v3000 = vrot.slane %v2999, 2
        %v3001 = vmax.f32 %v2999, %v3000
        %v3002 = vrot.slane %v3001, 1
        %v3003 = vmax.f32 %v3001, %v3002
        %v3004 = vsel %vm1011, %v2828, -inf
        %v3005 = vrot.slane %v3004, 4
        %v3006 = vmax.f32 %v3004, %v3005
        %v3007 = vrot.slane %v3006, 2
        %v3008 = vmax.f32 %v3006, %v3007
        %v3009 = vrot.slane %v3008, 1
        %v3010 = vmax.f32 %v3008, %v3009
        %v3011 = vsel %vm1011, %v2829, -inf
        %v3012 = vrot.slane %v3011, 4
        %v3013 = vmax.f32 %v3011, %v3012
        %v3014 = vrot.slane %v3013, 2
        %v3015 = vmax.f32 %v3013, %v3014
        %v3016 = vrot.slane %v3015, 1
        %v3017 = vmax.f32 %v3015, %v3016
        %v3018 = vsel %vm1011, %v2830, -inf
        %v3019 = vrot.slane %v3018, 4
        %v3020 = vmax.f32 %v3018, %v3019
        %v3021 = vrot.slane %v3020, 2
        %v3022 = vmax.f32 %v3020, %v3021
        %v3023 = vrot.slane %v3022, 1
        %v3024 = vmax.f32 %v3022, %v3023
        %v3025 = vsel %vm1011, %v2831, -inf
        %v3026 = vrot.slane %v3025, 4
        %v3027 = vmax.f32 %v3025, %v3026
        %v3028 = vrot.slane %v3027, 2
        %v3029 = vmax.f32 %v3027, %v3028
        %v3030 = vrot.slane %v3029, 1
        %v3031 = vmax.f32 %v3029, %v3030
        %v3032 = vsel %vm1011, %v2832, -inf
        %v3033 = vrot.slane %v3032, 4
        %v3034 = vmax.f32 %v3032, %v3033
        %v3035 = vrot.slane %v3034, 2
        %v3036 = vmax.f32 %v3034, %v3035
        %v3037 = vrot.slane %v3036, 1
        %v3038 = vmax.f32 %v3036, %v3037
        %v3039 = vsel %vm1011, %v2833, -inf
        %v3040 = vrot.slane %v3039, 4
        %v3041 = vmax.f32 %v3039, %v3040
        %v3042 = vrot.slane %v3041, 2
        %v3043 = vmax.f32 %v3041, %v3042
        %v3044 = vrot.slane %v3043, 1
        %v3045 = vmax.f32 %v3043, %v3044
        %v3046 = vsel %vm1011, %v2834, -inf
        %v3047 = vrot.slane %v3046, 4
        %v3048 = vmax.f32 %v3046, %v3047
        %v3049 = vrot.slane %v3048, 2
        %v3050 = vmax.f32 %v3048, %v3049
        %v3051 = vrot.slane %v3050, 1
        %v3052 = vmax.f32 %v3050, %v3051
        %v3053 = vsel %vm1011, %v2835, -inf
        %v3054 = vrot.slane %v3053, 4
        %v3055 = vmax.f32 %v3053, %v3054
        %v3056 = vrot.slane %v3055, 2
        %v3057 = vmax.f32 %v3055, %v3056
        %v3058 = vrot.slane %v3057, 1
        %v3059 = vmax.f32 %v3057, %v3058
        %v3060 = vsel %vm1011, %v2804, 0.0
        %v3061 = vrot.slane %v3060, 4
        %v3062 = vadd.f32 %v3060, %v3061
        %v3063 = vrot.slane %v3062, 2
        %v3064 = vadd.f32 %v3062, %v3063
        %v3065 = vrot.slane %v3064, 1
        %v3066 = vadd.f32 %v3064, %v3065
        %v3067 = vsel %vm1011, %v2805, 0.0
        %v3068 = vrot.slane %v3067, 4
        %v3069 = vadd.f32 %v3067, %v3068
        %v3070 = vrot.slane %v3069, 2
        %v3071 = vadd.f32 %v3069, %v3070
        %v3072 = vrot.slane %v3071, 1
        %v3073 = vadd.f32 %v3071, %v3072
        %v3074 = vsel %vm1011, %v2806, 0.0
        %v3075 = vrot.slane %v3074, 4
        %v3076 = vadd.f32 %v3074, %v3075
        %v3077 = vrot.slane %v3076, 2
        %v3078 = vadd.f32 %v3076, %v3077
        %v3079 = vrot.slane %v3078, 1
        %v3080 = vadd.f32 %v3078, %v3079
        %v3081 = vsel %vm1011, %v2807, 0.0
        %v3082 = vrot.slane %v3081, 4
        %v3083 = vadd.f32 %v3081, %v3082
        %v3084 = vrot.slane %v3083, 2
        %v3085 = vadd.f32 %v3083, %v3084
        %v3086 = vrot.slane %v3085, 1
        %v3087 = vadd.f32 %v3085, %v3086
        %v3088 = vsel %vm1011, %v2808, 0.0
        %v3089 = vrot.slane %v3088, 4
        %v3090 = vadd.f32 %v3088, %v3089
        %v3091 = vrot.slane %v3090, 2
        %v3092 = vadd.f32 %v3090, %v3091
        %v3093 = vrot.slane %v3092, 1
        %v3094 = vadd.f32 %v3092, %v3093
        %v3095 = vsel %vm1011, %v2809, 0.0
        %v3096 = vrot.slane %v3095, 4
        %v3097 = vadd.f32 %v3095, %v3096
        %v3098 = vrot.slane %v3097, 2
        %v3099 = vadd.f32 %v3097, %v3098
        %v3100 = vrot.slane %v3099, 1
        %v3101 = vadd.f32 %v3099, %v3100
        %v3102 = vsel %vm1011, %v2810, 0.0
        %v3103 = vrot.slane %v3102, 4
        %v3104 = vadd.f32 %v3102, %v3103
        %v3105 = vrot.slane %v3104, 2
        %v3106 = vadd.f32 %v3104, %v3105
        %v3107 = vrot.slane %v3106, 1
        %v3108 = vadd.f32 %v3106, %v3107
        %v3109 = vsel %vm1011, %v2811, 0.0
        %v3110 = vrot.slane %v3109, 4
        %v3111 = vadd.f32 %v3109, %v3110
        %v3112 = vrot.slane %v3111, 2
        %v3113 = vadd.f32 %v3111, %v3112
        %v3114 = vrot.slane %v3113, 1
        %v3115 = vadd.f32 %v3113, %v3114
        %v3116 = vsel %vm1011, %v2812, 0.0
        %v3117 = vrot.slane %v3116, 4
        %v3118 = vadd.f32 %v3116, %v3117
        %v3119 = vrot.slane %v3118, 2
        %v3120 = vadd.f32 %v3118, %v3119
        %v3121 = vrot.slane %v3120, 1
        %v3122 = vadd.f32 %v3120, %v3121
        %v3123 = vsel %vm1011, %v2813, 0.0
        %v3124 = vrot.slane %v3123, 4
        %v3125 = vadd.f32 %v3123, %v3124
        %v3126 = vrot.slane %v3125, 2
        %v3127 = vadd.f32 %v3125, %v3126
        %v3128 = vrot.slane %v3127, 1
        %v3129 = vadd.f32 %v3127, %v3128
        %v3130 = vsel %vm1011, %v2814, 0.0
        %v3131 = vrot.slane %v3130, 4
        %v3132 = vadd.f32 %v3130, %v3131
        %v3133 = vrot.slane %v3132, 2
        %v3134 = vadd.f32 %v3132, %v3133
        %v3135 = vrot.slane %v3134, 1
        %v3136 = vadd.f32 %v3134, %v3135
        %v3137 = vsel %vm1011, %v2815, 0.0
        %v3138 = vrot.slane %v3137, 4
        %v3139 = vadd.f32 %v3137, %v3138
        %v3140 = vrot.slane %v3139, 2
        %v3141 = vadd.f32 %v3139, %v3140
        %v3142 = vrot.slane %v3141, 1
        %v3143 = vadd.f32 %v3141, %v3142
        %v3144 = vsel %vm1011, %v2816, 0.0
        %v3145 = vrot.slane %v3144, 4
        %v3146 = vadd.f32 %v3144, %v3145
        %v3147 = vrot.slane %v3146, 2
        %v3148 = vadd.f32 %v3146, %v3147
        %v3149 = vrot.slane %v3148, 1
        %v3150 = vadd.f32 %v3148, %v3149
        %v3151 = vsel %vm1011, %v2817, 0.0
        %v3152 = vrot.slane %v3151, 4
        %v3153 = vadd.f32 %v3151, %v3152
        %v3154 = vrot.slane %v3153, 2
        %v3155 = vadd.f32 %v3153, %v3154
        %v3156 = vrot.slane %v3155, 1
        %v3157 = vadd.f32 %v3155, %v3156
        %v3158 = vsel %vm1011, %v2818, 0.0
        %v3159 = vrot.slane %v3158, 4
        %v3160 = vadd.f32 %v3158, %v3159
        %v3161 = vrot.slane %v3160, 2
        %v3162 = vadd.f32 %v3160, %v3161
        %v3163 = vrot.slane %v3162, 1
        %v3164 = vadd.f32 %v3162, %v3163
        %v3165 = vsel %vm1011, %v2819, 0.0
        %v3166 = vrot.slane %v3165, 4
        %v3167 = vadd.f32 %v3165, %v3166
        %v3168 = vrot.slane %v3167, 2
        %v3169 = vadd.f32 %v3167, %v3168
        %v3170 = vrot.slane %v3169, 1
        %v3171 = vadd.f32 %v3169, %v3170
        %v3172 = vsel %vm1011, %v2820, 0.0
        %v3173 = vrot.slane %v3172, 4
        %v3174 = vadd.f32 %v3172, %v3173
        %v3175 = vrot.slane %v3174, 2
        %v3176 = vadd.f32 %v3174, %v3175
        %v3177 = vrot.slane %v3176, 1
        %v3178 = vadd.f32 %v3176, %v3177
        %v3179 = vsel %vm1011, %v2821, 0.0
        %v3180 = vrot.slane %v3179, 4
        %v3181 = vadd.f32 %v3179, %v3180
        %v3182 = vrot.slane %v3181, 2
        %v3183 = vadd.f32 %v3181, %v3182
        %v3184 = vrot.slane %v3183, 1
        %v3185 = vadd.f32 %v3183, %v3184
        %v3186 = vsel %vm1011, %v2822, 0.0
        %v3187 = vrot.slane %v3186, 4
        %v3188 = vadd.f32 %v3186, %v3187
        %v3189 = vrot.slane %v3188, 2
        %v3190 = vadd.f32 %v3188, %v3189
        %v3191 = vrot.slane %v3190, 1
        %v3192 = vadd.f32 %v3190, %v3191
        %v3193 = vsel %vm1011, %v2823, 0.0
        %v3194 = vrot.slane %v3193, 4
        %v3195 = vadd.f32 %v3193, %v3194
        %v3196 = vrot.slane %v3195, 2
        %v3197 = vadd.f32 %v3195, %v3196
        %v3198 = vrot.slane %v3197, 1
        %v3199 = vadd.f32 %v3197, %v3198
        %v3200 = vsel %vm1011, %v2824, 0.0
        %v3201 = vrot.slane %v3200, 4
        %v3202 = vadd.f32 %v3200, %v3201
        %v3203 = vrot.slane %v3202, 2
        %v3204 = vadd.f32 %v3202, %v3203
        %v3205 = vrot.slane %v3204, 1
        %v3206 = vadd.f32 %v3204, %v3205
        %v3207 = vsel %vm1011, %v2825, 0.0
        %v3208 = vrot.slane %v3207, 4
        %v3209 = vadd.f32 %v3207, %v3208
        %v3210 = vrot.slane %v3209, 2
        %v3211 = vadd.f32 %v3209, %v3210
        %v3212 = vrot.slane %v3211, 1
        %v3213 = vadd.f32 %v3211, %v3212
        %v3214 = vsel %vm1011, %v2826, 0.0
        %v3215 = vrot.slane %v3214, 4
        %v3216 = vadd.f32 %v3214, %v3215
        %v3217 = vrot.slane %v3216, 2
        %v3218 = vadd.f32 %v3216, %v3217
        %v3219 = vrot.slane %v3218, 1
        %v3220 = vadd.f32 %v3218, %v3219
        %v3221 = vsel %vm1011, %v2827, 0.0
        %v3222 = vrot.slane %v3221, 4
        %v3223 = vadd.f32 %v3221, %v3222
        %v3224 = vrot.slane %v3223, 2
        %v3225 = vadd.f32 %v3223, %v3224
        %v3226 = vrot.slane %v3225, 1
        %v3227 = vadd.f32 %v3225, %v3226
        %v3228 = vsel %vm1011, %v2828, 0.0
        %v3229 = vrot.slane %v3228, 4
        %v3230 = vadd.f32 %v3228, %v3229
        %v3231 = vrot.slane %v3230, 2
        %v3232 = vadd.f32 %v3230, %v3231
        %v3233 = vrot.slane %v3232, 1
        %v3234 = vadd.f32 %v3232, %v3233
        %v3235 = vsel %vm1011, %v2829, 0.0
        %v3236 = vrot.slane %v3235, 4
        %v3237 = vadd.f32 %v3235, %v3236
        %v3238 = vrot.slane %v3237, 2
        %v3239 = vadd.f32 %v3237, %v3238
        %v3240 = vrot.slane %v3239, 1
        %v3241 = vadd.f32 %v3239, %v3240
        %v3242 = vsel %vm1011, %v2830, 0.0
        %v3243 = vrot.slane %v3242, 4
        %v3244 = vadd.f32 %v3242, %v3243
        %v3245 = vrot.slane %v3244, 2
        %v3246 = vadd.f32 %v3244, %v3245
        %v3247 = vrot.slane %v3246, 1
        %v3248 = vadd.f32 %v3246, %v3247
        %v3249 = vsel %vm1011, %v2831, 0.0
        %v3250 = vrot.slane %v3249, 4
        %v3251 = vadd.f32 %v3249, %v3250
        %v3252 = vrot.slane %v3251, 2
        %v3253 = vadd.f32 %v3251, %v3252
        %v3254 = vrot.slane %v3253, 1
        %v3255 = vadd.f32 %v3253, %v3254
        %v3256 = vsel %vm1011, %v2832, 0.0
        %v3257 = vrot.slane %v3256, 4
        %v3258 = vadd.f32 %v3256, %v3257
        %v3259 = vrot.slane %v3258, 2
        %v3260 = vadd.f32 %v3258, %v3259
        %v3261 = vrot.slane %v3260, 1
        %v3262 = vadd.f32 %v3260, %v3261
        %v3263 = vsel %vm1011, %v2833, 0.0
        %v3264 = vrot.slane %v3263, 4
        %v3265 = vadd.f32 %v3263, %v3264
        %v3266 = vrot.slane %v3265, 2
        %v3267 = vadd.f32 %v3265, %v3266
        %v3268 = vrot.slane %v3267, 1
        %v3269 = vadd.f32 %v3267, %v3268
        %v3270 = vsel %vm1011, %v2834, 0.0
        %v3271 = vrot.slane %v3270, 4
        %v3272 = vadd.f32 %v3270, %v3271
        %v3273 = vrot.slane %v3272, 2
        %v3274 = vadd.f32 %v3272, %v3273
        %v3275 = vrot.slane %v3274, 1
        %v3276 = vadd.f32 %v3274, %v3275
        %v3277 = vsel %vm1011, %v2835, 0.0
        %v3278 = vrot.slane %v3277, 4
        %v3279 = vadd.f32 %v3277, %v3278
        %v3280 = vrot.slane %v3279, 2
        %v3281 = vadd.f32 %v3279, %v3280
        %v3282 = vrot.slane %v3281, 1
        %v3283 = vadd.f32 %v3281, %v3282
        %vm3316 = vcmask 1041409
        %v3317 = vsel %vm3316, %v1025, %v1018
        %vm3318 = vcmask 1042434
        %v3319 = vsel %vm3318, %v1032, %v3317
        %vm3320 = vcmask 1043459
        %v3321 = vsel %vm3320, %v1039, %v3319
        %vm3322 = vcmask 1044484
        %v3323 = vsel %vm3322, %v1046, %v3321
        %vm3324 = vcmask 1045509
        %v3325 = vsel %vm3324, %v1053, %v3323
        %vm3326 = vcmask 1046534
        %v3327 = vsel %vm3326, %v1060, %v3325
        %vm3328 = vcmask 1047559
        %v3329 = vsel %vm3328, %v1067, %v3327
        %v3330 = vsel %vm3316, %v1081, %v1074
        %v3331 = vsel %vm3318, %v1088, %v3330
        %v3332 = vsel %vm3320, %v1095, %v3331
        %v3333 = vsel %vm3322, %v1102, %v3332
        %v3334 = vsel %vm3324, %v1109, %v3333
        %v3335 = vsel %vm3326, %v1116, %v3334
        %v3336 = vsel %vm3328, %v1123, %v3335
        %v3337 = vsel %vm3316, %v1137, %v1130
        %v3338 = vsel %vm3318, %v1144, %v3337
        %v3339 = vsel %vm3320, %v1151, %v3338
        %v3340 = vsel %vm3322, %v1158, %v3339
        %v3341 = vsel %vm3324, %v1165, %v3340
        %v3342 = vsel %vm3326, %v1172, %v3341
        %v3343 = vsel %vm3328, %v1179, %v3342
        %v3344 = vsel %vm3316, %v1193, %v1186
        %v3345 = vsel %vm3318, %v1200, %v3344
        %v3346 = vsel %vm3320, %v1207, %v3345
        %v3347 = vsel %vm3322, %v1214, %v3346
        %v3348 = vsel %vm3324, %v1221, %v3347
        %v3349 = vsel %vm3326, %v1228, %v3348
        %v3350 = vsel %vm3328, %v1235, %v3349
        %v3387 = vsel %vm3316, %v1633, %v1626
        %v3388 = vsel %vm3318, %v1640, %v3387
        %v3389 = vsel %vm3320, %v1647, %v3388
        %v3390 = vsel %vm3322, %v1654, %v3389
        %v3391 = vsel %vm3324, %v1661, %v3390
        %v3392 = vsel %vm3326, %v1668, %v3391
        %v3393 = vsel %vm3328, %v1675, %v3392
        %v3394 = vsel %vm3316, %v1689, %v1682
        %v3395 = vsel %vm3318, %v1696, %v3394
        %v3396 = vsel %vm3320, %v1703, %v3395
        %v3397 = vsel %vm3322, %v1710, %v3396
        %v3398 = vsel %vm3324, %v1717, %v3397
        %v3399 = vsel %vm3326, %v1724, %v3398
        %v3400 = vsel %vm3328, %v1731, %v3399
        %v3401 = vsel %vm3316, %v1745, %v1738
        %v3402 = vsel %vm3318, %v1752, %v3401
        %v3403 = vsel %vm3320, %v1759, %v3402
        %v3404 = vsel %vm3322, %v1766, %v3403
        %v3405 = vsel %vm3324, %v1773, %v3404
        %v3406 = vsel %vm3326, %v1780, %v3405
        %v3407 = vsel %vm3328, %v1787, %v3406
        %v3408 = vsel %vm3316, %v1801, %v1794
        %v3409 = vsel %vm3318, %v1808, %v3408
        %v3410 = vsel %vm3320, %v1815, %v3409
        %v3411 = vsel %vm3322, %v1822, %v3410
        %v3412 = vsel %vm3324, %v1829, %v3411
        %v3413 = vsel %vm3326, %v1836, %v3412
        %v3414 = vsel %vm3328, %v1843, %v3413
        %3415 = vrot.lane.b32.xlu0 %v3393, 16
        %v3416 = vpop.permute.xlu0 %3415
        %3417 = vrot.lane.b32.xlu0 %v3400, 16
        %v3418 = vpop.permute.xlu0 %3417
        %3419 = vrot.lane.b32.xlu0 %v3407, 16
        %v3420 = vpop.permute.xlu0 %3419
        %3421 = vrot.lane.b32.xlu0 %v3414, 16
        %v3422 = vpop.permute.xlu0 %3421
        %v3459 = vsel %vm3316, %v2241, %v2234
        %v3460 = vsel %vm3318, %v2248, %v3459
        %v3461 = vsel %vm3320, %v2255, %v3460
        %v3462 = vsel %vm3322, %v2262, %v3461
        %v3463 = vsel %vm3324, %v2269, %v3462
        %v3464 = vsel %vm3326, %v2276, %v3463
        %v3465 = vsel %vm3328, %v2283, %v3464
        %v3466 = vsel %vm3316, %v2297, %v2290
        %v3467 = vsel %vm3318, %v2304, %v3466
        %v3468 = vsel %vm3320, %v2311, %v3467
        %v3469 = vsel %vm3322, %v2318, %v3468
        %v3470 = vsel %vm3324, %v2325, %v3469
        %v3471 = vsel %vm3326, %v2332, %v3470
        %v3472 = vsel %vm3328, %v2339, %v3471
        %v3473 = vsel %vm3316, %v2353, %v2346
        %v3474 = vsel %vm3318, %v2360, %v3473
        %v3475 = vsel %vm3320, %v2367, %v3474
        %v3476 = vsel %vm3322, %v2374, %v3475
        %v3477 = vsel %vm3324, %v2381, %v3476
        %v3478 = vsel %vm3326, %v2388, %v3477
        %v3479 = vsel %vm3328, %v2395, %v3478
        %v3480 = vsel %vm3316, %v2409, %v2402
        %v3481 = vsel %vm3318, %v2416, %v3480
        %v3482 = vsel %vm3320, %v2423, %v3481
        %v3483 = vsel %vm3322, %v2430, %v3482
        %v3484 = vsel %vm3324, %v2437, %v3483
        %v3485 = vsel %vm3326, %v2444, %v3484
        %v3486 = vsel %vm3328, %v2451, %v3485
        %3487 = vrot.lane.b32.xlu0 %v3465, 32
        %v3488 = vpop.permute.xlu0 %3487
        %3489 = vrot.lane.b32.xlu0 %v3472, 32
        %v3490 = vpop.permute.xlu0 %3489
        %3491 = vrot.lane.b32.xlu0 %v3479, 32
        %v3492 = vpop.permute.xlu0 %3491
        %3493 = vrot.lane.b32.xlu0 %v3486, 32
        %v3494 = vpop.permute.xlu0 %3493
        %v3531 = vsel %vm3316, %v2849, %v2842
        %v3532 = vsel %vm3318, %v2856, %v3531
        %v3533 = vsel %vm3320, %v2863, %v3532
        %v3534 = vsel %vm3322, %v2870, %v3533
        %v3535 = vsel %vm3324, %v2877, %v3534
        %v3536 = vsel %vm3326, %v2884, %v3535
        %v3537 = vsel %vm3328, %v2891, %v3536
        %v3538 = vsel %vm3316, %v2905, %v2898
        %v3539 = vsel %vm3318, %v2912, %v3538
        %v3540 = vsel %vm3320, %v2919, %v3539
        %v3541 = vsel %vm3322, %v2926, %v3540
        %v3542 = vsel %vm3324, %v2933, %v3541
        %v3543 = vsel %vm3326, %v2940, %v3542
        %v3544 = vsel %vm3328, %v2947, %v3543
        %v3545 = vsel %vm3316, %v2961, %v2954
        %v3546 = vsel %vm3318, %v2968, %v3545
        %v3547 = vsel %vm3320, %v2975, %v3546
        %v3548 = vsel %vm3322, %v2982, %v3547
        %v3549 = vsel %vm3324, %v2989, %v3548
        %v3550 = vsel %vm3326, %v2996, %v3549
        %v3551 = vsel %vm3328, %v3003, %v3550
        %v3552 = vsel %vm3316, %v3017, %v3010
        %v3553 = vsel %vm3318, %v3024, %v3552
        %v3554 = vsel %vm3320, %v3031, %v3553
        %v3555 = vsel %vm3322, %v3038, %v3554
        %v3556 = vsel %vm3324, %v3045, %v3555
        %v3557 = vsel %vm3326, %v3052, %v3556
        %v3558 = vsel %vm3328, %v3059, %v3557
        %3559 = vrot.lane.b32.xlu0 %v3537, 48
        %v3560 = vpop.permute.xlu0 %3559
        %3561 = vrot.lane.b32.xlu0 %v3544, 48
        %v3562 = vpop.permute.xlu0 %3561
        %3563 = vrot.lane.b32.xlu0 %v3551, 48
        %v3564 = vpop.permute.xlu0 %3563
        %3565 = vrot.lane.b32.xlu0 %v3558, 48
        %v3566 = vpop.permute.xlu0 %3565
        %v3571 = vsel %vm1011, %v3329, %v3416
        %v3572 = vsel %vm1011, %v3336, %v3418
        %v3573 = vsel %vm1011, %v3343, %v3420
        %v3574 = vsel %vm1011, %v3350, %v3422
        %vm3575 = vcmask 261120
        %v3576 = vsel %vm3575, %v3571, %v3488
        %v3577 = vsel %vm3575, %v3572, %v3490
        %v3578 = vsel %vm3575, %v3573, %v3492
        %v3579 = vsel %vm3575, %v3574, %v3494
        %vm3580 = vcmask 392192
        %v3581 = vsel %vm3580, %v3576, %v3560
        %v3582 = vsel %vm3580, %v3577, %v3562
        %v3583 = vsel %vm3580, %v3578, %v3564
        %v3584 = vsel %vm3580, %v3579, %v3566
        %v3617 = vsel %vm3316, %v1249, %v1242
        %v3618 = vsel %vm3318, %v1256, %v3617
        %v3619 = vsel %vm3320, %v1263, %v3618
        %v3620 = vsel %vm3322, %v1270, %v3619
        %v3621 = vsel %vm3324, %v1277, %v3620
        %v3622 = vsel %vm3326, %v1284, %v3621
        %v3623 = vsel %vm3328, %v1291, %v3622
        %v3624 = vsel %vm3316, %v1305, %v1298
        %v3625 = vsel %vm3318, %v1312, %v3624
        %v3626 = vsel %vm3320, %v1319, %v3625
        %v3627 = vsel %vm3322, %v1326, %v3626
        %v3628 = vsel %vm3324, %v1333, %v3627
        %v3629 = vsel %vm3326, %v1340, %v3628
        %v3630 = vsel %vm3328, %v1347, %v3629
        %v3631 = vsel %vm3316, %v1361, %v1354
        %v3632 = vsel %vm3318, %v1368, %v3631
        %v3633 = vsel %vm3320, %v1375, %v3632
        %v3634 = vsel %vm3322, %v1382, %v3633
        %v3635 = vsel %vm3324, %v1389, %v3634
        %v3636 = vsel %vm3326, %v1396, %v3635
        %v3637 = vsel %vm3328, %v1403, %v3636
        %v3638 = vsel %vm3316, %v1417, %v1410
        %v3639 = vsel %vm3318, %v1424, %v3638
        %v3640 = vsel %vm3320, %v1431, %v3639
        %v3641 = vsel %vm3322, %v1438, %v3640
        %v3642 = vsel %vm3324, %v1445, %v3641
        %v3643 = vsel %vm3326, %v1452, %v3642
        %v3644 = vsel %vm3328, %v1459, %v3643
        %v3681 = vsel %vm3316, %v1857, %v1850
        %v3682 = vsel %vm3318, %v1864, %v3681
        %v3683 = vsel %vm3320, %v1871, %v3682
        %v3684 = vsel %vm3322, %v1878, %v3683
        %v3685 = vsel %vm3324, %v1885, %v3684
        %v3686 = vsel %vm3326, %v1892, %v3685
        %v3687 = vsel %vm3328, %v1899, %v3686
        %v3688 = vsel %vm3316, %v1913, %v1906
        %v3689 = vsel %vm3318, %v1920, %v3688
        %v3690 = vsel %vm3320, %v1927, %v3689
        %v3691 = vsel %vm3322, %v1934, %v3690
        %v3692 = vsel %vm3324, %v1941, %v3691
        %v3693 = vsel %vm3326, %v1948, %v3692
        %v3694 = vsel %vm3328, %v1955, %v3693
        %v3695 = vsel %vm3316, %v1969, %v1962
        %v3696 = vsel %vm3318, %v1976, %v3695
        %v3697 = vsel %vm3320, %v1983, %v3696
        %v3698 = vsel %vm3322, %v1990, %v3697
        %v3699 = vsel %vm3324, %v1997, %v3698
        %v3700 = vsel %vm3326, %v2004, %v3699
        %v3701 = vsel %vm3328, %v2011, %v3700
        %v3702 = vsel %vm3316, %v2025, %v2018
        %v3703 = vsel %vm3318, %v2032, %v3702
        %v3704 = vsel %vm3320, %v2039, %v3703
        %v3705 = vsel %vm3322, %v2046, %v3704
        %v3706 = vsel %vm3324, %v2053, %v3705
        %v3707 = vsel %vm3326, %v2060, %v3706
        %v3708 = vsel %vm3328, %v2067, %v3707
        %3709 = vrot.lane.b32.xlu0 %v3687, 16
        %v3710 = vpop.permute.xlu0 %3709
        %3711 = vrot.lane.b32.xlu0 %v3694, 16
        %v3712 = vpop.permute.xlu0 %3711
        %3713 = vrot.lane.b32.xlu0 %v3701, 16
        %v3714 = vpop.permute.xlu0 %3713
        %3715 = vrot.lane.b32.xlu0 %v3708, 16
        %v3716 = vpop.permute.xlu0 %3715
        %v3753 = vsel %vm3316, %v2465, %v2458
        %v3754 = vsel %vm3318, %v2472, %v3753
        %v3755 = vsel %vm3320, %v2479, %v3754
        %v3756 = vsel %vm3322, %v2486, %v3755
        %v3757 = vsel %vm3324, %v2493, %v3756
        %v3758 = vsel %vm3326, %v2500, %v3757
        %v3759 = vsel %vm3328, %v2507, %v3758
        %v3760 = vsel %vm3316, %v2521, %v2514
        %v3761 = vsel %vm3318, %v2528, %v3760
        %v3762 = vsel %vm3320, %v2535, %v3761
        %v3763 = vsel %vm3322, %v2542, %v3762
        %v3764 = vsel %vm3324, %v2549, %v3763
        %v3765 = vsel %vm3326, %v2556, %v3764
        %v3766 = vsel %vm3328, %v2563, %v3765
        %v3767 = vsel %vm3316, %v2577, %v2570
        %v3768 = vsel %vm3318, %v2584, %v3767
        %v3769 = vsel %vm3320, %v2591, %v3768
        %v3770 = vsel %vm3322, %v2598, %v3769
        %v3771 = vsel %vm3324, %v2605, %v3770
        %v3772 = vsel %vm3326, %v2612, %v3771
        %v3773 = vsel %vm3328, %v2619, %v3772
        %v3774 = vsel %vm3316, %v2633, %v2626
        %v3775 = vsel %vm3318, %v2640, %v3774
        %v3776 = vsel %vm3320, %v2647, %v3775
        %v3777 = vsel %vm3322, %v2654, %v3776
        %v3778 = vsel %vm3324, %v2661, %v3777
        %v3779 = vsel %vm3326, %v2668, %v3778
        %v3780 = vsel %vm3328, %v2675, %v3779
        %3781 = vrot.lane.b32.xlu0 %v3759, 32
        %v3782 = vpop.permute.xlu0 %3781
        %3783 = vrot.lane.b32.xlu0 %v3766, 32
        %v3784 = vpop.permute.xlu0 %3783
        %3785 = vrot.lane.b32.xlu0 %v3773, 32
        %v3786 = vpop.permute.xlu0 %3785
        %3787 = vrot.lane.b32.xlu0 %v3780, 32
        %v3788 = vpop.permute.xlu0 %3787
        %v3825 = vsel %vm3316, %v3073, %v3066
        %v3826 = vsel %vm3318, %v3080, %v3825
        %v3827 = vsel %vm3320, %v3087, %v3826
        %v3828 = vsel %vm3322, %v3094, %v3827
        %v3829 = vsel %vm3324, %v3101, %v3828
        %v3830 = vsel %vm3326, %v3108, %v3829
        %v3831 = vsel %vm3328, %v3115, %v3830
        %v3832 = vsel %vm3316, %v3129, %v3122
        %v3833 = vsel %vm3318, %v3136, %v3832
        %v3834 = vsel %vm3320, %v3143, %v3833
        %v3835 = vsel %vm3322, %v3150, %v3834
        %v3836 = vsel %vm3324, %v3157, %v3835
        %v3837 = vsel %vm3326, %v3164, %v3836
        %v3838 = vsel %vm3328, %v3171, %v3837
        %v3839 = vsel %vm3316, %v3185, %v3178
        %v3840 = vsel %vm3318, %v3192, %v3839
        %v3841 = vsel %vm3320, %v3199, %v3840
        %v3842 = vsel %vm3322, %v3206, %v3841
        %v3843 = vsel %vm3324, %v3213, %v3842
        %v3844 = vsel %vm3326, %v3220, %v3843
        %v3845 = vsel %vm3328, %v3227, %v3844
        %v3846 = vsel %vm3316, %v3241, %v3234
        %v3847 = vsel %vm3318, %v3248, %v3846
        %v3848 = vsel %vm3320, %v3255, %v3847
        %v3849 = vsel %vm3322, %v3262, %v3848
        %v3850 = vsel %vm3324, %v3269, %v3849
        %v3851 = vsel %vm3326, %v3276, %v3850
        %v3852 = vsel %vm3328, %v3283, %v3851
        %3853 = vrot.lane.b32.xlu0 %v3831, 48
        %v3854 = vpop.permute.xlu0 %3853
        %3855 = vrot.lane.b32.xlu0 %v3838, 48
        %v3856 = vpop.permute.xlu0 %3855
        %3857 = vrot.lane.b32.xlu0 %v3845, 48
        %v3858 = vpop.permute.xlu0 %3857
        %3859 = vrot.lane.b32.xlu0 %v3852, 48
        %v3860 = vpop.permute.xlu0 %3859
        %v3865 = vsel %vm1011, %v3623, %v3710
        %v3866 = vsel %vm1011, %v3630, %v3712
        %v3867 = vsel %vm1011, %v3637, %v3714
        %v3868 = vsel %vm1011, %v3644, %v3716
        %v3869 = vsel %vm3575, %v3865, %v3782
        %v3870 = vsel %vm3575, %v3866, %v3784
        %v3871 = vsel %vm3575, %v3867, %v3786
        %v3872 = vsel %vm3575, %v3868, %v3788
        %v3873 = vsel %vm3580, %v3869, %v3854
        %v3874 = vsel %vm3580, %v3870, %v3856
        %v3875 = vsel %vm3580, %v3871, %v3858
        %v3876 = vsel %vm3580, %v3872, %v3860
        %v3877 = vmul.f32 %v3873, 0.125
        %v3878 = vmul.f32 %v3874, 0.125
        %v3879 = vmul.f32 %v3875, 0.125
        %v3880 = vmul.f32 %v3876, 0.125
        %v3881 = vld [vmem:[%s5] sm:$0xff]
        %v3882 = vld [vmem:[%s5 + $0x8] sm:$0xff]
        %v3883 = vld [vmem:[%s5 + $0x10] sm:$0xff]
        %v3884 = vld [vmem:[%s5 + $0x18] sm:$0xff]
        %v3885 = vld [vmem:[%s5 + $0x20] sm:$0xff]
        %v3886 = vld [vmem:[%s5 + $0x28] sm:$0xff]
        %v3887 = vld [vmem:[%s5 + $0x30] sm:$0xff]
        %v3888 = vld [vmem:[%s5 + $0x38] sm:$0xff]
        %v3889 = vld [vmem:[%s6] sm:$0xff]
        %v3890 = vld [vmem:[%s6 + $0x8] sm:$0xff]
        %v3891 = vld [vmem:[%s6 + $0x10] sm:$0xff]
        %v3892 = vld [vmem:[%s6 + $0x18] sm:$0xff]
        %v3893 = vld [vmem:[%s6 + $0x20] sm:$0xff]
        %v3894 = vld [vmem:[%s6 + $0x28] sm:$0xff]
        %v3895 = vld [vmem:[%s6 + $0x30] sm:$0xff]
        %v3896 = vld [vmem:[%s6 + $0x38] sm:$0xff]
        %vm3897 = vcmask 523264
        %v3899 = vsel %vm3897, %v3877, 0
        %v3902 = vsel %vm3897, %v3878, 0
        %v3905 = vsel %vm3897, %v3879, 0
        %v3908 = vsel %vm3897, %v3880, 0
        %3910 = vmatprep.subr.mxu0 0.0
        %3911 = vmatpush1.msra.mxu0 %v3889
        %3912 = vmatprep.subr.mxu0 0.0
        %3913 = vmatpush1.msra.mxu0 %v3890
        %3914 = vmatprep.subr.mxu0 0.0
        %3915 = vmatpush1.msra.mxu0 %v3891
        %3916 = vmatprep.subr.mxu0 0.0
        %3917 = vmatpush1.msra.mxu0 %v3892
        %3918 = vmatprep.subr.mxu0 0.0
        %3919 = vmatpush1.msra.mxu0 %v3893
        %3920 = vmatprep.subr.mxu0 0.0
        %3921 = vmatpush1.msra.mxu0 %v3894
        %3922 = vmatprep.subr.mxu0 0.0
        %3923 = vmatpush1.msra.mxu0 %v3895
        %3924 = vmatprep.subr.mxu0 0.0
        %3925 = vmatpush1.msra.mxu0 %v3896
        %3926 = vmatprep.subr.mxu0 0.0
        %3927 = vmatpush1.msra.mxu0 0.0
        %3928 = vmatprep.subr.mxu0 0.0
        %3929 = vmatpush1.msra.mxu0 0.0
        %3930 = vmatprep.subr.mxu0 0.0
        %3931 = vmatpush1.msra.mxu0 0.0
        %3932 = vmatprep.subr.mxu0 0.0
        %3933 = vmatpush1.msra.mxu0 0.0
        %3934 = vmatprep.subr.mxu0 0.0
        %3935 = vmatpush1.msra.mxu0 0.0
        %3936 = vmatprep.subr.mxu0 0.0
        %3937 = vmatpush1.msra.mxu0 0.0
        %3938 = vmatprep.subr.mxu0 0.0
        %3939 = vmatpush1.msra.mxu0 0.0
        %3940 = vmatprep.subr.mxu0 0.0
        %3941 = vmatpush1.msra.mxu0 0.0
        %3942 = vmatprep.subr.mxu0 0.0
        %3943 = vmatpush1.msra.mxu0 0.0
        %3944 = vmatprep.subr.mxu0 0.0
        %3945 = vmatpush1.msra.mxu0 0.0
        %3946 = vmatprep.subr.mxu0 0.0
        %3947 = vmatpush1.msra.mxu0 0.0
        %3948 = vmatprep.subr.mxu0 0.0
        %3949 = vmatpush1.msra.mxu0 0.0
        %3950 = vmatprep.subr.mxu0 0.0
        %3951 = vmatpush1.msra.mxu0 0.0
        %3952 = vmatprep.subr.mxu0 0.0
        %3953 = vmatpush1.msra.mxu0 0.0
        %3954 = vmatprep.subr.mxu0 0.0
        %3955 = vmatpush1.msra.mxu0 0.0
        %3956 = vmatprep.subr.mxu0 0.0
        %3957 = vmatpush1.msra.mxu0 0.0
        %3958 = vmatprep.subr.mxu0 0.0
        %3959 = vmatpush1.msra.mxu0 0.0
        %3960 = vmatprep.subr.mxu0 0.0
        %3961 = vmatpush1.msra.mxu0 0.0
        %3962 = vmatprep.subr.mxu0 0.0
        %3963 = vmatpush1.msra.mxu0 0.0
        %3964 = vmatprep.subr.mxu0 0.0
        %3965 = vmatpush1.msra.mxu0 0.0
        %3966 = vmatprep.subr.mxu0 0.0
        %3967 = vmatpush1.msra.mxu0 0.0
        %3968 = vmatprep.subr.mxu0 0.0
        %3969 = vmatpush1.msra.mxu0 0.0
        %3970 = vmatprep.subr.mxu0 0.0
        %3971 = vmatpush1.msra.mxu0 0.0
        %3972 = vmatprep.subr.mxu0 0.0
        %3973 = vmatpush1.msra.mxu0 0.0
        %3974 = vmatprep.mubr.f32.mxu0 0.0
        %3975 = vmatmul.mubr.f32.gmra.mrb[0].mxu0 %v3899
        %v3976 = vpop.f32.mrb[0].mxu0
        %v3977 = vadd.f32 0.0, %v3976
        %v3978 = vpop.f32.mrb[0].mxu0
        %3979 = vmatprep.mubr.f32.mxu0 0.0
        %3980 = vmatmul.mubr.f32.gmra.mrb[0].mxu0 %v3902
        %v3981 = vpop.f32.mrb[0].mxu0
        %v3982 = vadd.f32 0.0, %v3981
        %v3983 = vpop.f32.mrb[0].mxu0
        %3984 = vmatprep.mubr.f32.mxu0 0.0
        %3985 = vmatmul.mubr.f32.gmra.mrb[0].mxu0 %v3905
        %v3986 = vpop.f32.mrb[0].mxu0
        %v3987 = vadd.f32 0.0, %v3986
        %v3988 = vpop.f32.mrb[0].mxu0
        %3989 = vmatprep.mubr.f32.mxu0 0.0
        %3990 = vmatmul.mubr.f32.gmra.mrb[0].mxu0 %v3908
        %v3991 = vpop.f32.mrb[0].mxu0
        %v3992 = vadd.f32 0.0, %v3991
        %v3993 = vpop.f32.mrb[0].mxu0
        %3994 = vdwg.mxu0
        %v3996 = vsel %vm3897, %v3581, 0
        %v3999 = vsel %vm3897, %v3582, 0
        %v4002 = vsel %vm3897, %v3583, 0
        %v4005 = vsel %vm3897, %v3584, 0
        %4007 = vmatprep.subr.mxu0 0.0
        %4008 = vmatpush1.msra.mxu0 %v3881
        %4009 = vmatprep.subr.mxu0 0.0
        %4010 = vmatpush1.msra.mxu0 %v3882
        %4011 = vmatprep.subr.mxu0 0.0
        %4012 = vmatpush1.msra.mxu0 %v3883
        %4013 = vmatprep.subr.mxu0 0.0
        %4014 = vmatpush1.msra.mxu0 %v3884
        %4015 = vmatprep.subr.mxu0 0.0
        %4016 = vmatpush1.msra.mxu0 %v3885
        %4017 = vmatprep.subr.mxu0 0.0
        %4018 = vmatpush1.msra.mxu0 %v3886
        %4019 = vmatprep.subr.mxu0 0.0
        %4020 = vmatpush1.msra.mxu0 %v3887
        %4021 = vmatprep.subr.mxu0 0.0
        %4022 = vmatpush1.msra.mxu0 %v3888
        %4023 = vmatprep.subr.mxu0 0.0
        %4024 = vmatpush1.msra.mxu0 0.0
        %4025 = vmatprep.subr.mxu0 0.0
        %4026 = vmatpush1.msra.mxu0 0.0
        %4027 = vmatprep.subr.mxu0 0.0
        %4028 = vmatpush1.msra.mxu0 0.0
        %4029 = vmatprep.subr.mxu0 0.0
        %4030 = vmatpush1.msra.mxu0 0.0
        %4031 = vmatprep.subr.mxu0 0.0
        %4032 = vmatpush1.msra.mxu0 0.0
        %4033 = vmatprep.subr.mxu0 0.0
        %4034 = vmatpush1.msra.mxu0 0.0
        %4035 = vmatprep.subr.mxu0 0.0
        %4036 = vmatpush1.msra.mxu0 0.0
        %4037 = vmatprep.subr.mxu0 0.0
        %4038 = vmatpush1.msra.mxu0 0.0
        %4039 = vmatprep.subr.mxu0 0.0
        %4040 = vmatpush1.msra.mxu0 0.0
        %4041 = vmatprep.subr.mxu0 0.0
        %4042 = vmatpush1.msra.mxu0 0.0
        %4043 = vmatprep.subr.mxu0 0.0
        %4044 = vmatpush1.msra.mxu0 0.0
        %4045 = vmatprep.subr.mxu0 0.0
        %4046 = vmatpush1.msra.mxu0 0.0
        %4047 = vmatprep.subr.mxu0 0.0
        %4048 = vmatpush1.msra.mxu0 0.0
        %4049 = vmatprep.subr.mxu0 0.0
        %4050 = vmatpush1.msra.mxu0 0.0
        %4051 = vmatprep.subr.mxu0 0.0
        %4052 = vmatpush1.msra.mxu0 0.0
        %4053 = vmatprep.subr.mxu0 0.0
        %4054 = vmatpush1.msra.mxu0 0.0
        %4055 = vmatprep.subr.mxu0 0.0
        %4056 = vmatpush1.msra.mxu0 0.0
        %4057 = vmatprep.subr.mxu0 0.0
        %4058 = vmatpush1.msra.mxu0 0.0
        %4059 = vmatprep.subr.mxu0 0.0
        %4060 = vmatpush1.msra.mxu0 0.0
        %4061 = vmatprep.subr.mxu0 0.0
        %4062 = vmatpush1.msra.mxu0 0.0
        %4063 = vmatprep.subr.mxu0 0.0
        %4064 = vmatpush1.msra.mxu0 0.0
        %4065 = vmatprep.subr.mxu0 0.0
        %4066 = vmatpush1.msra.mxu0 0.0
        %4067 = vmatprep.subr.mxu0 0.0
        %4068 = vmatpush1.msra.mxu0 0.0
        %4069 = vmatprep.subr.mxu0 0.0
        %4070 = vmatpush1.msra.mxu0 0.0
        %4071 = vmatprep.mubr.f32.mxu0 0.0
        %4072 = vmatmul.mubr.f32.gmra.mrb[0].mxu0 %v3996
        %v4073 = vpop.f32.mrb[0].mxu0
        %v4074 = vadd.f32 %v3977, %v4073
        %v4075 = vpop.f32.mrb[0].mxu0
        %4076 = vmatprep.mubr.f32.mxu0 0.0
        %4077 = vmatmul.mubr.f32.gmra.mrb[0].mxu0 %v3999
        %v4078 = vpop.f32.mrb[0].mxu0
        %v4079 = vadd.f32 %v3982, %v4078
        %v4080 = vpop.f32.mrb[0].mxu0
        %4081 = vmatprep.mubr.f32.mxu0 0.0
        %4082 = vmatmul.mubr.f32.gmra.mrb[0].mxu0 %v4002
        %v4083 = vpop.f32.mrb[0].mxu0
        %v4084 = vadd.f32 %v3987, %v4083
        %v4085 = vpop.f32.mrb[0].mxu0
        %4086 = vmatprep.mubr.f32.mxu0 0.0
        %4087 = vmatmul.mubr.f32.gmra.mrb[0].mxu0 %v4005
        %v4088 = vpop.f32.mrb[0].mxu0
        %v4089 = vadd.f32 %v3992, %v4088
        %v4090 = vpop.f32.mrb[0].mxu0
        %4091 = vdwg.mxu0
        %v4092 = vld [vmem:[%s7] sm:$0x1]
        %v4094 = vlaneseq
        %v4095 = vshrl.u32 %v4094, 7
        %v4096 = vsub.s32 0, %v4095
        %v4097 = vrot.slane %v4092, %v4096
        %v4099 = vadd.f32 %v4074, %v4097
        %v4100 = vadd.f32 %v4079, %v4097
        %v4101 = vadd.f32 %v4084, %v4097
        %v4102 = vadd.f32 %v4089, %v4097
        %v4103 = vld [vmem:[%s326] sm:$0xff]
        %v4104 = vld [vmem:[%s326 + $0x8] sm:$0xff]
        %v4105 = vld [vmem:[%s326 + $0x10] sm:$0xff]
        %v4106 = vld [vmem:[%s326 + $0x18] sm:$0xff]
        %v4107 = vld [vmem:[%s4] sm:$0xff]
        %v4108 = vld [vmem:[%s4 + $0x8] sm:$0xff]
        %v4109 = vld [vmem:[%s4 + $0x10] sm:$0xff]
        %v4110 = vld [vmem:[%s4 + $0x18] sm:$0xff]
        %v4111 = vld [vmem:[%s4 + $0x20] sm:$0xff]
        %v4112 = vld [vmem:[%s4 + $0x28] sm:$0xff]
        %v4113 = vld [vmem:[%s4 + $0x30] sm:$0xff]
        %v4114 = vld [vmem:[%s4 + $0x38] sm:$0xff]
        %4119 = vrot.lane.b32.xlu0 %v4099, 16
        %v4120 = vpop.permute.xlu0 %4119
        %4121 = vrot.lane.b32.xlu0 %v4100, 16
        %v4122 = vpop.permute.xlu0 %4121
        %4123 = vrot.lane.b32.xlu0 %v4101, 16
        %v4124 = vpop.permute.xlu0 %4123
        %4125 = vrot.lane.b32.xlu0 %v4102, 16
        %v4126 = vpop.permute.xlu0 %4125
        %4131 = vrot.lane.b32.xlu0 %v4099, 32
        %v4132 = vpop.permute.xlu0 %4131
        %4133 = vrot.lane.b32.xlu0 %v4100, 32
        %v4134 = vpop.permute.xlu0 %4133
        %4135 = vrot.lane.b32.xlu0 %v4101, 32
        %v4136 = vpop.permute.xlu0 %4135
        %4137 = vrot.lane.b32.xlu0 %v4102, 32
        %v4138 = vpop.permute.xlu0 %4137
        %4143 = vrot.lane.b32.xlu0 %v4099, 48
        %v4144 = vpop.permute.xlu0 %4143
        %4145 = vrot.lane.b32.xlu0 %v4100, 48
        %v4146 = vpop.permute.xlu0 %4145
        %4147 = vrot.lane.b32.xlu0 %v4101, 48
        %v4148 = vpop.permute.xlu0 %4147
        %4149 = vrot.lane.b32.xlu0 %v4102, 48
        %v4150 = vpop.permute.xlu0 %4149
        %4155 = vrot.lane.b32.xlu0 %v4099, 64
        %v4156 = vpop.permute.xlu0 %4155
        %4157 = vrot.lane.b32.xlu0 %v4100, 64
        %v4158 = vpop.permute.xlu0 %4157
        %4159 = vrot.lane.b32.xlu0 %v4101, 64
        %v4160 = vpop.permute.xlu0 %4159
        %4161 = vrot.lane.b32.xlu0 %v4102, 64
        %v4162 = vpop.permute.xlu0 %4161
        %4167 = vrot.lane.b32.xlu0 %v4099, 80
        %v4168 = vpop.permute.xlu0 %4167
        %4169 = vrot.lane.b32.xlu0 %v4100, 80
        %v4170 = vpop.permute.xlu0 %4169
        %4171 = vrot.lane.b32.xlu0 %v4101, 80
        %v4172 = vpop.permute.xlu0 %4171
        %4173 = vrot.lane.b32.xlu0 %v4102, 80
        %v4174 = vpop.permute.xlu0 %4173
        %4179 = vrot.lane.b32.xlu0 %v4099, 96
        %v4180 = vpop.permute.xlu0 %4179
        %4181 = vrot.lane.b32.xlu0 %v4100, 96
        %v4182 = vpop.permute.xlu0 %4181
        %4183 = vrot.lane.b32.xlu0 %v4101, 96
        %v4184 = vpop.permute.xlu0 %4183
        %4185 = vrot.lane.b32.xlu0 %v4102, 96
        %v4186 = vpop.permute.xlu0 %4185
        %4191 = vrot.lane.b32.xlu0 %v4099, 112
        %v4192 = vpop.permute.xlu0 %4191
        %4193 = vrot.lane.b32.xlu0 %v4100, 112
        %v4194 = vpop.permute.xlu0 %4193
        %4195 = vrot.lane.b32.xlu0 %v4101, 112
        %v4196 = vpop.permute.xlu0 %4195
        %4197 = vrot.lane.b32.xlu0 %v4102, 112
        %v4198 = vpop.permute.xlu0 %4197
        %v4203 = vsel %vm1011, %v4099, %v4120
        %v4204 = vsel %vm1011, %v4100, %v4122
        %v4205 = vsel %vm1011, %v4101, %v4124
        %v4206 = vsel %vm1011, %v4102, %v4126
        %v4207 = vsel %vm3575, %v4203, %v4132
        %v4208 = vsel %vm3575, %v4204, %v4134
        %v4209 = vsel %vm3575, %v4205, %v4136
        %v4210 = vsel %vm3575, %v4206, %v4138
        %v4211 = vsel %vm3580, %v4207, %v4144
        %v4212 = vsel %vm3580, %v4208, %v4146
        %v4213 = vsel %vm3580, %v4209, %v4148
        %v4214 = vsel %vm3580, %v4210, %v4150
        %v4215 = vsel %vm3897, %v4211, %v4156
        %v4216 = vsel %vm3897, %v4212, %v4158
        %v4217 = vsel %vm3897, %v4213, %v4160
        %v4218 = vsel %vm3897, %v4214, %v4162
        %vm4219 = vcmask 654336
        %v4220 = vsel %vm4219, %v4215, %v4168
        %v4221 = vsel %vm4219, %v4216, %v4170
        %v4222 = vsel %vm4219, %v4217, %v4172
        %v4223 = vsel %vm4219, %v4218, %v4174
        %vm4224 = vcmask 785408
        %v4225 = vsel %vm4224, %v4220, %v4180
        %v4226 = vsel %vm4224, %v4221, %v4182
        %v4227 = vsel %vm4224, %v4222, %v4184
        %v4228 = vsel %vm4224, %v4223, %v4186
        %vm4229 = vcmask 916480
        %v4230 = vsel %vm4229, %v4225, %v4192
        %v4231 = vsel %vm4229, %v4226, %v4194
        %v4232 = vsel %vm4229, %v4227, %v4196
        %v4233 = vsel %vm4229, %v4228, %v4198
        %v4235 = vsel %vm3897, %v4103, 0
        %v4238 = vsel %vm3897, %v4104, 0
        %v4241 = vsel %vm3897, %v4105, 0
        %v4244 = vsel %vm3897, %v4106, 0
        %4246 = vmatprep.subr.mxu0 0.0
        %4247 = vmatpush1.msra.mxu0 %v4107
        %4248 = vmatprep.subr.mxu0 0.0
        %4249 = vmatpush1.msra.mxu0 %v4108
        %4250 = vmatprep.subr.mxu0 0.0
        %4251 = vmatpush1.msra.mxu0 %v4109
        %4252 = vmatprep.subr.mxu0 0.0
        %4253 = vmatpush1.msra.mxu0 %v4110
        %4254 = vmatprep.subr.mxu0 0.0
        %4255 = vmatpush1.msra.mxu0 %v4111
        %4256 = vmatprep.subr.mxu0 0.0
        %4257 = vmatpush1.msra.mxu0 %v4112
        %4258 = vmatprep.subr.mxu0 0.0
        %4259 = vmatpush1.msra.mxu0 %v4113
        %4260 = vmatprep.subr.mxu0 0.0
        %4261 = vmatpush1.msra.mxu0 %v4114
        %4262 = vmatprep.subr.mxu0 0.0
        %4263 = vmatpush1.msra.mxu0 0.0
        %4264 = vmatprep.subr.mxu0 0.0
        %4265 = vmatpush1.msra.mxu0 0.0
        %4266 = vmatprep.subr.mxu0 0.0
        %4267 = vmatpush1.msra.mxu0 0.0
        %4268 = vmatprep.subr.mxu0 0.0
        %4269 = vmatpush1.msra.mxu0 0.0
        %4270 = vmatprep.subr.mxu0 0.0
        %4271 = vmatpush1.msra.mxu0 0.0
        %4272 = vmatprep.subr.mxu0 0.0
        %4273 = vmatpush1.msra.mxu0 0.0
        %4274 = vmatprep.subr.mxu0 0.0
        %4275 = vmatpush1.msra.mxu0 0.0
        %4276 = vmatprep.subr.mxu0 0.0
        %4277 = vmatpush1.msra.mxu0 0.0
        %4278 = vmatprep.subr.mxu0 0.0
        %4279 = vmatpush1.msra.mxu0 0.0
        %4280 = vmatprep.subr.mxu0 0.0
        %4281 = vmatpush1.msra.mxu0 0.0
        %4282 = vmatprep.subr.mxu0 0.0
        %4283 = vmatpush1.msra.mxu0 0.0
        %4284 = vmatprep.subr.mxu0 0.0
        %4285 = vmatpush1.msra.mxu0 0.0
        %4286 = vmatprep.subr.mxu0 0.0
        %4287 = vmatpush1.msra.mxu0 0.0
        %4288 = vmatprep.subr.mxu0 0.0
        %4289 = vmatpush1.msra.mxu0 0.0
        %4290 = vmatprep.subr.mxu0 0.0
        %4291 = vmatpush1.msra.mxu0 0.0
        %4292 = vmatprep.subr.mxu0 0.0
        %4293 = vmatpush1.msra.mxu0 0.0
        %4294 = vmatprep.subr.mxu0 0.0
        %4295 = vmatpush1.msra.mxu0 0.0
        %4296 = vmatprep.subr.mxu0 0.0
        %4297 = vmatpush1.msra.mxu0 0.0
        %4298 = vmatprep.subr.mxu0 0.0
        %4299 = vmatpush1.msra.mxu0 0.0
        %4300 = vmatprep.subr.mxu0 0.0
        %4301 = vmatpush1.msra.mxu0 0.0
        %4302 = vmatprep.subr.mxu0 0.0
        %4303 = vmatpush1.msra.mxu0 0.0
        %4304 = vmatprep.subr.mxu0 0.0
        %4305 = vmatpush1.msra.mxu0 0.0
        %4306 = vmatprep.subr.mxu0 0.0
        %4307 = vmatpush1.msra.mxu0 0.0
        %4308 = vmatprep.subr.mxu0 0.0
        %4309 = vmatpush1.msra.mxu0 0.0
        %4310 = vmatprep.mubr.f32.mxu0 0.0
        %4311 = vmatmul.mubr.f32.gmra.mrb[0].mxu0 %v4235
        %v4312 = vpop.f32.mrb[0].mxu0
        %v4313 = vadd.f32 %v4230, %v4312
        %v4314 = vpop.f32.mrb[0].mxu0
        %4315 = vmatprep.mubr.f32.mxu0 0.0
        %4316 = vmatmul.mubr.f32.gmra.mrb[0].mxu0 %v4238
        %v4317 = vpop.f32.mrb[0].mxu0
        %v4318 = vadd.f32 %v4231, %v4317
        %v4319 = vpop.f32.mrb[0].mxu0
        %4320 = vmatprep.mubr.f32.mxu0 0.0
        %4321 = vmatmul.mubr.f32.gmra.mrb[0].mxu0 %v4241
        %v4322 = vpop.f32.mrb[0].mxu0
        %v4323 = vadd.f32 %v4232, %v4322
        %v4324 = vpop.f32.mrb[0].mxu0
        %4325 = vmatprep.mubr.f32.mxu0 0.0
        %4326 = vmatmul.mubr.f32.gmra.mrb[0].mxu0 %v4244
        %v4327 = vpop.f32.mrb[0].mxu0
        %v4328 = vadd.f32 %v4233, %v4327
        %v4329 = vpop.f32.mrb[0].mxu0
        %4330 = vdwg.mxu0
        %v4331 = vtanh.pop %v4313
        %v4332 = vtanh.pop %v4318
        %v4333 = vtanh.pop %v4323
        %v4334 = vtanh.pop %v4328
        %4335 = vst [vmem:[%s315] sm:$0xff] %v4331
        %4336 = vst [vmem:[%s315 + $0x8] sm:$0xff] %v4332
        %4337 = vst [vmem:[%s315 + $0x10] sm:$0xff] %v4333
        %4338 = vst [vmem:[%s315 + $0x18] sm:$0xff] %v4334
        %s4339 = sand.u32 %s208, 1
        %s4340 = scalar_lea.sflag [#allocation3], %s4339
        %s4341 = sand.u32 %s208, 1
        %s4342 = smul.addr %s4341, 32
        %s4343 = scalar_lea.vmem [#allocation2], %s4342
        // Predicated region
        $region53: #{tpu_custom_call.1} parent=51 // pred_check
          %p4344 = pneg %p218
        $region54: #{tpu_custom_call.1} parent=51 // pred_check_branch
          %4346 = sbr.rel (%p4344) target = $region56
        $region55: #{tpu_custom_call.1} parent=51 // pred_region
          %s4347 = smul.u32 4, %s22
          %s4349 = ssub.s32 512, 512
          %4350 = vsyncadd %s4340, %s4349
          %s4351 = smul.addr %s4347, 128
          %s4352 = scalar_lea.hbm %s8, %s4351
          %s4353 = sshll.u32 %s4343, 4
          %s4354 = int_to_ptr.vmem [resolvable:$true] %s4353
          %4359 = dma.vmem_to_hbm [thread:$0]  %s4354, 512, %s4352, %s4340, 128, 128, 8
        $region56: #{tpu_custom_call.1} parent=51 // pred_fallthru
          _
      $region52: #{tpu_custom_call.1} parent=5 // pred_fallthru
        _
      %p4360 = scmp.le.s32.totalorder 2, %s17
      // Predicated region
      $region57: #{tpu_custom_call.1} parent=5 // pred_check
        %p4361 = pneg %p4360
      $region58: #{tpu_custom_call.1} parent=5 // pred_check_branch
        %4363 = sbr.rel (%p4361) target = $region60
      $region59: #{tpu_custom_call.1} parent=5 // pred_region
        %s4364 = ssub.s32 %s17, 2
        // Predicated region
        $region61: #{tpu_custom_call.1} parent=59 // pred_check
          %p4365 = pneg %p224
        $region62: #{tpu_custom_call.1} parent=59 // pred_check_branch
          %4367 = sbr.rel (%p4365) target = $region64
        $region63: #{tpu_custom_call.1} parent=59 // pred_region
          %s4368 = sand.u32 %s209, 1
          %s4369 = scalar_lea.sflag [#allocation3], %s4368
          %s4370 = sand.u32 %s209, 1
          %s4371 = smul.addr %s4370, 32
          %s4372 = scalar_lea.vmem [#allocation2], %s4371
          %4373 = dma.done %s4369, 512
        $region64: #{tpu_custom_call.1} parent=59 // pred_fallthru
          _
      $region60: #{tpu_custom_call.1} parent=5 // pred_fallthru
        _
    $region6: #{tpu_custom_call.1} parent=1 // loop_footer
      %s21 = sadd.s32 1, %s17
    $region7: #{tpu_custom_call.1} parent=1 // loop_footer_branch
      %16 = sbr.rel target = $region3
    $region8: #{tpu_custom_call.1} parent=1 // loop_exit
      _
    %4374 = vsyncpa [#allocation3], 1
    %s4375 = scalar_lea.sflag [#allocation3], 1
    %4376 = vsyncpa %s4375, 1

</llo_original>
